<compile_context>
chip_gen: v7x
topology: tpu7x:2x2x1
jax: 0.10.0
libtpu: 0.0.40
codegen_flags: <defaults>
</compile_context>

<pallas_src>
import functools

import numpy as np
import jax
import jax.numpy as jnp
from jax import lax
from jax.experimental import pallas as pl
from jax.experimental.pallas import tpu as pltpu

_PAD = 8   # zeroed guard rows above/below the activation region in the VMEM scratch


# ----------------------------- Fused encoder kernel ---------------------------

def _cnn_encoder_kernel(x_ref, wp1_ref, wp2_ref, wr1_ref, wr2_ref,
                        wl1_ref, bl1_ref, wl2_ref, bl2_ref, o_ref, pad_ref,
                        *, L0, num_rec, Lf):
    """One batch tile.  Activations are (TB*L, D): rows=(sample, position), cols=channel."""
    TB = o_ref.shape[0]
    D = x_ref.shape[1]
    f32 = jnp.float32
    PAD = _PAD

    # Guard rows (and the whole staging buffer) start from a known value so that the
    # masked-out boundary reads can never pull in NaNs from uninitialized VMEM.
    pad_ref[...] = jnp.zeros_like(pad_ref)

    # Per-resolution boundary masks (R,1): zero the "prev" at position 0 and the
    # "next" at position L-1 of every sample (== Conv1d zero padding and no
    # cross-sample leakage).  Built once per level, reused by every conv there.
    def masks(L, R):
        pos = lax.broadcasted_iota(jnp.int32, (R, 1), 0) % L
        m_first = (pos != 0).astype(f32)
        m_last = (pos != (L - 1)).astype(f32)
        return m_first, m_last

    # Conv1d(k=3, stride=1, pad=1, bias=False) over the whole batch tile:
    # stage h in the padded scratch, take the +-1 row-shifted views via offset loads,
    # mask the sample boundaries, and apply the three kernel taps as three small
    # (R,D)x(D,D) MXU matmuls (w_ref rows are k-major, then c_in; cols = c_out).
    def conv3(h, R, w_ref, m_first, m_last):
        pad_ref[pl.ds(PAD, R), :] = h
        prev = pad_ref[pl.ds(PAD - 1, R), :] * m_first
        nxt = pad_ref[pl.ds(PAD + 1, R), :] * m_last
        return (jnp.dot(prev, w_ref[0:D, :], preferred_element_type=f32)
                + jnp.dot(h, w_ref[D:2 * D, :], preferred_element_type=f32)
                + jnp.dot(nxt, w_ref[2 * D:3 * D, :], preferred_element_type=f32))

    # Residual(conv_proto): conv -> (Noop norm) -> relu -> conv -> (Noop) -> +x -> relu
    def res_conv_block(h, R, w1_ref, w2_ref, m_first, m_last):
        z = jnp.maximum(conv3(h, R, w1_ref, m_first, m_last), 0.0)
        z = conv3(z, R, w2_ref, m_first, m_last) + h
        return jnp.maximum(z, 0.0)                           # out_relu=True

    h = x_ref[...]                                           # (TB*L0, D)
    L, R = L0, TB * L0
    m_first, m_last = masks(L, R)
    h = res_conv_block(h, R, wp1_ref, wp2_ref, m_first, m_last)   # self.prefix (n//2=1)
    for step in range(num_rec):                                   # self.recurrent
        h = res_conv_block(h, R, wr1_ref, wr2_ref, m_first, m_last)
        # nn.MaxPool1d(2) on positions: max of (even, odd) row pairs via strided reads.
        pad_ref[pl.ds(PAD, R), :] = h
        h = jnp.maximum(pad_ref[pl.ds(PAD, R // 2, stride=2), :],
                        pad_ref[pl.ds(PAD + 1, R // 2, stride=2), :])
        L //= 2
        R //= 2
        if step + 1 < num_rec:
            m_first, m_last = masks(L, R)

    # Flatten to (TB, Lf*D) in POSITION-major order: flat[b, l*D + c] = h[b*Lf+l, c].
    # (The wrapper permutes the linear weights/bias and the output columns so the
    #  overall result equals torch's channel-major .view(bsz, -1) postfix.)
    pad_ref[pl.ds(PAD, TB * Lf), :] = h
    flat = jnp.concatenate(
        [pad_ref[pl.ds(PAD + l, TB, stride=Lf), :] for l in range(Lf)], axis=1)

    # Fused postfix: Residual(linear_proto, out_relu=False): lin -> relu -> lin -> +x
    z = jnp.maximum(
        jnp.dot(flat, wl1_ref[...], preferred_element_type=f32) + bl1_ref[...], 0.0)
    o_ref[...] = (jnp.dot(z, wl2_ref[...], preferred_element_type=f32)
                  + bl2_ref[...] + flat)


# --------------------------------- Wrapper ------------------------------------

def cnn_encoder_forward(x_bld, params, *, r, mod_r=2, batch_tile=None):
    """x_bld: (B, seq_len, emsize) float32 (embed=False).  Returns (B, dim * 2**mod_r)."""
    B, L0, D = x_bld.shape
    num_rec = max(0, r - mod_r)
    Lf = 2 ** mod_r
    assert L0 % (2 ** num_rec) == 0 and L0 // (2 ** num_rec) == Lf, \
        "seq_len / 2**num_rec must equal 2**mod_r"
    latent = D * Lf

    # Batch tile = matmul M dimension.  Prefer >=2 grid tiles so a v7x megacore can
    # split the grid; on single-TC v5e/v6e an extra tile only costs ~0.35us.  Keep
    # TB*L0 rows modest so all blocks stay KiB-scale (well under 64/128 MiB VMEM).
    if batch_tile is None:
        cap = max(1, 1024 // L0)
        batch_tile = min(B, cap, 128)
        if B >= 2 and batch_tile == B:
            batch_tile = max(1, B // 2)
        while B % batch_tile != 0:
            batch_tile -= 1
    TB = batch_tile
    assert B % TB == 0, "batch must be divisible by the batch tile"

    # One-time weight packing (outside the kernel; constant-folded by XLA).
    def conv_taps(w_oik):       # torch Conv1d weight (O, I, K=3) -> (3D, D), k-major rows
        return jnp.transpose(w_oik, (2, 1, 0)).reshape(3 * D, D)

    wp1 = conv_taps(params["wp1"])
    wp2 = conv_taps(params["wp2"])
    wr1 = conv_taps(params["wr1"])
    wr2 = conv_taps(params["wr2"])

    # Latent permutation: kernel flatten is position-major (m' = l*D + c), torch's
    # .view(bsz,-1) is channel-major (m = c*Lf + l).  perm[m'] = m.
    perm = np.arange(latent).reshape(D, Lf).T.reshape(-1)
    inv_perm = np.argsort(perm)
    wl1_p = params["wl1"].T[perm, :]            # torch Linear: y = x @ W.T + b
    wl2_p = params["wl2"].T[:, perm]
    bl1_p = params["bl1"].reshape(1, latent)
    bl2_p = params["bl2"][perm].reshape(1, latent)

    # rows = b*L0 + position, cols = channel (matches PyTorch's NCL conv math inside
    # the kernel).
    x2d = x_bld.reshape(B * L0, D)

    kernel = functools.partial(_cnn_encoder_kernel, L0=L0, num_rec=num_rec, Lf=Lf)
    wspec = lambda shape: pl.BlockSpec(shape, lambda i: (0, 0))

    out_rowmajor = pl.pallas_call(
        kernel,
        out_shape=jax.ShapeDtypeStruct((B, latent), jnp.float32),
        grid=(B // TB,),
        in_specs=[
            pl.BlockSpec((TB * L0, D), lambda i: (i, 0)),
            wspec((3 * D, D)), wspec((3 * D, D)),
            wspec((3 * D, D)), wspec((3 * D, D)),
            wspec((latent, latent)), wspec((1, latent)),
            wspec((latent, latent)), wspec((1, latent)),
        ],
        out_specs=pl.BlockSpec((TB, latent), lambda i: (i, 0)),
        scratch_shapes=[pltpu.VMEM((TB * L0 + 2 * _PAD, D), jnp.float32)],
        compiler_params=pltpu.CompilerParams(
            dimension_semantics=("parallel",),
            vmem_limit_bytes=32 * 1024 * 1024,
        ),
    )(x2d, wp1, wp2, wr1, wr2, wl1_p, bl1_p, wl2_p, bl2_p)

    # Undo the latent permutation (tiny host/XLA gather on (B, latent)).
    return out_rowmajor[:, inv_perm]


# ------------------------- Deterministic parameter init -----------------------

def init_params(key, dim, latent):
    ks = jax.random.split(key, 8)

    def conv_w(k):              # torch Conv1d weight layout (out, in, kernel)
        fan_in = dim * 3
        return jax.random.normal(k, (dim, dim, 3), jnp.float32) / np.sqrt(fan_in)

    def lin_w(k):               # torch Linear weight layout (out, in)
        return jax.random.normal(k, (latent, latent), jnp.float32) / np.sqrt(latent)

    return dict(
        wp1=conv_w(ks[0]), wp2=conv_w(ks[1]),
        wr1=conv_w(ks[2]), wr2=conv_w(ks[3]),
        wl1=lin_w(ks[4]), bl1=jax.random.normal(ks[6], (latent,), jnp.float32) * 0.01,
        wl2=lin_w(ks[5]), bl2=jax.random.normal(ks[7], (latent,), jnp.float32) * 0.01,
    )


# ------------------------------ Pure-JAX reference ----------------------------

def reference_forward(x_bld, params, *, r, mod_r=2):
    num_rec = max(0, r - mod_r)
    x = jnp.transpose(x_bld, (0, 2, 1))            # (B, D, L), torch NCL

    def conv(h, w_oik):
        return lax.conv_general_dilated(
            h, w_oik, window_strides=(1,), padding=((1, 1),),
            dimension_numbers=("NCH", "OIH", "NCH"),
            precision=lax.Precision.HIGHEST)

    def res_block(h, w1, w2):
        z = jnp.maximum(conv(h, w1), 0.0)
        z = conv(z, w2) + h
        return jnp.maximum(z, 0.0)

    h = res_block(x, params["wp1"], params["wp2"])
    for _ in range(num_rec):
        h = res_block(h, params["wr1"], params["wr2"])
        Bc, Cc, Lc = h.shape
        h = jnp.max(h.reshape(Bc, Cc, Lc // 2, 2), axis=-1)

    flat = h[:, :, :2 ** mod_r].reshape(h.shape[0], -1)
    z = jnp.maximum(
        jnp.dot(flat, params["wl1"].T, precision=lax.Precision.HIGHEST)
        + params["bl1"], 0.0)
    z = jnp.dot(z, params["wl2"].T, precision=lax.Precision.HIGHEST) + params["bl2"]
    return z + flat


# ------------------------------------ Main -------------------------------------

if __name__ == "__main__":
    # TODO(synk): self.embed() raises NotImplementedError in the source and sent_len-based
    # per-sample depths need data-dependent loop counts, so only the embed=False,
    # uniform-r path is implemented.
    B, L0, D = 16, 16, 16
    mod_r = 2
    r = int(np.log2(L0))            # 4 -> two recurrent steps, final length 2**mod_r = 4
    latent = D * (2 ** mod_r)       # 64

    key = jax.random.PRNGKey(0)
    kx, kp = jax.random.split(key)
    x = jax.random.normal(kx, (B, L0, D), jnp.float32)   # (batch, seq_len, emsize)
    params = init_params(kp, D, latent)

    # batch_tile=8 -> 2 parallel grid tiles (both v7x TCs busy) and M=128 rows per
    # conv matmul; on v5e/v6e the second tile is a cheap extra grid step.
    out = cnn_encoder_forward(x, params, r=r, mod_r=mod_r, batch_tile=8)
    out = jax.block_until_ready(out)

    ref = reference_forward(x, params, r=r, mod_r=mod_r)
    np.testing.assert_allclose(np.asarray(out), np.asarray(ref), rtol=1e-3, atol=1e-3)
    assert out.shape == (B, latent)

    print("KERNEL_OK")
</pallas_src>

<mosaic_0001>
module attributes {stable_mosaic.version = 11 : i64} {
  func.func @_cnn_encoder_kernel(%arg0: i32, %arg1: memref<128x16xf32, #tpu.memory_space<vmem>>, %arg2: memref<48x16xf32, #tpu.memory_space<vmem>>, %arg3: memref<48x16xf32, #tpu.memory_space<vmem>>, %arg4: memref<48x16xf32, #tpu.memory_space<vmem>>, %arg5: memref<48x16xf32, #tpu.memory_space<vmem>>, %arg6: memref<64x64xf32, #tpu.memory_space<vmem>>, %arg7: memref<1x64xf32, #tpu.memory_space<vmem>>, %arg8: memref<64x64xf32, #tpu.memory_space<vmem>>, %arg9: memref<1x64xf32, #tpu.memory_space<vmem>>, %arg10: memref<8x64xf32, #tpu.memory_space<vmem>>, %arg11: memref<144x16xf32, #tpu.memory_space<vmem>>) attributes {dimension_semantics = [#tpu.dimension_semantics<parallel>], iteration_bounds = array<i64: 2>, scalar_prefetch = 0 : i64, scratch_operands = 1 : i64, tpu.core_type = #tpu.core_type<tc>, window_params = [{transform_indices = @transform_0, window_bounds = array<i64: 128, 16>}, {pipeline_mode = #tpu.pipeline_mode<synchronous>, transform_indices = @transform_1, window_bounds = array<i64: 48, 16>}, {pipeline_mode = #tpu.pipeline_mode<synchronous>, transform_indices = @transform_2, window_bounds = array<i64: 48, 16>}, {pipeline_mode = #tpu.pipeline_mode<synchronous>, transform_indices = @transform_3, window_bounds = array<i64: 48, 16>}, {pipeline_mode = #tpu.pipeline_mode<synchronous>, transform_indices = @transform_4, window_bounds = array<i64: 48, 16>}, {pipeline_mode = #tpu.pipeline_mode<synchronous>, transform_indices = @transform_5, window_bounds = array<i64: 64, 64>}, {pipeline_mode = #tpu.pipeline_mode<synchronous>, transform_indices = @transform_6, window_bounds = array<i64: 1, 64>}, {pipeline_mode = #tpu.pipeline_mode<synchronous>, transform_indices = @transform_7, window_bounds = array<i64: 64, 64>}, {pipeline_mode = #tpu.pipeline_mode<synchronous>, transform_indices = @transform_8, window_bounds = array<i64: 1, 64>}, {transform_indices = @transform_9, window_bounds = array<i64: 8, 64>}]} {
    %cst = arith.constant 0.000000e+00 : f32
    %0 = vector.broadcast %cst : f32 to vector<144x16xf32>
    %c0 = arith.constant 0 : index
    %c0_0 = arith.constant 0 : index
    %1 = vector.load %arg11[%c0, %c0_0] : memref<144x16xf32, #tpu.memory_space<vmem>>, vector<144x16xf32>
    tpu.vector_store %arg11[%c0, %c0_0], %0 {strides = array<i32>} : memref<144x16xf32, #tpu.memory_space<vmem>>, vector<144x16xf32>,
    %c0_1 = arith.constant 0 : index
    %c0_2 = arith.constant 0 : index
    %2 = vector.load %arg1[%c0_1, %c0_2] : memref<128x16xf32, #tpu.memory_space<vmem>>, vector<128x16xf32>
    %3 = tpu.iota {dimensions = array<i32: 0>} : vector<128x1xi32>
    %c16_i32 = arith.constant 16 : i32
    %c0_i32 = arith.constant 0 : i32
    %4 = arith.cmpi eq, %c16_i32, %c0_i32 : i32
    %c1_i32 = arith.constant 1 : i32
    %5 = arith.select %4, %c1_i32, %c16_i32 : i32
    %6 = vector.broadcast %5 : i32 to vector<128x1xi32>
    %7 = arith.remsi %3, %6 : vector<128x1xi32>
    %c0_i32_3 = arith.constant 0 : i32
    %8 = vector.broadcast %c0_i32_3 : i32 to vector<128x1xi32>
    %9 = arith.cmpi ne, %7, %8 : vector<128x1xi32>
    %c0_i32_4 = arith.constant 0 : i32
    %10 = vector.broadcast %c0_i32_4 : i32 to vector<128x1xi32>
    %11 = arith.cmpi slt, %7, %10 : vector<128x1xi32>
    %c0_i32_5 = arith.constant 0 : i32
    %12 = arith.cmpi slt, %5, %c0_i32_5 : i32
    %13 = vector.broadcast %12 : i1 to vector<128x1xi1>
    %14 = vector.broadcast %13 : vector<128x1xi1> to vector<128x1xi1>
    %15 = arith.xori %11, %14 : vector<128x1xi1>
    %16 = arith.andi %15, %9 : vector<128x1xi1>
    %17 = vector.broadcast %5 : i32 to vector<128x1xi32>
    %18 = arith.addi %7, %17 : vector<128x1xi32>
    %19 = arith.select %16, %18, %7 : vector<128x1xi1>, vector<128x1xi32>
    %c0_i32_6 = arith.constant 0 : i32
    %20 = vector.broadcast %c0_i32_6 : i32 to vector<128x1xi32>
    %21 = arith.cmpi ne, %19, %20 : vector<128x1xi32>
    %22 = arith.extui %21 : vector<128x1xi1> to vector<128x1xi32>
    %23 = arith.sitofp %22 : vector<128x1xi32> to vector<128x1xf32>
    %c15_i32 = arith.constant 15 : i32
    %24 = vector.broadcast %c15_i32 : i32 to vector<128x1xi32>
    %25 = arith.cmpi ne, %19, %24 : vector<128x1xi32>
    %26 = arith.extui %25 : vector<128x1xi1> to vector<128x1xi32>
    %27 = arith.sitofp %26 : vector<128x1xi32> to vector<128x1xf32>
    %c8 = arith.constant 8 : index
    %c0_7 = arith.constant 0 : index
    %28 = vector.load %arg11[%c8, %c0_7] : memref<144x16xf32, #tpu.memory_space<vmem>>, vector<128x16xf32>
    tpu.vector_store %arg11[%c8, %c0_7], %2 {strides = array<i32>} : memref<144x16xf32, #tpu.memory_space<vmem>>, vector<128x16xf32>,
    %c7 = arith.constant 7 : index
    %c0_8 = arith.constant 0 : index
    %29 = vector.load %arg11[%c7, %c0_8] : memref<144x16xf32, #tpu.memory_space<vmem>>, vector<128x16xf32>
    %30 = vector.broadcast %23 : vector<128x1xf32> to vector<128x16xf32>
    %31 = arith.mulf %29, %30 : vector<128x16xf32>
    %c9 = arith.constant 9 : index
    %c0_9 = arith.constant 0 : index
    %32 = vector.load %arg11[%c9, %c0_9] : memref<144x16xf32, #tpu.memory_space<vmem>>, vector<128x16xf32>
    %33 = vector.broadcast %27 : vector<128x1xf32> to vector<128x16xf32>
    %34 = arith.mulf %32, %33 : vector<128x16xf32>
    %c0_10 = arith.constant 0 : index
    %c0_11 = arith.constant 0 : index
    %35 = vector.load %arg2[%c0_10, %c0_11] : memref<48x16xf32, #tpu.memory_space<vmem>>, vector<16x16xf32>
    %cst_12 = arith.constant dense<0.000000e+00> : vector<128x16xf32>
    %36 = tpu.matmul %31, %35, %cst_12 {dimension_numbers = #tpu.dot_dimension_numbers<[1], [0], [0], [1], [0, 0, 1, 1], [], []>} : vector<128x16xf32>, vector<16x16xf32>, vector<128x16xf32> -> vector<128x16xf32>
    %c16 = arith.constant 16 : index
    %c0_13 = arith.constant 0 : index
    %37 = vector.load %arg2[%c16, %c0_13] : memref<48x16xf32, #tpu.memory_space<vmem>>, vector<16x16xf32>
    %cst_14 = arith.constant dense<0.000000e+00> : vector<128x16xf32>
    %38 = tpu.matmul %2, %37, %cst_14 {dimension_numbers = #tpu.dot_dimension_numbers<[1], [0], [0], [1], [0, 0, 1, 1], [], []>} : vector<128x16xf32>, vector<16x16xf32>, vector<128x16xf32> -> vector<128x16xf32>
    %39 = arith.addf %36, %38 : vector<128x16xf32>
    %c32 = arith.constant 32 : index
    %c0_15 = arith.constant 0 : index
    %40 = vector.load %arg2[%c32, %c0_15] : memref<48x16xf32, #tpu.memory_space<vmem>>, vector<16x16xf32>
    %cst_16 = arith.constant dense<0.000000e+00> : vector<128x16xf32>
    %41 = tpu.matmul %34, %40, %cst_16 {dimension_numbers = #tpu.dot_dimension_numbers<[1], [0], [0], [1], [0, 0, 1, 1], [], []>} : vector<128x16xf32>, vector<16x16xf32>, vector<128x16xf32> -> vector<128x16xf32>
    %42 = arith.addf %39, %41 : vector<128x16xf32>
    %cst_17 = arith.constant 0.000000e+00 : f32
    %43 = vector.broadcast %cst_17 : f32 to vector<128x16xf32>
    %44 = arith.maximumf %42, %43 : vector<128x16xf32>
    %c8_18 = arith.constant 8 : index
    %c0_19 = arith.constant 0 : index
    %45 = vector.load %arg11[%c8_18, %c0_19] : memref<144x16xf32, #tpu.memory_space<vmem>>, vector<128x16xf32>
    tpu.vector_store %arg11[%c8_18, %c0_19], %44 {strides = array<i32>} : memref<144x16xf32, #tpu.memory_space<vmem>>, vector<128x16xf32>,
    %c7_20 = arith.constant 7 : index
    %c0_21 = arith.constant 0 : index
    %46 = vector.load %arg11[%c7_20, %c0_21] : memref<144x16xf32, #tpu.memory_space<vmem>>, vector<128x16xf32>
    %47 = vector.broadcast %23 : vector<128x1xf32> to vector<128x16xf32>
    %48 = arith.mulf %46, %47 : vector<128x16xf32>
    %c9_22 = arith.constant 9 : index
    %c0_23 = arith.constant 0 : index
    %49 = vector.load %arg11[%c9_22, %c0_23] : memref<144x16xf32, #tpu.memory_space<vmem>>, vector<128x16xf32>
    %50 = vector.broadcast %27 : vector<128x1xf32> to vector<128x16xf32>
    %51 = arith.mulf %49, %50 : vector<128x16xf32>
    %c0_24 = arith.constant 0 : index
    %c0_25 = arith.constant 0 : index
    %52 = vector.load %arg3[%c0_24, %c0_25] : memref<48x16xf32, #tpu.memory_space<vmem>>, vector<16x16xf32>
    %cst_26 = arith.constant dense<0.000000e+00> : vector<128x16xf32>
    %53 = tpu.matmul %48, %52, %cst_26 {dimension_numbers = #tpu.dot_dimension_numbers<[1], [0], [0], [1], [0, 0, 1, 1], [], []>} : vector<128x16xf32>, vector<16x16xf32>, vector<128x16xf32> -> vector<128x16xf32>
    %c16_27 = arith.constant 16 : index
    %c0_28 = arith.constant 0 : index
    %54 = vector.load %arg3[%c16_27, %c0_28] : memref<48x16xf32, #tpu.memory_space<vmem>>, vector<16x16xf32>
    %cst_29 = arith.constant dense<0.000000e+00> : vector<128x16xf32>
    %55 = tpu.matmul %44, %54, %cst_29 {dimension_numbers = #tpu.dot_dimension_numbers<[1], [0], [0], [1], [0, 0, 1, 1], [], []>} : vector<128x16xf32>, vector<16x16xf32>, vector<128x16xf32> -> vector<128x16xf32>
    %56 = arith.addf %53, %55 : vector<128x16xf32>
    %c32_30 = arith.constant 32 : index
    %c0_31 = arith.constant 0 : index
    %57 = vector.load %arg3[%c32_30, %c0_31] : memref<48x16xf32, #tpu.memory_space<vmem>>, vector<16x16xf32>
    %cst_32 = arith.constant dense<0.000000e+00> : vector<128x16xf32>
    %58 = tpu.matmul %51, %57, %cst_32 {dimension_numbers = #tpu.dot_dimension_numbers<[1], [0], [0], [1], [0, 0, 1, 1], [], []>} : vector<128x16xf32>, vector<16x16xf32>, vector<128x16xf32> -> vector<128x16xf32>
    %59 = arith.addf %56, %58 : vector<128x16xf32>
    %60 = arith.addf %59, %2 : vector<128x16xf32>
    %cst_33 = arith.constant 0.000000e+00 : f32
    %61 = vector.broadcast %cst_33 : f32 to vector<128x16xf32>
    %62 = arith.maximumf %60, %61 : vector<128x16xf32>
    %c8_34 = arith.constant 8 : index
    %c0_35 = arith.constant 0 : index
    %63 = vector.load %arg11[%c8_34, %c0_35] : memref<144x16xf32, #tpu.memory_space<vmem>>, vector<128x16xf32>
    tpu.vector_store %arg11[%c8_34, %c0_35], %62 {strides = array<i32>} : memref<144x16xf32, #tpu.memory_space<vmem>>, vector<128x16xf32>,
    %c7_36 = arith.constant 7 : index
    %c0_37 = arith.constant 0 : index
    %64 = vector.load %arg11[%c7_36, %c0_37] : memref<144x16xf32, #tpu.memory_space<vmem>>, vector<128x16xf32>
    %65 = vector.broadcast %23 : vector<128x1xf32> to vector<128x16xf32>
    %66 = arith.mulf %64, %65 : vector<128x16xf32>
    %c9_38 = arith.constant 9 : index
    %c0_39 = arith.constant 0 : index
    %67 = vector.load %arg11[%c9_38, %c0_39] : memref<144x16xf32, #tpu.memory_space<vmem>>, vector<128x16xf32>
    %68 = vector.broadcast %27 : vector<128x1xf32> to vector<128x16xf32>
    %69 = arith.mulf %67, %68 : vector<128x16xf32>
    %c0_40 = arith.constant 0 : index
    %c0_41 = arith.constant 0 : index
    %70 = vector.load %arg4[%c0_40, %c0_41] : memref<48x16xf32, #tpu.memory_space<vmem>>, vector<16x16xf32>
    %cst_42 = arith.constant dense<0.000000e+00> : vector<128x16xf32>
    %71 = tpu.matmul %66, %70, %cst_42 {dimension_numbers = #tpu.dot_dimension_numbers<[1], [0], [0], [1], [0, 0, 1, 1], [], []>} : vector<128x16xf32>, vector<16x16xf32>, vector<128x16xf32> -> vector<128x16xf32>
    %c16_43 = arith.constant 16 : index
    %c0_44 = arith.constant 0 : index
    %72 = vector.load %arg4[%c16_43, %c0_44] : memref<48x16xf32, #tpu.memory_space<vmem>>, vector<16x16xf32>
    %cst_45 = arith.constant dense<0.000000e+00> : vector<128x16xf32>
    %73 = tpu.matmul %62, %72, %cst_45 {dimension_numbers = #tpu.dot_dimension_numbers<[1], [0], [0], [1], [0, 0, 1, 1], [], []>} : vector<128x16xf32>, vector<16x16xf32>, vector<128x16xf32> -> vector<128x16xf32>
    %74 = arith.addf %71, %73 : vector<128x16xf32>
    %c32_46 = arith.constant 32 : index
    %c0_47 = arith.constant 0 : index
    %75 = vector.load %arg4[%c32_46, %c0_47] : memref<48x16xf32, #tpu.memory_space<vmem>>, vector<16x16xf32>
    %cst_48 = arith.constant dense<0.000000e+00> : vector<128x16xf32>
    %76 = tpu.matmul %69, %75, %cst_48 {dimension_numbers = #tpu.dot_dimension_numbers<[1], [0], [0], [1], [0, 0, 1, 1], [], []>} : vector<128x16xf32>, vector<16x16xf32>, vector<128x16xf32> -> vector<128x16xf32>
    %77 = arith.addf %74, %76 : vector<128x16xf32>
    %cst_49 = arith.constant 0.000000e+00 : f32
    %78 = vector.broadcast %cst_49 : f32 to vector<128x16xf32>
    %79 = arith.maximumf %77, %78 : vector<128x16xf32>
    %c8_50 = arith.constant 8 : index
    %c0_51 = arith.constant 0 : index
    %80 = vector.load %arg11[%c8_50, %c0_51] : memref<144x16xf32, #tpu.memory_space<vmem>>, vector<128x16xf32>
    tpu.vector_store %arg11[%c8_50, %c0_51], %79 {strides = array<i32>} : memref<144x16xf32, #tpu.memory_space<vmem>>, vector<128x16xf32>,
    %c7_52 = arith.constant 7 : index
    %c0_53 = arith.constant 0 : index
    %81 = vector.load %arg11[%c7_52, %c0_53] : memref<144x16xf32, #tpu.memory_space<vmem>>, vector<128x16xf32>
    %82 = vector.broadcast %23 : vector<128x1xf32> to vector<128x16xf32>
    %83 = arith.mulf %81, %82 : vector<128x16xf32>
    %c9_54 = arith.constant 9 : index
    %c0_55 = arith.constant 0 : index
    %84 = vector.load %arg11[%c9_54, %c0_55] : memref<144x16xf32, #tpu.memory_space<vmem>>, vector<128x16xf32>
    %85 = vector.broadcast %27 : vector<128x1xf32> to vector<128x16xf32>
    %86 = arith.mulf %84, %85 : vector<128x16xf32>
    %c0_56 = arith.constant 0 : index
    %c0_57 = arith.constant 0 : index
    %87 = vector.load %arg5[%c0_56, %c0_57] : memref<48x16xf32, #tpu.memory_space<vmem>>, vector<16x16xf32>
    %cst_58 = arith.constant dense<0.000000e+00> : vector<128x16xf32>
    %88 = tpu.matmul %83, %87, %cst_58 {dimension_numbers = #tpu.dot_dimension_numbers<[1], [0], [0], [1], [0, 0, 1, 1], [], []>} : vector<128x16xf32>, vector<16x16xf32>, vector<128x16xf32> -> vector<128x16xf32>
    %c16_59 = arith.constant 16 : index
    %c0_60 = arith.constant 0 : index
    %89 = vector.load %arg5[%c16_59, %c0_60] : memref<48x16xf32, #tpu.memory_space<vmem>>, vector<16x16xf32>
    %cst_61 = arith.constant dense<0.000000e+00> : vector<128x16xf32>
    %90 = tpu.matmul %79, %89, %cst_61 {dimension_numbers = #tpu.dot_dimension_numbers<[1], [0], [0], [1], [0, 0, 1, 1], [], []>} : vector<128x16xf32>, vector<16x16xf32>, vector<128x16xf32> -> vector<128x16xf32>
    %91 = arith.addf %88, %90 : vector<128x16xf32>
    %c32_62 = arith.constant 32 : index
    %c0_63 = arith.constant 0 : index
    %92 = vector.load %arg5[%c32_62, %c0_63] : memref<48x16xf32, #tpu.memory_space<vmem>>, vector<16x16xf32>
    %cst_64 = arith.constant dense<0.000000e+00> : vector<128x16xf32>
    %93 = tpu.matmul %86, %92, %cst_64 {dimension_numbers = #tpu.dot_dimension_numbers<[1], [0], [0], [1], [0, 0, 1, 1], [], []>} : vector<128x16xf32>, vector<16x16xf32>, vector<128x16xf32> -> vector<128x16xf32>
    %94 = arith.addf %91, %93 : vector<128x16xf32>
    %95 = arith.addf %94, %62 : vector<128x16xf32>
    %cst_65 = arith.constant 0.000000e+00 : f32
    %96 = vector.broadcast %cst_65 : f32 to vector<128x16xf32>
    %97 = arith.maximumf %95, %96 : vector<128x16xf32>
    %c8_66 = arith.constant 8 : index
    %c0_67 = arith.constant 0 : index
    %98 = vector.load %arg11[%c8_66, %c0_67] : memref<144x16xf32, #tpu.memory_space<vmem>>, vector<128x16xf32>
    tpu.vector_store %arg11[%c8_66, %c0_67], %97 {strides = array<i32>} : memref<144x16xf32, #tpu.memory_space<vmem>>, vector<128x16xf32>,
    %c8_68 = arith.constant 8 : index
    %c0_69 = arith.constant 0 : index
    %99 = tpu.strided_load %arg11[%c8_68, %c0_69] {strides = array<i32: 2, 1>} : memref<144x16xf32, #tpu.memory_space<vmem>>, vector<64x16xf32>
    %c9_70 = arith.constant 9 : index
    %c0_71 = arith.constant 0 : index
    %100 = tpu.strided_load %arg11[%c9_70, %c0_71] {strides = array<i32: 2, 1>} : memref<144x16xf32, #tpu.memory_space<vmem>>, vector<64x16xf32>
    %101 = arith.maximumf %99, %100 : vector<64x16xf32>
    %102 = tpu.iota {dimensions = array<i32: 0>} : vector<64x1xi32>
    %c8_i32 = arith.constant 8 : i32
    %c0_i32_72 = arith.constant 0 : i32
    %103 = arith.cmpi eq, %c8_i32, %c0_i32_72 : i32
    %c1_i32_73 = arith.constant 1 : i32
    %104 = arith.select %103, %c1_i32_73, %c8_i32 : i32
    %105 = vector.broadcast %104 : i32 to vector<64x1xi32>
    %106 = arith.remsi %102, %105 : vector<64x1xi32>
    %c0_i32_74 = arith.constant 0 : i32
    %107 = vector.broadcast %c0_i32_74 : i32 to vector<64x1xi32>
    %108 = arith.cmpi ne, %106, %107 : vector<64x1xi32>
    %c0_i32_75 = arith.constant 0 : i32
    %109 = vector.broadcast %c0_i32_75 : i32 to vector<64x1xi32>
    %110 = arith.cmpi slt, %106, %109 : vector<64x1xi32>
    %c0_i32_76 = arith.constant 0 : i32
    %111 = arith.cmpi slt, %104, %c0_i32_76 : i32
    %112 = vector.broadcast %111 : i1 to vector<64x1xi1>
    %113 = vector.broadcast %112 : vector<64x1xi1> to vector<64x1xi1>
    %114 = arith.xori %110, %113 : vector<64x1xi1>
    %115 = arith.andi %114, %108 : vector<64x1xi1>
    %116 = vector.broadcast %104 : i32 to vector<64x1xi32>
    %117 = arith.addi %106, %116 : vector<64x1xi32>
    %118 = arith.select %115, %117, %106 : vector<64x1xi1>, vector<64x1xi32>
    %c0_i32_77 = arith.constant 0 : i32
    %119 = vector.broadcast %c0_i32_77 : i32 to vector<64x1xi32>
    %120 = arith.cmpi ne, %118, %119 : vector<64x1xi32>
    %121 = arith.extui %120 : vector<64x1xi1> to vector<64x1xi32>
    %122 = arith.sitofp %121 : vector<64x1xi32> to vector<64x1xf32>
    %c7_i32 = arith.constant 7 : i32
    %123 = vector.broadcast %c7_i32 : i32 to vector<64x1xi32>
    %124 = arith.cmpi ne, %118, %123 : vector<64x1xi32>
    %125 = arith.extui %124 : vector<64x1xi1> to vector<64x1xi32>
    %126 = arith.sitofp %125 : vector<64x1xi32> to vector<64x1xf32>
    %c8_78 = arith.constant 8 : index
    %c0_79 = arith.constant 0 : index
    %127 = vector.load %arg11[%c8_78, %c0_79] : memref<144x16xf32, #tpu.memory_space<vmem>>, vector<64x16xf32>
    tpu.vector_store %arg11[%c8_78, %c0_79], %101 {strides = array<i32>} : memref<144x16xf32, #tpu.memory_space<vmem>>, vector<64x16xf32>,
    %c7_80 = arith.constant 7 : index
    %c0_81 = arith.constant 0 : index
    %128 = vector.load %arg11[%c7_80, %c0_81] : memref<144x16xf32, #tpu.memory_space<vmem>>, vector<64x16xf32>
    %129 = vector.broadcast %122 : vector<64x1xf32> to vector<64x16xf32>
    %130 = arith.mulf %128, %129 : vector<64x16xf32>
    %c9_82 = arith.constant 9 : index
    %c0_83 = arith.constant 0 : index
    %131 = vector.load %arg11[%c9_82, %c0_83] : memref<144x16xf32, #tpu.memory_space<vmem>>, vector<64x16xf32>
    %132 = vector.broadcast %126 : vector<64x1xf32> to vector<64x16xf32>
    %133 = arith.mulf %131, %132 : vector<64x16xf32>
    %c0_84 = arith.constant 0 : index
    %c0_85 = arith.constant 0 : index
    %134 = vector.load %arg4[%c0_84, %c0_85] : memref<48x16xf32, #tpu.memory_space<vmem>>, vector<16x16xf32>
    %cst_86 = arith.constant dense<0.000000e+00> : vector<64x16xf32>
    %135 = tpu.matmul %130, %134, %cst_86 {dimension_numbers = #tpu.dot_dimension_numbers<[1], [0], [0], [1], [0, 0, 1, 1], [], []>} : vector<64x16xf32>, vector<16x16xf32>, vector<64x16xf32> -> vector<64x16xf32>
    %c16_87 = arith.constant 16 : index
    %c0_88 = arith.constant 0 : index
    %136 = vector.load %arg4[%c16_87, %c0_88] : memref<48x16xf32, #tpu.memory_space<vmem>>, vector<16x16xf32>
    %cst_89 = arith.constant dense<0.000000e+00> : vector<64x16xf32>
    %137 = tpu.matmul %101, %136, %cst_89 {dimension_numbers = #tpu.dot_dimension_numbers<[1], [0], [0], [1], [0, 0, 1, 1], [], []>} : vector<64x16xf32>, vector<16x16xf32>, vector<64x16xf32> -> vector<64x16xf32>
    %138 = arith.addf %135, %137 : vector<64x16xf32>
    %c32_90 = arith.constant 32 : index
    %c0_91 = arith.constant 0 : index
    %139 = vector.load %arg4[%c32_90, %c0_91] : memref<48x16xf32, #tpu.memory_space<vmem>>, vector<16x16xf32>
    %cst_92 = arith.constant dense<0.000000e+00> : vector<64x16xf32>
    %140 = tpu.matmul %133, %139, %cst_92 {dimension_numbers = #tpu.dot_dimension_numbers<[1], [0], [0], [1], [0, 0, 1, 1], [], []>} : vector<64x16xf32>, vector<16x16xf32>, vector<64x16xf32> -> vector<64x16xf32>
    %141 = arith.addf %138, %140 : vector<64x16xf32>
    %cst_93 = arith.constant 0.000000e+00 : f32
    %142 = vector.broadcast %cst_93 : f32 to vector<64x16xf32>
    %143 = arith.maximumf %141, %142 : vector<64x16xf32>
    %c8_94 = arith.constant 8 : index
    %c0_95 = arith.constant 0 : index
    %144 = vector.load %arg11[%c8_94, %c0_95] : memref<144x16xf32, #tpu.memory_space<vmem>>, vector<64x16xf32>
    tpu.vector_store %arg11[%c8_94, %c0_95], %143 {strides = array<i32>} : memref<144x16xf32, #tpu.memory_space<vmem>>, vector<64x16xf32>,
    %c7_96 = arith.constant 7 : index
    %c0_97 = arith.constant 0 : index
    %145 = vector.load %arg11[%c7_96, %c0_97] : memref<144x16xf32, #tpu.memory_space<vmem>>, vector<64x16xf32>
    %146 = vector.broadcast %122 : vector<64x1xf32> to vector<64x16xf32>
    %147 = arith.mulf %145, %146 : vector<64x16xf32>
    %c9_98 = arith.constant 9 : index
    %c0_99 = arith.constant 0 : index
    %148 = vector.load %arg11[%c9_98, %c0_99] : memref<144x16xf32, #tpu.memory_space<vmem>>, vector<64x16xf32>
    %149 = vector.broadcast %126 : vector<64x1xf32> to vector<64x16xf32>
    %150 = arith.mulf %148, %149 : vector<64x16xf32>
    %c0_100 = arith.constant 0 : index
    %c0_101 = arith.constant 0 : index
    %151 = vector.load %arg5[%c0_100, %c0_101] : memref<48x16xf32, #tpu.memory_space<vmem>>, vector<16x16xf32>
    %cst_102 = arith.constant dense<0.000000e+00> : vector<64x16xf32>
    %152 = tpu.matmul %147, %151, %cst_102 {dimension_numbers = #tpu.dot_dimension_numbers<[1], [0], [0], [1], [0, 0, 1, 1], [], []>} : vector<64x16xf32>, vector<16x16xf32>, vector<64x16xf32> -> vector<64x16xf32>
    %c16_103 = arith.constant 16 : index
    %c0_104 = arith.constant 0 : index
    %153 = vector.load %arg5[%c16_103, %c0_104] : memref<48x16xf32, #tpu.memory_space<vmem>>, vector<16x16xf32>
    %cst_105 = arith.constant dense<0.000000e+00> : vector<64x16xf32>
    %154 = tpu.matmul %143, %153, %cst_105 {dimension_numbers = #tpu.dot_dimension_numbers<[1], [0], [0], [1], [0, 0, 1, 1], [], []>} : vector<64x16xf32>, vector<16x16xf32>, vector<64x16xf32> -> vector<64x16xf32>
    %155 = arith.addf %152, %154 : vector<64x16xf32>
    %c32_106 = arith.constant 32 : index
    %c0_107 = arith.constant 0 : index
    %156 = vector.load %arg5[%c32_106, %c0_107] : memref<48x16xf32, #tpu.memory_space<vmem>>, vector<16x16xf32>
    %cst_108 = arith.constant dense<0.000000e+00> : vector<64x16xf32>
    %157 = tpu.matmul %150, %156, %cst_108 {dimension_numbers = #tpu.dot_dimension_numbers<[1], [0], [0], [1], [0, 0, 1, 1], [], []>} : vector<64x16xf32>, vector<16x16xf32>, vector<64x16xf32> -> vector<64x16xf32>
    %158 = arith.addf %155, %157 : vector<64x16xf32>
    %159 = arith.addf %158, %101 : vector<64x16xf32>
    %cst_109 = arith.constant 0.000000e+00 : f32
    %160 = vector.broadcast %cst_109 : f32 to vector<64x16xf32>
    %161 = arith.maximumf %159, %160 : vector<64x16xf32>
    %c8_110 = arith.constant 8 : index
    %c0_111 = arith.constant 0 : index
    %162 = vector.load %arg11[%c8_110, %c0_111] : memref<144x16xf32, #tpu.memory_space<vmem>>, vector<64x16xf32>
    tpu.vector_store %arg11[%c8_110, %c0_111], %161 {strides = array<i32>} : memref<144x16xf32, #tpu.memory_space<vmem>>, vector<64x16xf32>,
    %c8_112 = arith.constant 8 : index
    %c0_113 = arith.constant 0 : index
    %163 = tpu.strided_load %arg11[%c8_112, %c0_113] {strides = array<i32: 2, 1>} : memref<144x16xf32, #tpu.memory_space<vmem>>, vector<32x16xf32>
    %c9_114 = arith.constant 9 : index
    %c0_115 = arith.constant 0 : index
    %164 = tpu.strided_load %arg11[%c9_114, %c0_115] {strides = array<i32: 2, 1>} : memref<144x16xf32, #tpu.memory_space<vmem>>, vector<32x16xf32>
    %165 = arith.maximumf %163, %164 : vector<32x16xf32>
    %c8_116 = arith.constant 8 : index
    %c0_117 = arith.constant 0 : index
    %166 = vector.load %arg11[%c8_116, %c0_117] : memref<144x16xf32, #tpu.memory_space<vmem>>, vector<32x16xf32>
    tpu.vector_store %arg11[%c8_116, %c0_117], %165 {strides = array<i32>} : memref<144x16xf32, #tpu.memory_space<vmem>>, vector<32x16xf32>,
    %c8_118 = arith.constant 8 : index
    %c0_119 = arith.constant 0 : index
    %167 = tpu.strided_load %arg11[%c8_118, %c0_119] {strides = array<i32: 4, 1>} : memref<144x16xf32, #tpu.memory_space<vmem>>, vector<8x16xf32>
    %c9_120 = arith.constant 9 : index
    %c0_121 = arith.constant 0 : index
    %168 = tpu.strided_load %arg11[%c9_120, %c0_121] {strides = array<i32: 4, 1>} : memref<144x16xf32, #tpu.memory_space<vmem>>, vector<8x16xf32>
    %c10 = arith.constant 10 : index
    %c0_122 = arith.constant 0 : index
    %169 = tpu.strided_load %arg11[%c10, %c0_122] {strides = array<i32: 4, 1>} : memref<144x16xf32, #tpu.memory_space<vmem>>, vector<8x16xf32>
    %c11 = arith.constant 11 : index
    %c0_123 = arith.constant 0 : index
    %170 = tpu.strided_load %arg11[%c11, %c0_123] {strides = array<i32: 4, 1>} : memref<144x16xf32, #tpu.memory_space<vmem>>, vector<8x16xf32>
    %171 = tpu.concatenate %167, %168, %169, %170 in 1 : vector<8x16xf32>, vector<8x16xf32>, vector<8x16xf32>, vector<8x16xf32> -> vector<8x64xf32>
    %c0_124 = arith.constant 0 : index
    %c0_125 = arith.constant 0 : index
    %172 = vector.load %arg6[%c0_124, %c0_125] : memref<64x64xf32, #tpu.memory_space<vmem>>, vector<64x64xf32>
    %cst_126 = arith.constant dense<0.000000e+00> : vector<8x64xf32>
    %173 = tpu.matmul %171, %172, %cst_126 {dimension_numbers = #tpu.dot_dimension_numbers<[1], [0], [0], [1], [0, 0, 1, 1], [], []>} : vector<8x64xf32>, vector<64x64xf32>, vector<8x64xf32> -> vector<8x64xf32>
    %c0_127 = arith.constant 0 : index
    %c0_128 = arith.constant 0 : index
    %174 = vector.load %arg7[%c0_127, %c0_128] : memref<1x64xf32, #tpu.memory_space<vmem>>, vector<1x64xf32>
    %175 = vector.broadcast %174 : vector<1x64xf32> to vector<8x64xf32>
    %176 = arith.addf %173, %175 : vector<8x64xf32>
    %cst_129 = arith.constant 0.000000e+00 : f32
    %177 = vector.broadcast %cst_129 : f32 to vector<8x64xf32>
    %178 = arith.maximumf %176, %177 : vector<8x64xf32>
    %c0_130 = arith.constant 0 : index
    %c0_131 = arith.constant 0 : index
    %179 = vector.load %arg8[%c0_130, %c0_131] : memref<64x64xf32, #tpu.memory_space<vmem>>, vector<64x64xf32>
    %cst_132 = arith.constant dense<0.000000e+00> : vector<8x64xf32>
    %180 = tpu.matmul %178, %179, %cst_132 {dimension_numbers = #tpu.dot_dimension_numbers<[1], [0], [0], [1], [0, 0, 1, 1], [], []>} : vector<8x64xf32>, vector<64x64xf32>, vector<8x64xf32> -> vector<8x64xf32>
    %c0_133 = arith.constant 0 : index
    %c0_134 = arith.constant 0 : index
    %181 = vector.load %arg9[%c0_133, %c0_134] : memref<1x64xf32, #tpu.memory_space<vmem>>, vector<1x64xf32>
    %182 = vector.broadcast %181 : vector<1x64xf32> to vector<8x64xf32>
    %183 = arith.addf %180, %182 : vector<8x64xf32>
    %184 = arith.addf %183, %171 : vector<8x64xf32>
    %c0_135 = arith.constant 0 : index
    %c0_136 = arith.constant 0 : index
    %185 = vector.load %arg10[%c0_135, %c0_136] : memref<8x64xf32, #tpu.memory_space<vmem>>, vector<8x64xf32>
    tpu.vector_store %arg10[%c0_135, %c0_136], %184 {strides = array<i32>} : memref<8x64xf32, #tpu.memory_space<vmem>>, vector<8x64xf32>,
    return
  }
  func.func @transform_0(%arg0: i32) -> (i32, i32) {
    %c0_i32 = arith.constant 0 : i32
    %c0_i32_0 = arith.constant 0 : i32
    return %arg0, %c0_i32 : i32, i32
  }
  func.func @transform_1(%arg0: i32) -> (i32, i32) {
    %c0_i32 = arith.constant 0 : i32
    %c0_i32_0 = arith.constant 0 : i32
    %c0_i32_1 = arith.constant 0 : i32
    return %c0_i32, %c0_i32_0 : i32, i32
  }
  func.func @transform_2(%arg0: i32) -> (i32, i32) {
    %c0_i32 = arith.constant 0 : i32
    %c0_i32_0 = arith.constant 0 : i32
    %c0_i32_1 = arith.constant 0 : i32
    return %c0_i32, %c0_i32_0 : i32, i32
  }
  func.func @transform_3(%arg0: i32) -> (i32, i32) {
    %c0_i32 = arith.constant 0 : i32
    %c0_i32_0 = arith.constant 0 : i32
    %c0_i32_1 = arith.constant 0 : i32
    return %c0_i32, %c0_i32_0 : i32, i32
  }
  func.func @transform_4(%arg0: i32) -> (i32, i32) {
    %c0_i32 = arith.constant 0 : i32
    %c0_i32_0 = arith.constant 0 : i32
    %c0_i32_1 = arith.constant 0 : i32
    return %c0_i32, %c0_i32_0 : i32, i32
  }
  func.func @transform_5(%arg0: i32) -> (i32, i32) {
    %c0_i32 = arith.constant 0 : i32
    %c0_i32_0 = arith.constant 0 : i32
    %c0_i32_1 = arith.constant 0 : i32
    return %c0_i32, %c0_i32_0 : i32, i32
  }
  func.func @transform_6(%arg0: i32) -> (i32, i32) {
    %c0_i32 = arith.constant 0 : i32
    %c0_i32_0 = arith.constant 0 : i32
    %c0_i32_1 = arith.constant 0 : i32
    return %c0_i32, %c0_i32_0 : i32, i32
  }
  func.func @transform_7(%arg0: i32) -> (i32, i32) {
    %c0_i32 = arith.constant 0 : i32
    %c0_i32_0 = arith.constant 0 : i32
    %c0_i32_1 = arith.constant 0 : i32
    return %c0_i32, %c0_i32_0 : i32, i32
  }
  func.func @transform_8(%arg0: i32) -> (i32, i32) {
    %c0_i32 = arith.constant 0 : i32
    %c0_i32_0 = arith.constant 0 : i32
    %c0_i32_1 = arith.constant 0 : i32
    return %c0_i32, %c0_i32_0 : i32, i32
  }
  func.func @transform_9(%arg0: i32) -> (i32, i32) {
    %c0_i32 = arith.constant 0 : i32
    %c0_i32_0 = arith.constant 0 : i32
    return %arg0, %c0_i32 : i32, i32
  }
}

</mosaic_0001>

<llo_original>
// kernel: tpu_custom_call.1
$region0: #{tpu_custom_call.1}
  #allocation0 [shape = 'u32[]', space=smem, size = 0x4, offset = 0x4, fixed_abs, tag = 'smem constant byte address 0x4 - core index']
  #allocation1 [shape = 'u32[144,128]{1,0:T(1,128)}', space=vmem, size = 0x12000, scoped, tag = 'internal scratch']
  #allocation2 [shape = 'f32[144,16]{1,0:T(8,128)}', space=vmem, size = 0x12000, scoped, tag = 'scratch operand']
  %s0 = inlined_call_operand.vmem [shape: f32[256,16], index: 0, kind: input, shape index: {}]
  %s1 = inlined_call_operand.vmem [shape: f32[48,16], index: 1, kind: input, shape index: {}]
  %s2 = inlined_call_operand.vmem [shape: f32[48,16], index: 2, kind: input, shape index: {}]
  %s3 = inlined_call_operand.vmem [shape: f32[48,16], index: 3, kind: input, shape index: {}]
  %s4 = inlined_call_operand.vmem [shape: f32[48,16], index: 4, kind: input, shape index: {}]
  %s5 = inlined_call_operand.vmem [shape: f32[64,64], index: 5, kind: input, shape index: {}]
  %s6 = inlined_call_operand.vmem [shape: f32[1,64], index: 6, kind: input, shape index: {}]
  %s7 = inlined_call_operand.vmem [shape: f32[64,64], index: 7, kind: input, shape index: {}]
  %s8 = inlined_call_operand.vmem [shape: f32[1,64], index: 8, kind: input, shape index: {}]
  %s9 = inlined_call_operand.hbm [shape: f32[16,64], index: 9, kind: output, shape index: {}]
  %s10 = sld [smem:[#allocation0]]
  $region69: #{tpu_custom_call.1} parent=0
    _
  %s12 = ssub.s32 1, %s10
  %s13 = scalar_select 0, %s12, %s10
  $region1: #{tpu_custom_call.1} parent=0
    #allocation3 [shape = 'u8[8192]{0}', space=vmem, size = 0x2000, scoped, tag = 'output window, operand 0']
    #allocation4 [shape = 's32[2]{0}', space=sflag, size = 0x8, scoped, tag = 'scoped memory for tpu_custom_call.1']
    %14 = vsyncpa [#allocation4], 0
    %s15 = scalar_lea.sflag [#allocation4], 1
    %16 = vsyncpa %s15, 0
    loop: start=0, step=1, limit=4
    $region2: #{tpu_custom_call.1} parent=1 // loop_pre_header
      _
    $region3: #{tpu_custom_call.1} parent=1 // loop_header
      %s18 = sphi 0, %s22
      %p19 = scmp.ge.s32.totalorder %s18, 4
      %s28 = sphi 0, %s30
      %s31 = sphi 0, %s28
      %s32 = sphi 0, %s31
      %s48 = sphi 0, %s32
      %s52 = sphi 0, %s52
      %s54 = sphi 0, %s52
      %s55 = sphi 0, %s54
      %s69 = sphi 0, %s55
      %s73 = sphi 0, %s73
      %s75 = sphi 0, %s73
      %s76 = sphi 0, %s75
      %s90 = sphi 0, %s76
      %s94 = sphi 0, %s94
      %s96 = sphi 0, %s94
      %s97 = sphi 0, %s96
      %s111 = sphi 0, %s97
      %s115 = sphi 0, %s115
      %s117 = sphi 0, %s115
      %s118 = sphi 0, %s117
      %s132 = sphi 0, %s118
      %s136 = sphi 0, %s136
      %s138 = sphi 0, %s136
      %s139 = sphi 0, %s138
      %s153 = sphi 0, %s139
      %s157 = sphi 0, %s157
      %s159 = sphi 0, %s157
      %s160 = sphi 0, %s159
      %s174 = sphi 0, %s160
      %s178 = sphi 0, %s178
      %s180 = sphi 0, %s178
      %s181 = sphi 0, %s180
      %s195 = sphi 0, %s181
      %s199 = sphi 0, %s199
      %s201 = sphi 0, %s199
      %s202 = sphi 0, %s201
      %s216 = sphi 0, %s202
      %s222 = sphi 0, %s224
      %s225 = sphi 0, %s222
      %s226 = sphi 0, %s225
      %s242 = sphi 0, %s226
    $region4: #{tpu_custom_call.1} parent=1 // loop_header_branch
      %21 = sbr.rel (%p19) target = $region8
    $region5: #{tpu_custom_call.1} parent=1 // loop_body
      %s23 = ssub.s32 %s18, 1
      %s24 = ssub.s32 %s18, 2
      %s25 = sadd.s32 %s18, 1
      %s26 = ssub.s32 %s18, %s25
      %p27 = scmp.eq.s32.totalorder %s26, 0
      %s29 = sadd.s32 %s28, 1
      %s30 = scalar_select %p27, %s28, %s29
      %p33 = pneg %p27
      %p34 = scmp.eq.s32.totalorder %s18, 1
      %p35 = por %p33, %p34
      %p36 = scmp.ne.s32.totalorder %s28, %s31
      %p37 = scmp.eq.s32.totalorder %s18, 0
      %p38 = por %p36, %p37
      %p39 = scmp.ne.s32.totalorder %s28, %s31
      %p40 = scmp.eq.s32.totalorder %s23, 1
      %p41 = por %p39, %p40
      %p42 = scmp.ne.s32.totalorder %s31, %s32
      %p43 = scmp.eq.s32.totalorder %s23, 0
      %p44 = por %p42, %p43
      %p45 = scmp.ne.s32.totalorder %s31, %s32
      %p46 = scmp.eq.s32.totalorder %s24, 1
      %p47 = por %p45, %p46
      %p49 = scmp.ne.s32.totalorder %s32, %s48
      %p50 = scmp.eq.s32.totalorder %s24, 0
      %p51 = por %p49, %p50
      %s53 = sadd.s32 %s52, 1
      %p56 = scmp.eq.s32.totalorder %s18, 1
      %p57 = scmp.ne.s32.totalorder %s52, %s54
      %p58 = scmp.eq.s32.totalorder %s18, 0
      %p59 = por %p57, %p58
      %p60 = scmp.ne.s32.totalorder %s52, %s54
      %p61 = scmp.eq.s32.totalorder %s23, 1
      %p62 = por %p60, %p61
      %p63 = scmp.ne.s32.totalorder %s54, %s55
      %p64 = scmp.eq.s32.totalorder %s23, 0
      %p65 = por %p63, %p64
      %p66 = scmp.ne.s32.totalorder %s54, %s55
      %p67 = scmp.eq.s32.totalorder %s24, 1
      %p68 = por %p66, %p67
      %p70 = scmp.ne.s32.totalorder %s55, %s69
      %p71 = scmp.eq.s32.totalorder %s24, 0
      %p72 = por %p70, %p71
      %s74 = sadd.s32 %s73, 1
      %p77 = scmp.eq.s32.totalorder %s18, 1
      %p78 = scmp.ne.s32.totalorder %s73, %s75
      %p79 = scmp.eq.s32.totalorder %s18, 0
      %p80 = por %p78, %p79
      %p81 = scmp.ne.s32.totalorder %s73, %s75
      %p82 = scmp.eq.s32.totalorder %s23, 1
      %p83 = por %p81, %p82
      %p84 = scmp.ne.s32.totalorder %s75, %s76
      %p85 = scmp.eq.s32.totalorder %s23, 0
      %p86 = por %p84, %p85
      %p87 = scmp.ne.s32.totalorder %s75, %s76
      %p88 = scmp.eq.s32.totalorder %s24, 1
      %p89 = por %p87, %p88
      %p91 = scmp.ne.s32.totalorder %s76, %s90
      %p92 = scmp.eq.s32.totalorder %s24, 0
      %p93 = por %p91, %p92
      %s95 = sadd.s32 %s94, 1
      %p98 = scmp.eq.s32.totalorder %s18, 1
      %p99 = scmp.ne.s32.totalorder %s94, %s96
      %p100 = scmp.eq.s32.totalorder %s18, 0
      %p101 = por %p99, %p100
      %p102 = scmp.ne.s32.totalorder %s94, %s96
      %p103 = scmp.eq.s32.totalorder %s23, 1
      %p104 = por %p102, %p103
      %p105 = scmp.ne.s32.totalorder %s96, %s97
      %p106 = scmp.eq.s32.totalorder %s23, 0
      %p107 = por %p105, %p106
      %p108 = scmp.ne.s32.totalorder %s96, %s97
      %p109 = scmp.eq.s32.totalorder %s24, 1
      %p110 = por %p108, %p109
      %p112 = scmp.ne.s32.totalorder %s97, %s111
      %p113 = scmp.eq.s32.totalorder %s24, 0
      %p114 = por %p112, %p113
      %s116 = sadd.s32 %s115, 1
      %p119 = scmp.eq.s32.totalorder %s18, 1
      %p120 = scmp.ne.s32.totalorder %s115, %s117
      %p121 = scmp.eq.s32.totalorder %s18, 0
      %p122 = por %p120, %p121
      %p123 = scmp.ne.s32.totalorder %s115, %s117
      %p124 = scmp.eq.s32.totalorder %s23, 1
      %p125 = por %p123, %p124
      %p126 = scmp.ne.s32.totalorder %s117, %s118
      %p127 = scmp.eq.s32.totalorder %s23, 0
      %p128 = por %p126, %p127
      %p129 = scmp.ne.s32.totalorder %s117, %s118
      %p130 = scmp.eq.s32.totalorder %s24, 1
      %p131 = por %p129, %p130
      %p133 = scmp.ne.s32.totalorder %s118, %s132
      %p134 = scmp.eq.s32.totalorder %s24, 0
      %p135 = por %p133, %p134
      %s137 = sadd.s32 %s136, 1
      %p140 = scmp.eq.s32.totalorder %s18, 1
      %p141 = scmp.ne.s32.totalorder %s136, %s138
      %p142 = scmp.eq.s32.totalorder %s18, 0
      %p143 = por %p141, %p142
      %p144 = scmp.ne.s32.totalorder %s136, %s138
      %p145 = scmp.eq.s32.totalorder %s23, 1
      %p146 = por %p144, %p145
      %p147 = scmp.ne.s32.totalorder %s138, %s139
      %p148 = scmp.eq.s32.totalorder %s23, 0
      %p149 = por %p147, %p148
      %p150 = scmp.ne.s32.totalorder %s138, %s139
      %p151 = scmp.eq.s32.totalorder %s24, 1
      %p152 = por %p150, %p151
      %p154 = scmp.ne.s32.totalorder %s139, %s153
      %p155 = scmp.eq.s32.totalorder %s24, 0
      %p156 = por %p154, %p155
      %s158 = sadd.s32 %s157, 1
      %p161 = scmp.eq.s32.totalorder %s18, 1
      %p162 = scmp.ne.s32.totalorder %s157, %s159
      %p163 = scmp.eq.s32.totalorder %s18, 0
      %p164 = por %p162, %p163
      %p165 = scmp.ne.s32.totalorder %s157, %s159
      %p166 = scmp.eq.s32.totalorder %s23, 1
      %p167 = por %p165, %p166
      %p168 = scmp.ne.s32.totalorder %s159, %s160
      %p169 = scmp.eq.s32.totalorder %s23, 0
      %p170 = por %p168, %p169
      %p171 = scmp.ne.s32.totalorder %s159, %s160
      %p172 = scmp.eq.s32.totalorder %s24, 1
      %p173 = por %p171, %p172
      %p175 = scmp.ne.s32.totalorder %s160, %s174
      %p176 = scmp.eq.s32.totalorder %s24, 0
      %p177 = por %p175, %p176
      %s179 = sadd.s32 %s178, 1
      %p182 = scmp.eq.s32.totalorder %s18, 1
      %p183 = scmp.ne.s32.totalorder %s178, %s180
      %p184 = scmp.eq.s32.totalorder %s18, 0
      %p185 = por %p183, %p184
      %p186 = scmp.ne.s32.totalorder %s178, %s180
      %p187 = scmp.eq.s32.totalorder %s23, 1
      %p188 = por %p186, %p187
      %p189 = scmp.ne.s32.totalorder %s180, %s181
      %p190 = scmp.eq.s32.totalorder %s23, 0
      %p191 = por %p189, %p190
      %p192 = scmp.ne.s32.totalorder %s180, %s181
      %p193 = scmp.eq.s32.totalorder %s24, 1
      %p194 = por %p192, %p193
      %p196 = scmp.ne.s32.totalorder %s181, %s195
      %p197 = scmp.eq.s32.totalorder %s24, 0
      %p198 = por %p196, %p197
      %s200 = sadd.s32 %s199, 1
      %p203 = scmp.eq.s32.totalorder %s18, 1
      %p204 = scmp.ne.s32.totalorder %s199, %s201
      %p205 = scmp.eq.s32.totalorder %s18, 0
      %p206 = por %p204, %p205
      %p207 = scmp.ne.s32.totalorder %s199, %s201
      %p208 = scmp.eq.s32.totalorder %s23, 1
      %p209 = por %p207, %p208
      %p210 = scmp.ne.s32.totalorder %s201, %s202
      %p211 = scmp.eq.s32.totalorder %s23, 0
      %p212 = por %p210, %p211
      %p213 = scmp.ne.s32.totalorder %s201, %s202
      %p214 = scmp.eq.s32.totalorder %s24, 1
      %p215 = por %p213, %p214
      %p217 = scmp.ne.s32.totalorder %s202, %s216
      %p218 = scmp.eq.s32.totalorder %s24, 0
      %p219 = por %p217, %p218
      %s220 = ssub.s32 %s18, %s25
      %p221 = scmp.eq.s32.totalorder %s220, 0
      %s223 = sadd.s32 %s222, 1
      %s224 = scalar_select %p221, %s222, %s223
      %p227 = pneg %p221
      %p228 = scmp.eq.s32.totalorder %s18, 1
      %p229 = por %p227, %p228
      %p230 = scmp.ne.s32.totalorder %s222, %s225
      %p231 = scmp.eq.s32.totalorder %s18, 0
      %p232 = por %p230, %p231
      %p233 = scmp.ne.s32.totalorder %s222, %s225
      %p234 = scmp.eq.s32.totalorder %s23, 1
      %p235 = por %p233, %p234
      %p236 = scmp.ne.s32.totalorder %s225, %s226
      %p237 = scmp.eq.s32.totalorder %s23, 0
      %p238 = por %p236, %p237
      %p239 = scmp.ne.s32.totalorder %s225, %s226
      %p240 = scmp.eq.s32.totalorder %s24, 1
      %p241 = por %p239, %p240
      %p243 = scmp.ne.s32.totalorder %s226, %s242
      %p244 = scmp.eq.s32.totalorder %s24, 0
      %p245 = por %p243, %p244
      %p246 = scmp.le.s32.totalorder 1, %s18
      %p247 = scmp.lt.s32.totalorder %s18, 3
      %p248 = pnand %p246, %p247
      %p249 = pneg %p248
      // Predicated region
      $region9: #{tpu_custom_call.1} parent=5 // pred_check
        _
      $region10: #{tpu_custom_call.1} parent=5 // pred_check_branch
        %251 = sbr.rel (%p248) target = $region12
      $region11: #{tpu_custom_call.1} parent=5 // pred_region
        %s252 = ssub.s32 %s18, 1
        // Predicated region
        $region13: #{tpu_custom_call.1} parent=11 // pred_check
          %p253 = pneg %p65
        $region14: #{tpu_custom_call.1} parent=11 // pred_check_branch
          %255 = sbr.rel (%p253) target = $region16
        $region15: #{tpu_custom_call.1} parent=11 // pred_region
          _
        $region16: #{tpu_custom_call.1} parent=11 // pred_fallthru
          _
        // Predicated region
        $region17: #{tpu_custom_call.1} parent=11 // pred_check
          %p256 = pneg %p86
        $region18: #{tpu_custom_call.1} parent=11 // pred_check_branch
          %258 = sbr.rel (%p256) target = $region20
        $region19: #{tpu_custom_call.1} parent=11 // pred_region
          _
        $region20: #{tpu_custom_call.1} parent=11 // pred_fallthru
          _
        // Predicated region
        $region21: #{tpu_custom_call.1} parent=11 // pred_check
          %p259 = pneg %p107
        $region22: #{tpu_custom_call.1} parent=11 // pred_check_branch
          %261 = sbr.rel (%p259) target = $region24
        $region23: #{tpu_custom_call.1} parent=11 // pred_region
          _
        $region24: #{tpu_custom_call.1} parent=11 // pred_fallthru
          _
        // Predicated region
        $region25: #{tpu_custom_call.1} parent=11 // pred_check
          %p262 = pneg %p128
        $region26: #{tpu_custom_call.1} parent=11 // pred_check_branch
          %264 = sbr.rel (%p262) target = $region28
        $region27: #{tpu_custom_call.1} parent=11 // pred_region
          _
        $region28: #{tpu_custom_call.1} parent=11 // pred_fallthru
          _
        // Predicated region
        $region29: #{tpu_custom_call.1} parent=11 // pred_check
          %p265 = pneg %p149
        $region30: #{tpu_custom_call.1} parent=11 // pred_check_branch
          %267 = sbr.rel (%p265) target = $region32
        $region31: #{tpu_custom_call.1} parent=11 // pred_region
          _
        $region32: #{tpu_custom_call.1} parent=11 // pred_fallthru
          _
        // Predicated region
        $region33: #{tpu_custom_call.1} parent=11 // pred_check
          %p268 = pneg %p170
        $region34: #{tpu_custom_call.1} parent=11 // pred_check_branch
          %270 = sbr.rel (%p268) target = $region36
        $region35: #{tpu_custom_call.1} parent=11 // pred_region
          _
        $region36: #{tpu_custom_call.1} parent=11 // pred_fallthru
          _
        // Predicated region
        $region37: #{tpu_custom_call.1} parent=11 // pred_check
          %p271 = pneg %p191
        $region38: #{tpu_custom_call.1} parent=11 // pred_check_branch
          %273 = sbr.rel (%p271) target = $region40
        $region39: #{tpu_custom_call.1} parent=11 // pred_region
          _
        $region40: #{tpu_custom_call.1} parent=11 // pred_fallthru
          _
        // Predicated region
        $region41: #{tpu_custom_call.1} parent=11 // pred_check
          %p274 = pneg %p212
        $region42: #{tpu_custom_call.1} parent=11 // pred_check_branch
          %276 = sbr.rel (%p274) target = $region44
        $region43: #{tpu_custom_call.1} parent=11 // pred_region
          _
        $region44: #{tpu_custom_call.1} parent=11 // pred_fallthru
          _
      $region12: #{tpu_custom_call.1} parent=5 // pred_fallthru
        _
      %p277 = scmp.lt.s32.totalorder %s18, 2
      // Predicated region
      $region45: #{tpu_custom_call.1} parent=5 // pred_check
        %p278 = pneg %p277
      $region46: #{tpu_custom_call.1} parent=5 // pred_check_branch
        %280 = sbr.rel (%p278) target = $region48
      $region47: #{tpu_custom_call.1} parent=5 // pred_region
        // Predicated region
        $region49: #{tpu_custom_call.1} parent=47 // pred_check
          %p281 = pneg %p38
        $region50: #{tpu_custom_call.1} parent=47 // pred_check_branch
          %283 = sbr.rel (%p281) target = $region52
        $region51: #{tpu_custom_call.1} parent=47 // pred_region
          %s284 = smul.u32 16, %s18
          %p285 = scmp.lt.s32.totalorder %s284, 31
          %s286 = scalar_select %p285, %s284, 31
          %s287 = smul.addr %s286, 8
          %s288 = scalar_lea.vmem %s0, %s287
          %s289 = smul.u32 16, %s18
        $region52: #{tpu_custom_call.1} parent=47 // pred_fallthru
          _
      $region48: #{tpu_custom_call.1} parent=5 // pred_fallthru
        _
      %p290 = scmp.le.s32.totalorder 1, %s18
      %p291 = scmp.lt.s32.totalorder %s18, 3
      %p292 = pnand %p290, %p291
      %p293 = pneg %p292
      // Predicated region
      $region53: #{tpu_custom_call.1} parent=5 // pred_check
        _
      $region54: #{tpu_custom_call.1} parent=5 // pred_check_branch
        %295 = sbr.rel (%p292) target = $region56
      $region55: #{tpu_custom_call.1} parent=5 // pred_region
        %s296 = ssub.s32 %s18, 1
        %s297 = smul.u32 16, %s23
        %p298 = scmp.lt.s32.totalorder %s297, 31
        %s299 = scalar_select %p298, %s297, 31
        %s300 = smul.addr %s299, 8
        %s301 = scalar_lea.vmem %s0, %s300
        %p302 = pneg %p44
        %p303 = pneg %p41
        %p304 = pneg %p65
        %p305 = pneg %p62
        %p306 = pneg %p86
        %p307 = pneg %p83
        %p308 = pneg %p107
        %p309 = pneg %p104
        %p310 = pneg %p128
        %p311 = pneg %p125
        %p312 = pneg %p149
        %p313 = pneg %p146
        %p314 = pneg %p170
        %p315 = pneg %p167
        %p316 = pneg %p191
        %p317 = pneg %p188
        %p318 = pneg %p212
        %p319 = pneg %p209
        %p320 = pneg %p238
        %p321 = pneg %p235
        %s322 = sand.u32 %s225, 1
        %s323 = scalar_lea.sflag [#allocation4], %s322
        %s324 = sand.u32 %s225, 1
        %s325 = smul.addr %s324, 8
        %s326 = scalar_lea.vmem [#allocation3], %s325
        %s327 = smul.u32 16, %s23
        %p328 = scmp.lt.s32.totalorder %s327, 31
        %s329 = scalar_select %p328, %s327, 31
        %s330 = smul.addr %s329, 8
        %s331 = scalar_lea.vmem %s0, %s330
        %s332 = smul.u32 16, %s23
        %vm333 = vcmask 130048
        %334 = vst.msk [vmem:[#allocation2] sm:$0xff] %vm333, 0.0
        %335 = vst.msk [vmem:[#allocation2 + $0x8] sm:$0xff] %vm333, 0.0
        %336 = vst.msk [vmem:[#allocation2 + $0x10] sm:$0xff] %vm333, 0.0
        %337 = vst.msk [vmem:[#allocation2 + $0x18] sm:$0xff] %vm333, 0.0
        %338 = vst.msk [vmem:[#allocation2 + $0x20] sm:$0xff] %vm333, 0.0
        %339 = vst.msk [vmem:[#allocation2 + $0x28] sm:$0xff] %vm333, 0.0
        %340 = vst.msk [vmem:[#allocation2 + $0x30] sm:$0xff] %vm333, 0.0
        %341 = vst.msk [vmem:[#allocation2 + $0x38] sm:$0xff] %vm333, 0.0
        %342 = vst.msk [vmem:[#allocation2 + $0x40] sm:$0xff] %vm333, 0.0
        %343 = vst.msk [vmem:[#allocation2 + $0x48] sm:$0xff] %vm333, 0.0
        %344 = vst.msk [vmem:[#allocation2 + $0x50] sm:$0xff] %vm333, 0.0
        %345 = vst.msk [vmem:[#allocation2 + $0x58] sm:$0xff] %vm333, 0.0
        %346 = vst.msk [vmem:[#allocation2 + $0x60] sm:$0xff] %vm333, 0.0
        %347 = vst.msk [vmem:[#allocation2 + $0x68] sm:$0xff] %vm333, 0.0
        %348 = vst.msk [vmem:[#allocation2 + $0x70] sm:$0xff] %vm333, 0.0
        %349 = vst.msk [vmem:[#allocation2 + $0x78] sm:$0xff] %vm333, 0.0
        %350 = vst.msk [vmem:[#allocation2 + $0x80] sm:$0xff] %vm333, 0.0
        %351 = vst.msk [vmem:[#allocation2 + $0x88] sm:$0xff] %vm333, 0.0
        %v352 = vld [vmem:[%s331] sm:$0xff]
        %v353 = vld [vmem:[%s331 + $0x8] sm:$0xff]
        %v354 = vld [vmem:[%s331 + $0x10] sm:$0xff]
        %v355 = vld [vmem:[%s331 + $0x18] sm:$0xff]
        %v356 = vld [vmem:[%s331 + $0x20] sm:$0xff]
        %v357 = vld [vmem:[%s331 + $0x28] sm:$0xff]
        %v358 = vld [vmem:[%s331 + $0x30] sm:$0xff]
        %v359 = vld [vmem:[%s331 + $0x38] sm:$0xff]
        %v360 = vld [vmem:[%s331 + $0x40] sm:$0xff]
        %v361 = vld [vmem:[%s331 + $0x48] sm:$0xff]
        %v362 = vld [vmem:[%s331 + $0x50] sm:$0xff]
        %v363 = vld [vmem:[%s331 + $0x58] sm:$0xff]
        %v364 = vld [vmem:[%s331 + $0x60] sm:$0xff]
        %v365 = vld [vmem:[%s331 + $0x68] sm:$0xff]
        %v366 = vld [vmem:[%s331 + $0x70] sm:$0xff]
        %v367 = vld [vmem:[%s331 + $0x78] sm:$0xff]
        %v368 = vlaneseq
        %v369 = vshrl.u32 %v368, 7
        %v370 = vadd.s32 %v369, 8
        %v371 = vadd.s32 %v369, 16
        %v372 = vadd.s32 %v369, 24
        %v373 = vadd.s32 %v369, 32
        %v374 = vadd.s32 %v369, 40
        %v375 = vadd.s32 %v369, 48
        %v376 = vadd.s32 %v369, 56
        %v377 = vadd.s32 %v369, 64
        %v378 = vadd.s32 %v369, 72
        %v379 = vadd.s32 %v369, 80
        %v380 = vadd.s32 %v369, 88
        %v381 = vadd.s32 %v369, 96
        %v382 = vadd.s32 %v369, 104
        %v383 = vadd.s32 %v369, 112
        %v384 = vadd.s32 %v369, 120
        %vm385 = vcmp.lt.s32.totalorder %v369, 0
        %v386 = vsub.s32 0, %v369
        %v387 = vsel %vm385, %v386, %v369
        %v388 = vshrl.u32 %v387, 4
        %v389 = vand.u32 %v387, 15
        %v390 = vsub.s32 0, %v389
        %v391 = vsel %vm385, %v390, %v389
        %vm392 = vcmp.lt.s32.totalorder %v370, 0
        %v393 = vsub.s32 0, %v370
        %v394 = vsel %vm392, %v393, %v370
        %v395 = vshrl.u32 %v394, 4
        %v396 = vand.u32 %v394, 15
        %v397 = vsub.s32 0, %v396
        %v398 = vsel %vm392, %v397, %v396
        %vm399 = vcmp.lt.s32.totalorder %v371, 0
        %v400 = vsub.s32 0, %v371
        %v401 = vsel %vm399, %v400, %v371
        %v402 = vshrl.u32 %v401, 4
        %v403 = vand.u32 %v401, 15
        %v404 = vsub.s32 0, %v403
        %v405 = vsel %vm399, %v404, %v403
        %vm406 = vcmp.lt.s32.totalorder %v372, 0
        %v407 = vsub.s32 0, %v372
        %v408 = vsel %vm406, %v407, %v372
        %v409 = vshrl.u32 %v408, 4
        %v410 = vand.u32 %v408, 15
        %v411 = vsub.s32 0, %v410
        %v412 = vsel %vm406, %v411, %v410
        %vm413 = vcmp.lt.s32.totalorder %v373, 0
        %v414 = vsub.s32 0, %v373
        %v415 = vsel %vm413, %v414, %v373
        %v416 = vshrl.u32 %v415, 4
        %v417 = vand.u32 %v415, 15
        %v418 = vsub.s32 0, %v417
        %v419 = vsel %vm413, %v418, %v417
        %vm420 = vcmp.lt.s32.totalorder %v374, 0
        %v421 = vsub.s32 0, %v374
        %v422 = vsel %vm420, %v421, %v374
        %v423 = vshrl.u32 %v422, 4
        %v424 = vand.u32 %v422, 15
        %v425 = vsub.s32 0, %v424
        %v426 = vsel %vm420, %v425, %v424
        %vm427 = vcmp.lt.s32.totalorder %v375, 0
        %v428 = vsub.s32 0, %v375
        %v429 = vsel %vm427, %v428, %v375
        %v430 = vshrl.u32 %v429, 4
        %v431 = vand.u32 %v429, 15
        %v432 = vsub.s32 0, %v431
        %v433 = vsel %vm427, %v432, %v431
        %vm434 = vcmp.lt.s32.totalorder %v376, 0
        %v435 = vsub.s32 0, %v376
        %v436 = vsel %vm434, %v435, %v376
        %v437 = vshrl.u32 %v436, 4
        %v438 = vand.u32 %v436, 15
        %v439 = vsub.s32 0, %v438
        %v440 = vsel %vm434, %v439, %v438
        %vm441 = vcmp.lt.s32.totalorder %v377, 0
        %v442 = vsub.s32 0, %v377
        %v443 = vsel %vm441, %v442, %v377
        %v444 = vshrl.u32 %v443, 4
        %v445 = vand.u32 %v443, 15
        %v446 = vsub.s32 0, %v445
        %v447 = vsel %vm441, %v446, %v445
        %vm448 = vcmp.lt.s32.totalorder %v378, 0
        %v449 = vsub.s32 0, %v378
        %v450 = vsel %vm448, %v449, %v378
        %v451 = vshrl.u32 %v450, 4
        %v452 = vand.u32 %v450, 15
        %v453 = vsub.s32 0, %v452
        %v454 = vsel %vm448, %v453, %v452
        %vm455 = vcmp.lt.s32.totalorder %v379, 0
        %v456 = vsub.s32 0, %v379
        %v457 = vsel %vm455, %v456, %v379
        %v458 = vshrl.u32 %v457, 4
        %v459 = vand.u32 %v457, 15
        %v460 = vsub.s32 0, %v459
        %v461 = vsel %vm455, %v460, %v459
        %vm462 = vcmp.lt.s32.totalorder %v380, 0
        %v463 = vsub.s32 0, %v380
        %v464 = vsel %vm462, %v463, %v380
        %v465 = vshrl.u32 %v464, 4
        %v466 = vand.u32 %v464, 15
        %v467 = vsub.s32 0, %v466
        %v468 = vsel %vm462, %v467, %v466
        %vm469 = vcmp.lt.s32.totalorder %v381, 0
        %v470 = vsub.s32 0, %v381
        %v471 = vsel %vm469, %v470, %v381
        %v472 = vshrl.u32 %v471, 4
        %v473 = vand.u32 %v471, 15
        %v474 = vsub.s32 0, %v473
        %v475 = vsel %vm469, %v474, %v473
        %vm476 = vcmp.lt.s32.totalorder %v382, 0
        %v477 = vsub.s32 0, %v382
        %v478 = vsel %vm476, %v477, %v382
        %v479 = vshrl.u32 %v478, 4
        %v480 = vand.u32 %v478, 15
        %v481 = vsub.s32 0, %v480
        %v482 = vsel %vm476, %v481, %v480
        %vm483 = vcmp.lt.s32.totalorder %v383, 0
        %v484 = vsub.s32 0, %v383
        %v485 = vsel %vm483, %v484, %v383
        %v486 = vshrl.u32 %v485, 4
        %v487 = vand.u32 %v485, 15
        %v488 = vsub.s32 0, %v487
        %v489 = vsel %vm483, %v488, %v487
        %vm490 = vcmp.lt.s32.totalorder %v384, 0
        %v491 = vsub.s32 0, %v384
        %v492 = vsel %vm490, %v491, %v384
        %v493 = vshrl.u32 %v492, 4
        %v494 = vand.u32 %v492, 15
        %v495 = vsub.s32 0, %v494
        %v496 = vsel %vm490, %v495, %v494
        %vm497 = vcmp.ne.s32.totalorder %v391, 0
        %vm498 = vcmp.ne.s32.totalorder %v398, 0
        %vm499 = vcmp.ne.s32.totalorder %v405, 0
        %vm500 = vcmp.ne.s32.totalorder %v412, 0
        %vm501 = vcmp.ne.s32.totalorder %v419, 0
        %vm502 = vcmp.ne.s32.totalorder %v426, 0
        %vm503 = vcmp.ne.s32.totalorder %v433, 0
        %vm504 = vcmp.ne.s32.totalorder %v440, 0
        %vm505 = vcmp.ne.s32.totalorder %v447, 0
        %vm506 = vcmp.ne.s32.totalorder %v454, 0
        %vm507 = vcmp.ne.s32.totalorder %v461, 0
        %vm508 = vcmp.ne.s32.totalorder %v468, 0
        %vm509 = vcmp.ne.s32.totalorder %v475, 0
        %vm510 = vcmp.ne.s32.totalorder %v482, 0
        %vm511 = vcmp.ne.s32.totalorder %v489, 0
        %vm512 = vcmp.ne.s32.totalorder %v496, 0
        %vm513 = vcmp.lt.s32.totalorder %v391, 0
        %vm514 = vcmp.lt.s32.totalorder %v398, 0
        %vm515 = vcmp.lt.s32.totalorder %v405, 0
        %vm516 = vcmp.lt.s32.totalorder %v412, 0
        %vm517 = vcmp.lt.s32.totalorder %v419, 0
        %vm518 = vcmp.lt.s32.totalorder %v426, 0
        %vm519 = vcmp.lt.s32.totalorder %v433, 0
        %vm520 = vcmp.lt.s32.totalorder %v440, 0
        %vm521 = vcmp.lt.s32.totalorder %v447, 0
        %vm522 = vcmp.lt.s32.totalorder %v454, 0
        %vm523 = vcmp.lt.s32.totalorder %v461, 0
        %vm524 = vcmp.lt.s32.totalorder %v468, 0
        %vm525 = vcmp.lt.s32.totalorder %v475, 0
        %vm526 = vcmp.lt.s32.totalorder %v482, 0
        %vm527 = vcmp.lt.s32.totalorder %v489, 0
        %vm528 = vcmp.lt.s32.totalorder %v496, 0
        %vm529 = vmand %vm513, %vm497
        %vm530 = vmand %vm514, %vm498
        %vm531 = vmand %vm515, %vm499
        %vm532 = vmand %vm516, %vm500
        %vm533 = vmand %vm517, %vm501
        %vm534 = vmand %vm518, %vm502
        %vm535 = vmand %vm519, %vm503
        %vm536 = vmand %vm520, %vm504
        %vm537 = vmand %vm521, %vm505
        %vm538 = vmand %vm522, %vm506
        %vm539 = vmand %vm523, %vm507
        %vm540 = vmand %vm524, %vm508
        %vm541 = vmand %vm525, %vm509
        %vm542 = vmand %vm526, %vm510
        %vm543 = vmand %vm527, %vm511
        %vm544 = vmand %vm528, %vm512
        %v545 = vadd.s32 %v391, 16
        %v546 = vadd.s32 %v398, 16
        %v547 = vadd.s32 %v405, 16
        %v548 = vadd.s32 %v412, 16
        %v549 = vadd.s32 %v419, 16
        %v550 = vadd.s32 %v426, 16
        %v551 = vadd.s32 %v433, 16
        %v552 = vadd.s32 %v440, 16
        %v553 = vadd.s32 %v447, 16
        %v554 = vadd.s32 %v454, 16
        %v555 = vadd.s32 %v461, 16
        %v556 = vadd.s32 %v468, 16
        %v557 = vadd.s32 %v475, 16
        %v558 = vadd.s32 %v482, 16
        %v559 = vadd.s32 %v489, 16
        %v560 = vadd.s32 %v496, 16
        %v561 = vsel %vm529, %v545, %v391
        %v562 = vsel %vm530, %v546, %v398
        %v563 = vsel %vm531, %v547, %v405
        %v564 = vsel %vm532, %v548, %v412
        %v565 = vsel %vm533, %v549, %v419
        %v566 = vsel %vm534, %v550, %v426
        %v567 = vsel %vm535, %v551, %v433
        %v568 = vsel %vm536, %v552, %v440
        %v569 = vsel %vm537, %v553, %v447
        %v570 = vsel %vm538, %v554, %v454
        %v571 = vsel %vm539, %v555, %v461
        %v572 = vsel %vm540, %v556, %v468
        %v573 = vsel %vm541, %v557, %v475
        %v574 = vsel %vm542, %v558, %v482
        %v575 = vsel %vm543, %v559, %v489
        %v576 = vsel %vm544, %v560, %v496
        %vm577 = vcmp.ne.s32.totalorder %v561, 0
        %vm578 = vcmp.ne.s32.totalorder %v562, 0
        %vm579 = vcmp.ne.s32.totalorder %v563, 0
        %vm580 = vcmp.ne.s32.totalorder %v564, 0
        %vm581 = vcmp.ne.s32.totalorder %v565, 0
        %vm582 = vcmp.ne.s32.totalorder %v566, 0
        %vm583 = vcmp.ne.s32.totalorder %v567, 0
        %vm584 = vcmp.ne.s32.totalorder %v568, 0
        %vm585 = vcmp.ne.s32.totalorder %v569, 0
        %vm586 = vcmp.ne.s32.totalorder %v570, 0
        %vm587 = vcmp.ne.s32.totalorder %v571, 0
        %vm588 = vcmp.ne.s32.totalorder %v572, 0
        %vm589 = vcmp.ne.s32.totalorder %v573, 0
        %vm590 = vcmp.ne.s32.totalorder %v574, 0
        %vm591 = vcmp.ne.s32.totalorder %v575, 0
        %vm592 = vcmp.ne.s32.totalorder %v576, 0
        %v593 = vsel %vm577, 1, 0
        %v594 = vsel %vm578, 1, 0
        %v595 = vsel %vm579, 1, 0
        %v596 = vsel %vm580, 1, 0
        %v597 = vsel %vm581, 1, 0
        %v598 = vsel %vm582, 1, 0
        %v599 = vsel %vm583, 1, 0
        %v600 = vsel %vm584, 1, 0
        %v601 = vsel %vm585, 1, 0
        %v602 = vsel %vm586, 1, 0
        %v603 = vsel %vm587, 1, 0
        %v604 = vsel %vm588, 1, 0
        %v605 = vsel %vm589, 1, 0
        %v606 = vsel %vm590, 1, 0
        %v607 = vsel %vm591, 1, 0
        %v608 = vsel %vm592, 1, 0
        %v609 = vcvt.s32.f32 %v593
        %v610 = vcvt.s32.f32 %v594
        %v611 = vcvt.s32.f32 %v595
        %v612 = vcvt.s32.f32 %v596
        %v613 = vcvt.s32.f32 %v597
        %v614 = vcvt.s32.f32 %v598
        %v615 = vcvt.s32.f32 %v599
        %v616 = vcvt.s32.f32 %v600
        %v617 = vcvt.s32.f32 %v601
        %v618 = vcvt.s32.f32 %v602
        %v619 = vcvt.s32.f32 %v603
        %v620 = vcvt.s32.f32 %v604
        %v621 = vcvt.s32.f32 %v605
        %v622 = vcvt.s32.f32 %v606
        %v623 = vcvt.s32.f32 %v607
        %v624 = vcvt.s32.f32 %v608
        %vm625 = vcmp.ne.s32.totalorder %v561, 15
        %vm626 = vcmp.ne.s32.totalorder %v562, 15
        %vm627 = vcmp.ne.s32.totalorder %v563, 15
        %vm628 = vcmp.ne.s32.totalorder %v564, 15
        %vm629 = vcmp.ne.s32.totalorder %v565, 15
        %vm630 = vcmp.ne.s32.totalorder %v566, 15
        %vm631 = vcmp.ne.s32.totalorder %v567, 15
        %vm632 = vcmp.ne.s32.totalorder %v568, 15
        %vm633 = vcmp.ne.s32.totalorder %v569, 15
        %vm634 = vcmp.ne.s32.totalorder %v570, 15
        %vm635 = vcmp.ne.s32.totalorder %v571, 15
        %vm636 = vcmp.ne.s32.totalorder %v572, 15
        %vm637 = vcmp.ne.s32.totalorder %v573, 15
        %vm638 = vcmp.ne.s32.totalorder %v574, 15
        %vm639 = vcmp.ne.s32.totalorder %v575, 15
        %vm640 = vcmp.ne.s32.totalorder %v576, 15
        %v641 = vsel %vm625, 1, 0
        %v642 = vsel %vm626, 1, 0
        %v643 = vsel %vm627, 1, 0
        %v644 = vsel %vm628, 1, 0
        %v645 = vsel %vm629, 1, 0
        %v646 = vsel %vm630, 1, 0
        %v647 = vsel %vm631, 1, 0
        %v648 = vsel %vm632, 1, 0
        %v649 = vsel %vm633, 1, 0
        %v650 = vsel %vm634, 1, 0
        %v651 = vsel %vm635, 1, 0
        %v652 = vsel %vm636, 1, 0
        %v653 = vsel %vm637, 1, 0
        %v654 = vsel %vm638, 1, 0
        %v655 = vsel %vm639, 1, 0
        %v656 = vsel %vm640, 1, 0
        %v657 = vcvt.s32.f32 %v641
        %v658 = vcvt.s32.f32 %v642
        %v659 = vcvt.s32.f32 %v643
        %v660 = vcvt.s32.f32 %v644
        %v661 = vcvt.s32.f32 %v645
        %v662 = vcvt.s32.f32 %v646
        %v663 = vcvt.s32.f32 %v647
        %v664 = vcvt.s32.f32 %v648
        %v665 = vcvt.s32.f32 %v649
        %v666 = vcvt.s32.f32 %v650
        %v667 = vcvt.s32.f32 %v651
        %v668 = vcvt.s32.f32 %v652
        %v669 = vcvt.s32.f32 %v653
        %v670 = vcvt.s32.f32 %v654
        %v671 = vcvt.s32.f32 %v655
        %v672 = vcvt.s32.f32 %v656
        %673 = vst.msk [vmem:[#allocation2 + $0x8] sm:$0xff] %vm333, %v352
        %674 = vst.msk [vmem:[#allocation2 + $0x10] sm:$0xff] %vm333, %v353
        %675 = vst.msk [vmem:[#allocation2 + $0x18] sm:$0xff] %vm333, %v354
        %676 = vst.msk [vmem:[#allocation2 + $0x20] sm:$0xff] %vm333, %v355
        %677 = vst.msk [vmem:[#allocation2 + $0x28] sm:$0xff] %vm333, %v356
        %678 = vst.msk [vmem:[#allocation2 + $0x30] sm:$0xff] %vm333, %v357
        %679 = vst.msk [vmem:[#allocation2 + $0x38] sm:$0xff] %vm333, %v358
        %680 = vst.msk [vmem:[#allocation2 + $0x40] sm:$0xff] %vm333, %v359
        %681 = vst.msk [vmem:[#allocation2 + $0x48] sm:$0xff] %vm333, %v360
        %682 = vst.msk [vmem:[#allocation2 + $0x50] sm:$0xff] %vm333, %v361
        %683 = vst.msk [vmem:[#allocation2 + $0x58] sm:$0xff] %vm333, %v362
        %684 = vst.msk [vmem:[#allocation2 + $0x60] sm:$0xff] %vm333, %v363
        %685 = vst.msk [vmem:[#allocation2 + $0x68] sm:$0xff] %vm333, %v364
        %686 = vst.msk [vmem:[#allocation2 + $0x70] sm:$0xff] %vm333, %v365
        %687 = vst.msk [vmem:[#allocation2 + $0x78] sm:$0xff] %vm333, %v366
        %688 = vst.msk [vmem:[#allocation2 + $0x80] sm:$0xff] %vm333, %v367
        %v689 = vld [vmem:[#allocation2 + $0x7] sm:$0xff]
        %v690 = vld [vmem:[#allocation2 + $0xf] sm:$0xff]
        %v691 = vld [vmem:[#allocation2 + $0x17] sm:$0xff]
        %v692 = vld [vmem:[#allocation2 + $0x1f] sm:$0xff]
        %v693 = vld [vmem:[#allocation2 + $0x27] sm:$0xff]
        %v694 = vld [vmem:[#allocation2 + $0x2f] sm:$0xff]
        %v695 = vld [vmem:[#allocation2 + $0x37] sm:$0xff]
        %v696 = vld [vmem:[#allocation2 + $0x3f] sm:$0xff]
        %v697 = vld [vmem:[#allocation2 + $0x47] sm:$0xff]
        %v698 = vld [vmem:[#allocation2 + $0x4f] sm:$0xff]
        %v699 = vld [vmem:[#allocation2 + $0x57] sm:$0xff]
        %v700 = vld [vmem:[#allocation2 + $0x5f] sm:$0xff]
        %v701 = vld [vmem:[#allocation2 + $0x67] sm:$0xff]
        %v702 = vld [vmem:[#allocation2 + $0x6f] sm:$0xff]
        %v703 = vld [vmem:[#allocation2 + $0x77] sm:$0xff]
        %v704 = vld [vmem:[#allocation2 + $0x7f] sm:$0xff]
        %v705 = vmul.f32 %v689, %v609
        %v706 = vmul.f32 %v690, %v610
        %v707 = vmul.f32 %v691, %v611
        %v708 = vmul.f32 %v692, %v612
        %v709 = vmul.f32 %v693, %v613
        %v710 = vmul.f32 %v694, %v614
        %v711 = vmul.f32 %v695, %v615
        %v712 = vmul.f32 %v696, %v616
        %v713 = vmul.f32 %v697, %v617
        %v714 = vmul.f32 %v698, %v618
        %v715 = vmul.f32 %v699, %v619
        %v716 = vmul.f32 %v700, %v620
        %v717 = vmul.f32 %v701, %v621
        %v718 = vmul.f32 %v702, %v622
        %v719 = vmul.f32 %v703, %v623
        %v720 = vmul.f32 %v704, %v624
        %v721 = vld [vmem:[#allocation2 + $0x9] sm:$0xff]
        %v722 = vld [vmem:[#allocation2 + $0x11] sm:$0xff]
        %v723 = vld [vmem:[#allocation2 + $0x19] sm:$0xff]
        %v724 = vld [vmem:[#allocation2 + $0x21] sm:$0xff]
        %v725 = vld [vmem:[#allocation2 + $0x29] sm:$0xff]
        %v726 = vld [vmem:[#allocation2 + $0x31] sm:$0xff]
        %v727 = vld [vmem:[#allocation2 + $0x39] sm:$0xff]
        %v728 = vld [vmem:[#allocation2 + $0x41] sm:$0xff]
        %v729 = vld [vmem:[#allocation2 + $0x49] sm:$0xff]
        %v730 = vld [vmem:[#allocation2 + $0x51] sm:$0xff]
        %v731 = vld [vmem:[#allocation2 + $0x59] sm:$0xff]
        %v732 = vld [vmem:[#allocation2 + $0x61] sm:$0xff]
        %v733 = vld [vmem:[#allocation2 + $0x69] sm:$0xff]
        %v734 = vld [vmem:[#allocation2 + $0x71] sm:$0xff]
        %v735 = vld [vmem:[#allocation2 + $0x79] sm:$0xff]
        %v736 = vld [vmem:[#allocation2 + $0x81] sm:$0xff]
        %v737 = vmul.f32 %v721, %v657
        %v738 = vmul.f32 %v722, %v658
        %v739 = vmul.f32 %v723, %v659
        %v740 = vmul.f32 %v724, %v660
        %v741 = vmul.f32 %v725, %v661
        %v742 = vmul.f32 %v726, %v662
        %v743 = vmul.f32 %v727, %v663
        %v744 = vmul.f32 %v728, %v664
        %v745 = vmul.f32 %v729, %v665
        %v746 = vmul.f32 %v730, %v666
        %v747 = vmul.f32 %v731, %v667
        %v748 = vmul.f32 %v732, %v668
        %v749 = vmul.f32 %v733, %v669
        %v750 = vmul.f32 %v734, %v670
        %v751 = vmul.f32 %v735, %v671
        %v752 = vmul.f32 %v736, %v672
        %v753 = vld [vmem:[%s1] sm:$0xff]
        %v754 = vld [vmem:[%s1 + $0x8] sm:$0xff]
        %v755 = vld [vmem:[%s1 + $0x10] sm:$0xff]
        %v756 = vld [vmem:[%s1 + $0x18] sm:$0xff]
        %v758 = vsel %vm333, %v352, 0
        %v761 = vsel %vm333, %v353, 0
        %v764 = vsel %vm333, %v354, 0
        %v767 = vsel %vm333, %v355, 0
        %v770 = vsel %vm333, %v356, 0
        %v773 = vsel %vm333, %v357, 0
        %v776 = vsel %vm333, %v358, 0
        %v779 = vsel %vm333, %v359, 0
        %v782 = vsel %vm333, %v360, 0
        %v785 = vsel %vm333, %v361, 0
        %v788 = vsel %vm333, %v362, 0
        %v791 = vsel %vm333, %v363, 0
        %v794 = vsel %vm333, %v364, 0
        %v797 = vsel %vm333, %v365, 0
        %v800 = vsel %vm333, %v366, 0
        %v803 = vsel %vm333, %v367, 0
        %805 = vmatprep.subr.mxu0 0.0
        %806 = vmatpush1.msra.mxu0 %v755
        %807 = vmatprep.subr.mxu0 0.0
        %808 = vmatpush1.msra.mxu0 %v756
        %809 = vmatprep.subr.mxu0 0.0
        %810 = vmatpush1.msra.mxu0 0.0
        %811 = vmatprep.subr.mxu0 0.0
        %812 = vmatpush1.msra.mxu0 0.0
        %813 = vmatprep.subr.mxu0 0.0
        %814 = vmatpush1.msra.mxu0 0.0
        %815 = vmatprep.subr.mxu0 0.0
        %816 = vmatpush1.msra.mxu0 0.0
        %817 = vmatprep.subr.mxu0 0.0
        %818 = vmatpush1.msra.mxu0 0.0
        %819 = vmatprep.subr.mxu0 0.0
        %820 = vmatpush1.msra.mxu0 0.0
        %821 = vmatprep.subr.mxu0 0.0
        %822 = vmatpush1.msra.mxu0 0.0
        %823 = vmatprep.subr.mxu0 0.0
        %824 = vmatpush1.msra.mxu0 0.0
        %825 = vmatprep.subr.mxu0 0.0
        %826 = vmatpush1.msra.mxu0 0.0
        %827 = vmatprep.subr.mxu0 0.0
        %828 = vmatpush1.msra.mxu0 0.0
        %829 = vmatprep.subr.mxu0 0.0
        %830 = vmatpush1.msra.mxu0 0.0
        %831 = vmatprep.subr.mxu0 0.0
        %832 = vmatpush1.msra.mxu0 0.0
        %833 = vmatprep.subr.mxu0 0.0
        %834 = vmatpush1.msra.mxu0 0.0
        %835 = vmatprep.subr.mxu0 0.0
        %836 = vmatpush1.msra.mxu0 0.0
        %837 = vmatprep.subr.mxu0 0.0
        %838 = vmatpush1.msra.mxu0 0.0
        %839 = vmatprep.subr.mxu0 0.0
        %840 = vmatpush1.msra.mxu0 0.0
        %841 = vmatprep.subr.mxu0 0.0
        %842 = vmatpush1.msra.mxu0 0.0
        %843 = vmatprep.subr.mxu0 0.0
        %844 = vmatpush1.msra.mxu0 0.0
        %845 = vmatprep.subr.mxu0 0.0
        %846 = vmatpush1.msra.mxu0 0.0
        %847 = vmatprep.subr.mxu0 0.0
        %848 = vmatpush1.msra.mxu0 0.0
        %849 = vmatprep.subr.mxu0 0.0
        %850 = vmatpush1.msra.mxu0 0.0
        %851 = vmatprep.subr.mxu0 0.0
        %852 = vmatpush1.msra.mxu0 0.0
        %853 = vmatprep.subr.mxu0 0.0
        %854 = vmatpush1.msra.mxu0 0.0
        %855 = vmatprep.subr.mxu0 0.0
        %856 = vmatpush1.msra.mxu0 0.0
        %857 = vmatprep.subr.mxu0 0.0
        %858 = vmatpush1.msra.mxu0 0.0
        %859 = vmatprep.subr.mxu0 0.0
        %860 = vmatpush1.msra.mxu0 0.0
        %861 = vmatprep.subr.mxu0 0.0
        %862 = vmatpush1.msra.mxu0 0.0
        %863 = vmatprep.subr.mxu0 0.0
        %864 = vmatpush1.msra.mxu0 0.0
        %865 = vmatprep.subr.mxu0 0.0
        %866 = vmatpush1.msra.mxu0 0.0
        %867 = vmatprep.subr.mxu0 0.0
        %868 = vmatpush1.msra.mxu0 0.0
        %869 = vmatprep.mubr.f32.mxu0 0.0
        %870 = vmatmul.mubr.f32.gmra.mrb[0].mxu0 %v758
        %v871 = vpop.f32.mrb[0].mxu0
        %v872 = vadd.f32 0.0, %v871
        %v873 = vpop.f32.mrb[0].mxu0
        %874 = vmatprep.mubr.f32.mxu0 0.0
        %875 = vmatmul.mubr.f32.gmra.mrb[0].mxu0 %v761
        %v876 = vpop.f32.mrb[0].mxu0
        %v877 = vadd.f32 0.0, %v876
        %v878 = vpop.f32.mrb[0].mxu0
        %879 = vmatprep.mubr.f32.mxu0 0.0
        %880 = vmatmul.mubr.f32.gmra.mrb[0].mxu0 %v764
        %v881 = vpop.f32.mrb[0].mxu0
        %v882 = vadd.f32 0.0, %v881
        %v883 = vpop.f32.mrb[0].mxu0
        %884 = vmatprep.mubr.f32.mxu0 0.0
        %885 = vmatmul.mubr.f32.gmra.mrb[0].mxu0 %v767
        %v886 = vpop.f32.mrb[0].mxu0
        %v887 = vadd.f32 0.0, %v886
        %v888 = vpop.f32.mrb[0].mxu0
        %889 = vmatprep.mubr.f32.mxu0 0.0
        %890 = vmatmul.mubr.f32.gmra.mrb[0].mxu0 %v770
        %v891 = vpop.f32.mrb[0].mxu0
        %v892 = vadd.f32 0.0, %v891
        %v893 = vpop.f32.mrb[0].mxu0
        %894 = vmatprep.mubr.f32.mxu0 0.0
        %895 = vmatmul.mubr.f32.gmra.mrb[0].mxu0 %v773
        %v896 = vpop.f32.mrb[0].mxu0
        %v897 = vadd.f32 0.0, %v896
        %v898 = vpop.f32.mrb[0].mxu0
        %899 = vmatprep.mubr.f32.mxu0 0.0
        %900 = vmatmul.mubr.f32.gmra.mrb[0].mxu0 %v776
        %v901 = vpop.f32.mrb[0].mxu0
        %v902 = vadd.f32 0.0, %v901
        %v903 = vpop.f32.mrb[0].mxu0
        %904 = vmatprep.mubr.f32.mxu0 0.0
        %905 = vmatmul.mubr.f32.gmra.mrb[0].mxu0 %v779
        %v906 = vpop.f32.mrb[0].mxu0
        %v907 = vadd.f32 0.0, %v906
        %v908 = vpop.f32.mrb[0].mxu0
        %909 = vmatprep.mubr.f32.mxu0 0.0
        %910 = vmatmul.mubr.f32.gmra.mrb[0].mxu0 %v782
        %v911 = vpop.f32.mrb[0].mxu0
        %v912 = vadd.f32 0.0, %v911
        %v913 = vpop.f32.mrb[0].mxu0
        %914 = vmatprep.mubr.f32.mxu0 0.0
        %915 = vmatmul.mubr.f32.gmra.mrb[0].mxu0 %v785
        %v916 = vpop.f32.mrb[0].mxu0
        %v917 = vadd.f32 0.0, %v916
        %v918 = vpop.f32.mrb[0].mxu0
        %919 = vmatprep.mubr.f32.mxu0 0.0
        %920 = vmatmul.mubr.f32.gmra.mrb[0].mxu0 %v788
        %v921 = vpop.f32.mrb[0].mxu0
        %v922 = vadd.f32 0.0, %v921
        %v923 = vpop.f32.mrb[0].mxu0
        %924 = vmatprep.mubr.f32.mxu0 0.0
        %925 = vmatmul.mubr.f32.gmra.mrb[0].mxu0 %v791
        %v926 = vpop.f32.mrb[0].mxu0
        %v927 = vadd.f32 0.0, %v926
        %v928 = vpop.f32.mrb[0].mxu0
        %929 = vmatprep.mubr.f32.mxu0 0.0
        %930 = vmatmul.mubr.f32.gmra.mrb[0].mxu0 %v794
        %v931 = vpop.f32.mrb[0].mxu0
        %v932 = vadd.f32 0.0, %v931
        %v933 = vpop.f32.mrb[0].mxu0
        %934 = vmatprep.mubr.f32.mxu0 0.0
        %935 = vmatmul.mubr.f32.gmra.mrb[0].mxu0 %v797
        %v936 = vpop.f32.mrb[0].mxu0
        %v937 = vadd.f32 0.0, %v936
        %v938 = vpop.f32.mrb[0].mxu0
        %939 = vmatprep.mubr.f32.mxu0 0.0
        %940 = vmatmul.mubr.f32.gmra.mrb[0].mxu0 %v800
        %v941 = vpop.f32.mrb[0].mxu0
        %v942 = vadd.f32 0.0, %v941
        %v943 = vpop.f32.mrb[0].mxu0
        %944 = vmatprep.mubr.f32.mxu0 0.0
        %945 = vmatmul.mubr.f32.gmra.mrb[0].mxu0 %v803
        %v946 = vpop.f32.mrb[0].mxu0
        %v947 = vadd.f32 0.0, %v946
        %v948 = vpop.f32.mrb[0].mxu0
        %949 = vdwg.mxu0
        %v951 = vsel %vm333, %v705, 0
        %v954 = vsel %vm333, %v706, 0
        %v957 = vsel %vm333, %v707, 0
        %v960 = vsel %vm333, %v708, 0
        %v963 = vsel %vm333, %v709, 0
        %v966 = vsel %vm333, %v710, 0
        %v969 = vsel %vm333, %v711, 0
        %v972 = vsel %vm333, %v712, 0
        %v975 = vsel %vm333, %v713, 0
        %v978 = vsel %vm333, %v714, 0
        %v981 = vsel %vm333, %v715, 0
        %v984 = vsel %vm333, %v716, 0
        %v987 = vsel %vm333, %v717, 0
        %v990 = vsel %vm333, %v718, 0
        %v993 = vsel %vm333, %v719, 0
        %v996 = vsel %vm333, %v720, 0
        %998 = vmatprep.subr.mxu0 0.0
        %999 = vmatpush1.msra.mxu0 %v753
        %1000 = vmatprep.subr.mxu0 0.0
        %1001 = vmatpush1.msra.mxu0 %v754
        %1002 = vmatprep.subr.mxu0 0.0
        %1003 = vmatpush1.msra.mxu0 0.0
        %1004 = vmatprep.subr.mxu0 0.0
        %1005 = vmatpush1.msra.mxu0 0.0
        %1006 = vmatprep.subr.mxu0 0.0
        %1007 = vmatpush1.msra.mxu0 0.0
        %1008 = vmatprep.subr.mxu0 0.0
        %1009 = vmatpush1.msra.mxu0 0.0
        %1010 = vmatprep.subr.mxu0 0.0
        %1011 = vmatpush1.msra.mxu0 0.0
        %1012 = vmatprep.subr.mxu0 0.0
        %1013 = vmatpush1.msra.mxu0 0.0
        %1014 = vmatprep.subr.mxu0 0.0
        %1015 = vmatpush1.msra.mxu0 0.0
        %1016 = vmatprep.subr.mxu0 0.0
        %1017 = vmatpush1.msra.mxu0 0.0
        %1018 = vmatprep.subr.mxu0 0.0
        %1019 = vmatpush1.msra.mxu0 0.0
        %1020 = vmatprep.subr.mxu0 0.0
        %1021 = vmatpush1.msra.mxu0 0.0
        %1022 = vmatprep.subr.mxu0 0.0
        %1023 = vmatpush1.msra.mxu0 0.0
        %1024 = vmatprep.subr.mxu0 0.0
        %1025 = vmatpush1.msra.mxu0 0.0
        %1026 = vmatprep.subr.mxu0 0.0
        %1027 = vmatpush1.msra.mxu0 0.0
        %1028 = vmatprep.subr.mxu0 0.0
        %1029 = vmatpush1.msra.mxu0 0.0
        %1030 = vmatprep.subr.mxu0 0.0
        %1031 = vmatpush1.msra.mxu0 0.0
        %1032 = vmatprep.subr.mxu0 0.0
        %1033 = vmatpush1.msra.mxu0 0.0
        %1034 = vmatprep.subr.mxu0 0.0
        %1035 = vmatpush1.msra.mxu0 0.0
        %1036 = vmatprep.subr.mxu0 0.0
        %1037 = vmatpush1.msra.mxu0 0.0
        %1038 = vmatprep.subr.mxu0 0.0
        %1039 = vmatpush1.msra.mxu0 0.0
        %1040 = vmatprep.subr.mxu0 0.0
        %1041 = vmatpush1.msra.mxu0 0.0
        %1042 = vmatprep.subr.mxu0 0.0
        %1043 = vmatpush1.msra.mxu0 0.0
        %1044 = vmatprep.subr.mxu0 0.0
        %1045 = vmatpush1.msra.mxu0 0.0
        %1046 = vmatprep.subr.mxu0 0.0
        %1047 = vmatpush1.msra.mxu0 0.0
        %1048 = vmatprep.subr.mxu0 0.0
        %1049 = vmatpush1.msra.mxu0 0.0
        %1050 = vmatprep.subr.mxu0 0.0
        %1051 = vmatpush1.msra.mxu0 0.0
        %1052 = vmatprep.subr.mxu0 0.0
        %1053 = vmatpush1.msra.mxu0 0.0
        %1054 = vmatprep.subr.mxu0 0.0
        %1055 = vmatpush1.msra.mxu0 0.0
        %1056 = vmatprep.subr.mxu0 0.0
        %1057 = vmatpush1.msra.mxu0 0.0
        %1058 = vmatprep.subr.mxu0 0.0
        %1059 = vmatpush1.msra.mxu0 0.0
        %1060 = vmatprep.subr.mxu0 0.0
        %1061 = vmatpush1.msra.mxu0 0.0
        %1062 = vmatprep.mubr.f32.mxu0 0.0
        %1063 = vmatmul.mubr.f32.gmra.mrb[0].mxu0 %v951
        %v1064 = vpop.f32.mrb[0].mxu0
        %v1065 = vadd.f32 %v872, %v1064
        %v1066 = vpop.f32.mrb[0].mxu0
        %1067 = vmatprep.mubr.f32.mxu0 0.0
        %1068 = vmatmul.mubr.f32.gmra.mrb[0].mxu0 %v954
        %v1069 = vpop.f32.mrb[0].mxu0
        %v1070 = vadd.f32 %v877, %v1069
        %v1071 = vpop.f32.mrb[0].mxu0
        %1072 = vmatprep.mubr.f32.mxu0 0.0
        %1073 = vmatmul.mubr.f32.gmra.mrb[0].mxu0 %v957
        %v1074 = vpop.f32.mrb[0].mxu0
        %v1075 = vadd.f32 %v882, %v1074
        %v1076 = vpop.f32.mrb[0].mxu0
        %1077 = vmatprep.mubr.f32.mxu0 0.0
        %1078 = vmatmul.mubr.f32.gmra.mrb[0].mxu0 %v960
        %v1079 = vpop.f32.mrb[0].mxu0
        %v1080 = vadd.f32 %v887, %v1079
        %v1081 = vpop.f32.mrb[0].mxu0
        %1082 = vmatprep.mubr.f32.mxu0 0.0
        %1083 = vmatmul.mubr.f32.gmra.mrb[0].mxu0 %v963
        %v1084 = vpop.f32.mrb[0].mxu0
        %v1085 = vadd.f32 %v892, %v1084
        %v1086 = vpop.f32.mrb[0].mxu0
        %1087 = vmatprep.mubr.f32.mxu0 0.0
        %1088 = vmatmul.mubr.f32.gmra.mrb[0].mxu0 %v966
        %v1089 = vpop.f32.mrb[0].mxu0
        %v1090 = vadd.f32 %v897, %v1089
        %v1091 = vpop.f32.mrb[0].mxu0
        %1092 = vmatprep.mubr.f32.mxu0 0.0
        %1093 = vmatmul.mubr.f32.gmra.mrb[0].mxu0 %v969
        %v1094 = vpop.f32.mrb[0].mxu0
        %v1095 = vadd.f32 %v902, %v1094
        %v1096 = vpop.f32.mrb[0].mxu0
        %1097 = vmatprep.mubr.f32.mxu0 0.0
        %1098 = vmatmul.mubr.f32.gmra.mrb[0].mxu0 %v972
        %v1099 = vpop.f32.mrb[0].mxu0
        %v1100 = vadd.f32 %v907, %v1099
        %v1101 = vpop.f32.mrb[0].mxu0
        %1102 = vmatprep.mubr.f32.mxu0 0.0
        %1103 = vmatmul.mubr.f32.gmra.mrb[0].mxu0 %v975
        %v1104 = vpop.f32.mrb[0].mxu0
        %v1105 = vadd.f32 %v912, %v1104
        %v1106 = vpop.f32.mrb[0].mxu0
        %1107 = vmatprep.mubr.f32.mxu0 0.0
        %1108 = vmatmul.mubr.f32.gmra.mrb[0].mxu0 %v978
        %v1109 = vpop.f32.mrb[0].mxu0
        %v1110 = vadd.f32 %v917, %v1109
        %v1111 = vpop.f32.mrb[0].mxu0
        %1112 = vmatprep.mubr.f32.mxu0 0.0
        %1113 = vmatmul.mubr.f32.gmra.mrb[0].mxu0 %v981
        %v1114 = vpop.f32.mrb[0].mxu0
        %v1115 = vadd.f32 %v922, %v1114
        %v1116 = vpop.f32.mrb[0].mxu0
        %1117 = vmatprep.mubr.f32.mxu0 0.0
        %1118 = vmatmul.mubr.f32.gmra.mrb[0].mxu0 %v984
        %v1119 = vpop.f32.mrb[0].mxu0
        %v1120 = vadd.f32 %v927, %v1119
        %v1121 = vpop.f32.mrb[0].mxu0
        %1122 = vmatprep.mubr.f32.mxu0 0.0
        %1123 = vmatmul.mubr.f32.gmra.mrb[0].mxu0 %v987
        %v1124 = vpop.f32.mrb[0].mxu0
        %v1125 = vadd.f32 %v932, %v1124
        %v1126 = vpop.f32.mrb[0].mxu0
        %1127 = vmatprep.mubr.f32.mxu0 0.0
        %1128 = vmatmul.mubr.f32.gmra.mrb[0].mxu0 %v990
        %v1129 = vpop.f32.mrb[0].mxu0
        %v1130 = vadd.f32 %v937, %v1129
        %v1131 = vpop.f32.mrb[0].mxu0
        %1132 = vmatprep.mubr.f32.mxu0 0.0
        %1133 = vmatmul.mubr.f32.gmra.mrb[0].mxu0 %v993
        %v1134 = vpop.f32.mrb[0].mxu0
        %v1135 = vadd.f32 %v942, %v1134
        %v1136 = vpop.f32.mrb[0].mxu0
        %1137 = vmatprep.mubr.f32.mxu0 0.0
        %1138 = vmatmul.mubr.f32.gmra.mrb[0].mxu0 %v996
        %v1139 = vpop.f32.mrb[0].mxu0
        %v1140 = vadd.f32 %v947, %v1139
        %v1141 = vpop.f32.mrb[0].mxu0
        %1142 = vdwg.mxu0
        %v1143 = vld [vmem:[%s1 + $0x20] sm:$0xff]
        %v1144 = vld [vmem:[%s1 + $0x28] sm:$0xff]
        %v1146 = vsel %vm333, %v737, 0
        %v1149 = vsel %vm333, %v738, 0
        %v1152 = vsel %vm333, %v739, 0
        %v1155 = vsel %vm333, %v740, 0
        %v1158 = vsel %vm333, %v741, 0
        %v1161 = vsel %vm333, %v742, 0
        %v1164 = vsel %vm333, %v743, 0
        %v1167 = vsel %vm333, %v744, 0
        %v1170 = vsel %vm333, %v745, 0
        %v1173 = vsel %vm333, %v746, 0
        %v1176 = vsel %vm333, %v747, 0
        %v1179 = vsel %vm333, %v748, 0
        %v1182 = vsel %vm333, %v749, 0
        %v1185 = vsel %vm333, %v750, 0
        %v1188 = vsel %vm333, %v751, 0
        %v1191 = vsel %vm333, %v752, 0
        %1193 = vmatprep.subr.mxu0 0.0
        %1194 = vmatpush1.msra.mxu0 %v1143
        %1195 = vmatprep.subr.mxu0 0.0
        %1196 = vmatpush1.msra.mxu0 %v1144
        %1197 = vmatprep.subr.mxu0 0.0
        %1198 = vmatpush1.msra.mxu0 0.0
        %1199 = vmatprep.subr.mxu0 0.0
        %1200 = vmatpush1.msra.mxu0 0.0
        %1201 = vmatprep.subr.mxu0 0.0
        %1202 = vmatpush1.msra.mxu0 0.0
        %1203 = vmatprep.subr.mxu0 0.0
        %1204 = vmatpush1.msra.mxu0 0.0
        %1205 = vmatprep.subr.mxu0 0.0
        %1206 = vmatpush1.msra.mxu0 0.0
        %1207 = vmatprep.subr.mxu0 0.0
        %1208 = vmatpush1.msra.mxu0 0.0
        %1209 = vmatprep.subr.mxu0 0.0
        %1210 = vmatpush1.msra.mxu0 0.0
        %1211 = vmatprep.subr.mxu0 0.0
        %1212 = vmatpush1.msra.mxu0 0.0
        %1213 = vmatprep.subr.mxu0 0.0
        %1214 = vmatpush1.msra.mxu0 0.0
        %1215 = vmatprep.subr.mxu0 0.0
        %1216 = vmatpush1.msra.mxu0 0.0
        %1217 = vmatprep.subr.mxu0 0.0
        %1218 = vmatpush1.msra.mxu0 0.0
        %1219 = vmatprep.subr.mxu0 0.0
        %1220 = vmatpush1.msra.mxu0 0.0
        %1221 = vmatprep.subr.mxu0 0.0
        %1222 = vmatpush1.msra.mxu0 0.0
        %1223 = vmatprep.subr.mxu0 0.0
        %1224 = vmatpush1.msra.mxu0 0.0
        %1225 = vmatprep.subr.mxu0 0.0
        %1226 = vmatpush1.msra.mxu0 0.0
        %1227 = vmatprep.subr.mxu0 0.0
        %1228 = vmatpush1.msra.mxu0 0.0
        %1229 = vmatprep.subr.mxu0 0.0
        %1230 = vmatpush1.msra.mxu0 0.0
        %1231 = vmatprep.subr.mxu0 0.0
        %1232 = vmatpush1.msra.mxu0 0.0
        %1233 = vmatprep.subr.mxu0 0.0
        %1234 = vmatpush1.msra.mxu0 0.0
        %1235 = vmatprep.subr.mxu0 0.0
        %1236 = vmatpush1.msra.mxu0 0.0
        %1237 = vmatprep.subr.mxu0 0.0
        %1238 = vmatpush1.msra.mxu0 0.0
        %1239 = vmatprep.subr.mxu0 0.0
        %1240 = vmatpush1.msra.mxu0 0.0
        %1241 = vmatprep.subr.mxu0 0.0
        %1242 = vmatpush1.msra.mxu0 0.0
        %1243 = vmatprep.subr.mxu0 0.0
        %1244 = vmatpush1.msra.mxu0 0.0
        %1245 = vmatprep.subr.mxu0 0.0
        %1246 = vmatpush1.msra.mxu0 0.0
        %1247 = vmatprep.subr.mxu0 0.0
        %1248 = vmatpush1.msra.mxu0 0.0
        %1249 = vmatprep.subr.mxu0 0.0
        %1250 = vmatpush1.msra.mxu0 0.0
        %1251 = vmatprep.subr.mxu0 0.0
        %1252 = vmatpush1.msra.mxu0 0.0
        %1253 = vmatprep.subr.mxu0 0.0
        %1254 = vmatpush1.msra.mxu0 0.0
        %1255 = vmatprep.subr.mxu0 0.0
        %1256 = vmatpush1.msra.mxu0 0.0
        %1257 = vmatprep.mubr.f32.mxu0 0.0
        %1258 = vmatmul.mubr.f32.gmra.mrb[0].mxu0 %v1146
        %v1259 = vpop.f32.mrb[0].mxu0
        %v1260 = vadd.f32 0.0, %v1259
        %v1261 = vpop.f32.mrb[0].mxu0
        %1262 = vmatprep.mubr.f32.mxu0 0.0
        %1263 = vmatmul.mubr.f32.gmra.mrb[0].mxu0 %v1149
        %v1264 = vpop.f32.mrb[0].mxu0
        %v1265 = vadd.f32 0.0, %v1264
        %v1266 = vpop.f32.mrb[0].mxu0
        %1267 = vmatprep.mubr.f32.mxu0 0.0
        %1268 = vmatmul.mubr.f32.gmra.mrb[0].mxu0 %v1152
        %v1269 = vpop.f32.mrb[0].mxu0
        %v1270 = vadd.f32 0.0, %v1269
        %v1271 = vpop.f32.mrb[0].mxu0
        %1272 = vmatprep.mubr.f32.mxu0 0.0
        %1273 = vmatmul.mubr.f32.gmra.mrb[0].mxu0 %v1155
        %v1274 = vpop.f32.mrb[0].mxu0
        %v1275 = vadd.f32 0.0, %v1274
        %v1276 = vpop.f32.mrb[0].mxu0
        %1277 = vmatprep.mubr.f32.mxu0 0.0
        %1278 = vmatmul.mubr.f32.gmra.mrb[0].mxu0 %v1158
        %v1279 = vpop.f32.mrb[0].mxu0
        %v1280 = vadd.f32 0.0, %v1279
        %v1281 = vpop.f32.mrb[0].mxu0
        %1282 = vmatprep.mubr.f32.mxu0 0.0
        %1283 = vmatmul.mubr.f32.gmra.mrb[0].mxu0 %v1161
        %v1284 = vpop.f32.mrb[0].mxu0
        %v1285 = vadd.f32 0.0, %v1284
        %v1286 = vpop.f32.mrb[0].mxu0
        %1287 = vmatprep.mubr.f32.mxu0 0.0
        %1288 = vmatmul.mubr.f32.gmra.mrb[0].mxu0 %v1164
        %v1289 = vpop.f32.mrb[0].mxu0
        %v1290 = vadd.f32 0.0, %v1289
        %v1291 = vpop.f32.mrb[0].mxu0
        %1292 = vmatprep.mubr.f32.mxu0 0.0
        %1293 = vmatmul.mubr.f32.gmra.mrb[0].mxu0 %v1167
        %v1294 = vpop.f32.mrb[0].mxu0
        %v1295 = vadd.f32 0.0, %v1294
        %v1296 = vpop.f32.mrb[0].mxu0
        %1297 = vmatprep.mubr.f32.mxu0 0.0
        %1298 = vmatmul.mubr.f32.gmra.mrb[0].mxu0 %v1170
        %v1299 = vpop.f32.mrb[0].mxu0
        %v1300 = vadd.f32 0.0, %v1299
        %v1301 = vpop.f32.mrb[0].mxu0
        %1302 = vmatprep.mubr.f32.mxu0 0.0
        %1303 = vmatmul.mubr.f32.gmra.mrb[0].mxu0 %v1173
        %v1304 = vpop.f32.mrb[0].mxu0
        %v1305 = vadd.f32 0.0, %v1304
        %v1306 = vpop.f32.mrb[0].mxu0
        %1307 = vmatprep.mubr.f32.mxu0 0.0
        %1308 = vmatmul.mubr.f32.gmra.mrb[0].mxu0 %v1176
        %v1309 = vpop.f32.mrb[0].mxu0
        %v1310 = vadd.f32 0.0, %v1309
        %v1311 = vpop.f32.mrb[0].mxu0
        %1312 = vmatprep.mubr.f32.mxu0 0.0
        %1313 = vmatmul.mubr.f32.gmra.mrb[0].mxu0 %v1179
        %v1314 = vpop.f32.mrb[0].mxu0
        %v1315 = vadd.f32 0.0, %v1314
        %v1316 = vpop.f32.mrb[0].mxu0
        %1317 = vmatprep.mubr.f32.mxu0 0.0
        %1318 = vmatmul.mubr.f32.gmra.mrb[0].mxu0 %v1182
        %v1319 = vpop.f32.mrb[0].mxu0
        %v1320 = vadd.f32 0.0, %v1319
        %v1321 = vpop.f32.mrb[0].mxu0
        %1322 = vmatprep.mubr.f32.mxu0 0.0
        %1323 = vmatmul.mubr.f32.gmra.mrb[0].mxu0 %v1185
        %v1324 = vpop.f32.mrb[0].mxu0
        %v1325 = vadd.f32 0.0, %v1324
        %v1326 = vpop.f32.mrb[0].mxu0
        %1327 = vmatprep.mubr.f32.mxu0 0.0
        %1328 = vmatmul.mubr.f32.gmra.mrb[0].mxu0 %v1188
        %v1329 = vpop.f32.mrb[0].mxu0
        %v1330 = vadd.f32 0.0, %v1329
        %v1331 = vpop.f32.mrb[0].mxu0
        %1332 = vmatprep.mubr.f32.mxu0 0.0
        %1333 = vmatmul.mubr.f32.gmra.mrb[0].mxu0 %v1191
        %v1334 = vpop.f32.mrb[0].mxu0
        %v1335 = vadd.f32 0.0, %v1334
        %v1336 = vpop.f32.mrb[0].mxu0
        %1337 = vdwg.mxu0
        %v1338 = vadd.f32 %v1065, %v1260
        %v1339 = vadd.f32 %v1070, %v1265
        %v1340 = vadd.f32 %v1075, %v1270
        %v1341 = vadd.f32 %v1080, %v1275
        %v1342 = vadd.f32 %v1085, %v1280
        %v1343 = vadd.f32 %v1090, %v1285
        %v1344 = vadd.f32 %v1095, %v1290
        %v1345 = vadd.f32 %v1100, %v1295
        %v1346 = vadd.f32 %v1105, %v1300
        %v1347 = vadd.f32 %v1110, %v1305
        %v1348 = vadd.f32 %v1115, %v1310
        %v1349 = vadd.f32 %v1120, %v1315
        %v1350 = vadd.f32 %v1125, %v1320
        %v1351 = vadd.f32 %v1130, %v1325
        %v1352 = vadd.f32 %v1135, %v1330
        %v1353 = vadd.f32 %v1140, %v1335
        %v1354 = vmax.f32 %v1338, 0.0
        %v1355 = vmax.f32 %v1339, 0.0
        %v1356 = vmax.f32 %v1340, 0.0
        %v1357 = vmax.f32 %v1341, 0.0
        %v1358 = vmax.f32 %v1342, 0.0
        %v1359 = vmax.f32 %v1343, 0.0
        %v1360 = vmax.f32 %v1344, 0.0
        %v1361 = vmax.f32 %v1345, 0.0
        %v1362 = vmax.f32 %v1346, 0.0
        %v1363 = vmax.f32 %v1347, 0.0
        %v1364 = vmax.f32 %v1348, 0.0
        %v1365 = vmax.f32 %v1349, 0.0
        %v1366 = vmax.f32 %v1350, 0.0
        %v1367 = vmax.f32 %v1351, 0.0
        %v1368 = vmax.f32 %v1352, 0.0
        %v1369 = vmax.f32 %v1353, 0.0
        %1370 = vst.msk [vmem:[#allocation2 + $0x8] sm:$0xff] %vm333, %v1354
        %1371 = vst.msk [vmem:[#allocation2 + $0x10] sm:$0xff] %vm333, %v1355
        %1372 = vst.msk [vmem:[#allocation2 + $0x18] sm:$0xff] %vm333, %v1356
        %1373 = vst.msk [vmem:[#allocation2 + $0x20] sm:$0xff] %vm333, %v1357
        %1374 = vst.msk [vmem:[#allocation2 + $0x28] sm:$0xff] %vm333, %v1358
        %1375 = vst.msk [vmem:[#allocation2 + $0x30] sm:$0xff] %vm333, %v1359
        %1376 = vst.msk [vmem:[#allocation2 + $0x38] sm:$0xff] %vm333, %v1360
        %1377 = vst.msk [vmem:[#allocation2 + $0x40] sm:$0xff] %vm333, %v1361
        %1378 = vst.msk [vmem:[#allocation2 + $0x48] sm:$0xff] %vm333, %v1362
        %1379 = vst.msk [vmem:[#allocation2 + $0x50] sm:$0xff] %vm333, %v1363
        %1380 = vst.msk [vmem:[#allocation2 + $0x58] sm:$0xff] %vm333, %v1364
        %1381 = vst.msk [vmem:[#allocation2 + $0x60] sm:$0xff] %vm333, %v1365
        %1382 = vst.msk [vmem:[#allocation2 + $0x68] sm:$0xff] %vm333, %v1366
        %1383 = vst.msk [vmem:[#allocation2 + $0x70] sm:$0xff] %vm333, %v1367
        %1384 = vst.msk [vmem:[#allocation2 + $0x78] sm:$0xff] %vm333, %v1368
        %1385 = vst.msk [vmem:[#allocation2 + $0x80] sm:$0xff] %vm333, %v1369
        %v1386 = vld [vmem:[#allocation2 + $0x7] sm:$0xff]
        %v1387 = vld [vmem:[#allocation2 + $0xf] sm:$0xff]
        %v1388 = vld [vmem:[#allocation2 + $0x17] sm:$0xff]
        %v1389 = vld [vmem:[#allocation2 + $0x1f] sm:$0xff]
        %v1390 = vld [vmem:[#allocation2 + $0x27] sm:$0xff]
        %v1391 = vld [vmem:[#allocation2 + $0x2f] sm:$0xff]
        %v1392 = vld [vmem:[#allocation2 + $0x37] sm:$0xff]
        %v1393 = vld [vmem:[#allocation2 + $0x3f] sm:$0xff]
        %v1394 = vld [vmem:[#allocation2 + $0x47] sm:$0xff]
        %v1395 = vld [vmem:[#allocation2 + $0x4f] sm:$0xff]
        %v1396 = vld [vmem:[#allocation2 + $0x57] sm:$0xff]
        %v1397 = vld [vmem:[#allocation2 + $0x5f] sm:$0xff]
        %v1398 = vld [vmem:[#allocation2 + $0x67] sm:$0xff]
        %v1399 = vld [vmem:[#allocation2 + $0x6f] sm:$0xff]
        %v1400 = vld [vmem:[#allocation2 + $0x77] sm:$0xff]
        %v1401 = vld [vmem:[#allocation2 + $0x7f] sm:$0xff]
        %v1402 = vmul.f32 %v1386, %v609
        %v1403 = vmul.f32 %v1387, %v610
        %v1404 = vmul.f32 %v1388, %v611
        %v1405 = vmul.f32 %v1389, %v612
        %v1406 = vmul.f32 %v1390, %v613
        %v1407 = vmul.f32 %v1391, %v614
        %v1408 = vmul.f32 %v1392, %v615
        %v1409 = vmul.f32 %v1393, %v616
        %v1410 = vmul.f32 %v1394, %v617
        %v1411 = vmul.f32 %v1395, %v618
        %v1412 = vmul.f32 %v1396, %v619
        %v1413 = vmul.f32 %v1397, %v620
        %v1414 = vmul.f32 %v1398, %v621
        %v1415 = vmul.f32 %v1399, %v622
        %v1416 = vmul.f32 %v1400, %v623
        %v1417 = vmul.f32 %v1401, %v624
        %v1418 = vld [vmem:[#allocation2 + $0x9] sm:$0xff]
        %v1419 = vld [vmem:[#allocation2 + $0x11] sm:$0xff]
        %v1420 = vld [vmem:[#allocation2 + $0x19] sm:$0xff]
        %v1421 = vld [vmem:[#allocation2 + $0x21] sm:$0xff]
        %v1422 = vld [vmem:[#allocation2 + $0x29] sm:$0xff]
        %v1423 = vld [vmem:[#allocation2 + $0x31] sm:$0xff]
        %v1424 = vld [vmem:[#allocation2 + $0x39] sm:$0xff]
        %v1425 = vld [vmem:[#allocation2 + $0x41] sm:$0xff]
        %v1426 = vld [vmem:[#allocation2 + $0x49] sm:$0xff]
        %v1427 = vld [vmem:[#allocation2 + $0x51] sm:$0xff]
        %v1428 = vld [vmem:[#allocation2 + $0x59] sm:$0xff]
        %v1429 = vld [vmem:[#allocation2 + $0x61] sm:$0xff]
        %v1430 = vld [vmem:[#allocation2 + $0x69] sm:$0xff]
        %v1431 = vld [vmem:[#allocation2 + $0x71] sm:$0xff]
        %v1432 = vld [vmem:[#allocation2 + $0x79] sm:$0xff]
        %v1433 = vld [vmem:[#allocation2 + $0x81] sm:$0xff]
        %v1434 = vmul.f32 %v1418, %v657
        %v1435 = vmul.f32 %v1419, %v658
        %v1436 = vmul.f32 %v1420, %v659
        %v1437 = vmul.f32 %v1421, %v660
        %v1438 = vmul.f32 %v1422, %v661
        %v1439 = vmul.f32 %v1423, %v662
        %v1440 = vmul.f32 %v1424, %v663
        %v1441 = vmul.f32 %v1425, %v664
        %v1442 = vmul.f32 %v1426, %v665
        %v1443 = vmul.f32 %v1427, %v666
        %v1444 = vmul.f32 %v1428, %v667
        %v1445 = vmul.f32 %v1429, %v668
        %v1446 = vmul.f32 %v1430, %v669
        %v1447 = vmul.f32 %v1431, %v670
        %v1448 = vmul.f32 %v1432, %v671
        %v1449 = vmul.f32 %v1433, %v672
        %v1450 = vld [vmem:[%s2] sm:$0xff]
        %v1451 = vld [vmem:[%s2 + $0x8] sm:$0xff]
        %v1452 = vld [vmem:[%s2 + $0x10] sm:$0xff]
        %v1453 = vld [vmem:[%s2 + $0x18] sm:$0xff]
        %v1455 = vsel %vm333, %v1354, 0
        %v1458 = vsel %vm333, %v1355, 0
        %v1461 = vsel %vm333, %v1356, 0
        %v1464 = vsel %vm333, %v1357, 0
        %v1467 = vsel %vm333, %v1358, 0
        %v1470 = vsel %vm333, %v1359, 0
        %v1473 = vsel %vm333, %v1360, 0
        %v1476 = vsel %vm333, %v1361, 0
        %v1479 = vsel %vm333, %v1362, 0
        %v1482 = vsel %vm333, %v1363, 0
        %v1485 = vsel %vm333, %v1364, 0
        %v1488 = vsel %vm333, %v1365, 0
        %v1491 = vsel %vm333, %v1366, 0
        %v1494 = vsel %vm333, %v1367, 0
        %v1497 = vsel %vm333, %v1368, 0
        %v1500 = vsel %vm333, %v1369, 0
        %1502 = vmatprep.subr.mxu0 0.0
        %1503 = vmatpush1.msra.mxu0 %v1452
        %1504 = vmatprep.subr.mxu0 0.0
        %1505 = vmatpush1.msra.mxu0 %v1453
        %1506 = vmatprep.subr.mxu0 0.0
        %1507 = vmatpush1.msra.mxu0 0.0
        %1508 = vmatprep.subr.mxu0 0.0
        %1509 = vmatpush1.msra.mxu0 0.0
        %1510 = vmatprep.subr.mxu0 0.0
        %1511 = vmatpush1.msra.mxu0 0.0
        %1512 = vmatprep.subr.mxu0 0.0
        %1513 = vmatpush1.msra.mxu0 0.0
        %1514 = vmatprep.subr.mxu0 0.0
        %1515 = vmatpush1.msra.mxu0 0.0
        %1516 = vmatprep.subr.mxu0 0.0
        %1517 = vmatpush1.msra.mxu0 0.0
        %1518 = vmatprep.subr.mxu0 0.0
        %1519 = vmatpush1.msra.mxu0 0.0
        %1520 = vmatprep.subr.mxu0 0.0
        %1521 = vmatpush1.msra.mxu0 0.0
        %1522 = vmatprep.subr.mxu0 0.0
        %1523 = vmatpush1.msra.mxu0 0.0
        %1524 = vmatprep.subr.mxu0 0.0
        %1525 = vmatpush1.msra.mxu0 0.0
        %1526 = vmatprep.subr.mxu0 0.0
        %1527 = vmatpush1.msra.mxu0 0.0
        %1528 = vmatprep.subr.mxu0 0.0
        %1529 = vmatpush1.msra.mxu0 0.0
        %1530 = vmatprep.subr.mxu0 0.0
        %1531 = vmatpush1.msra.mxu0 0.0
        %1532 = vmatprep.subr.mxu0 0.0
        %1533 = vmatpush1.msra.mxu0 0.0
        %1534 = vmatprep.subr.mxu0 0.0
        %1535 = vmatpush1.msra.mxu0 0.0
        %1536 = vmatprep.subr.mxu0 0.0
        %1537 = vmatpush1.msra.mxu0 0.0
        %1538 = vmatprep.subr.mxu0 0.0
        %1539 = vmatpush1.msra.mxu0 0.0
        %1540 = vmatprep.subr.mxu0 0.0
        %1541 = vmatpush1.msra.mxu0 0.0
        %1542 = vmatprep.subr.mxu0 0.0
        %1543 = vmatpush1.msra.mxu0 0.0
        %1544 = vmatprep.subr.mxu0 0.0
        %1545 = vmatpush1.msra.mxu0 0.0
        %1546 = vmatprep.subr.mxu0 0.0
        %1547 = vmatpush1.msra.mxu0 0.0
        %1548 = vmatprep.subr.mxu0 0.0
        %1549 = vmatpush1.msra.mxu0 0.0
        %1550 = vmatprep.subr.mxu0 0.0
        %1551 = vmatpush1.msra.mxu0 0.0
        %1552 = vmatprep.subr.mxu0 0.0
        %1553 = vmatpush1.msra.mxu0 0.0
        %1554 = vmatprep.subr.mxu0 0.0
        %1555 = vmatpush1.msra.mxu0 0.0
        %1556 = vmatprep.subr.mxu0 0.0
        %1557 = vmatpush1.msra.mxu0 0.0
        %1558 = vmatprep.subr.mxu0 0.0
        %1559 = vmatpush1.msra.mxu0 0.0
        %1560 = vmatprep.subr.mxu0 0.0
        %1561 = vmatpush1.msra.mxu0 0.0
        %1562 = vmatprep.subr.mxu0 0.0
        %1563 = vmatpush1.msra.mxu0 0.0
        %1564 = vmatprep.subr.mxu0 0.0
        %1565 = vmatpush1.msra.mxu0 0.0
        %1566 = vmatprep.mubr.f32.mxu0 0.0
        %1567 = vmatmul.mubr.f32.gmra.mrb[0].mxu0 %v1455
        %v1568 = vpop.f32.mrb[0].mxu0
        %v1569 = vadd.f32 0.0, %v1568
        %v1570 = vpop.f32.mrb[0].mxu0
        %1571 = vmatprep.mubr.f32.mxu0 0.0
        %1572 = vmatmul.mubr.f32.gmra.mrb[0].mxu0 %v1458
        %v1573 = vpop.f32.mrb[0].mxu0
        %v1574 = vadd.f32 0.0, %v1573
        %v1575 = vpop.f32.mrb[0].mxu0
        %1576 = vmatprep.mubr.f32.mxu0 0.0
        %1577 = vmatmul.mubr.f32.gmra.mrb[0].mxu0 %v1461
        %v1578 = vpop.f32.mrb[0].mxu0
        %v1579 = vadd.f32 0.0, %v1578
        %v1580 = vpop.f32.mrb[0].mxu0
        %1581 = vmatprep.mubr.f32.mxu0 0.0
        %1582 = vmatmul.mubr.f32.gmra.mrb[0].mxu0 %v1464
        %v1583 = vpop.f32.mrb[0].mxu0
        %v1584 = vadd.f32 0.0, %v1583
        %v1585 = vpop.f32.mrb[0].mxu0
        %1586 = vmatprep.mubr.f32.mxu0 0.0
        %1587 = vmatmul.mubr.f32.gmra.mrb[0].mxu0 %v1467
        %v1588 = vpop.f32.mrb[0].mxu0
        %v1589 = vadd.f32 0.0, %v1588
        %v1590 = vpop.f32.mrb[0].mxu0
        %1591 = vmatprep.mubr.f32.mxu0 0.0
        %1592 = vmatmul.mubr.f32.gmra.mrb[0].mxu0 %v1470
        %v1593 = vpop.f32.mrb[0].mxu0
        %v1594 = vadd.f32 0.0, %v1593
        %v1595 = vpop.f32.mrb[0].mxu0
        %1596 = vmatprep.mubr.f32.mxu0 0.0
        %1597 = vmatmul.mubr.f32.gmra.mrb[0].mxu0 %v1473
        %v1598 = vpop.f32.mrb[0].mxu0
        %v1599 = vadd.f32 0.0, %v1598
        %v1600 = vpop.f32.mrb[0].mxu0
        %1601 = vmatprep.mubr.f32.mxu0 0.0
        %1602 = vmatmul.mubr.f32.gmra.mrb[0].mxu0 %v1476
        %v1603 = vpop.f32.mrb[0].mxu0
        %v1604 = vadd.f32 0.0, %v1603
        %v1605 = vpop.f32.mrb[0].mxu0
        %1606 = vmatprep.mubr.f32.mxu0 0.0
        %1607 = vmatmul.mubr.f32.gmra.mrb[0].mxu0 %v1479
        %v1608 = vpop.f32.mrb[0].mxu0
        %v1609 = vadd.f32 0.0, %v1608
        %v1610 = vpop.f32.mrb[0].mxu0
        %1611 = vmatprep.mubr.f32.mxu0 0.0
        %1612 = vmatmul.mubr.f32.gmra.mrb[0].mxu0 %v1482
        %v1613 = vpop.f32.mrb[0].mxu0
        %v1614 = vadd.f32 0.0, %v1613
        %v1615 = vpop.f32.mrb[0].mxu0
        %1616 = vmatprep.mubr.f32.mxu0 0.0
        %1617 = vmatmul.mubr.f32.gmra.mrb[0].mxu0 %v1485
        %v1618 = vpop.f32.mrb[0].mxu0
        %v1619 = vadd.f32 0.0, %v1618
        %v1620 = vpop.f32.mrb[0].mxu0
        %1621 = vmatprep.mubr.f32.mxu0 0.0
        %1622 = vmatmul.mubr.f32.gmra.mrb[0].mxu0 %v1488
        %v1623 = vpop.f32.mrb[0].mxu0
        %v1624 = vadd.f32 0.0, %v1623
        %v1625 = vpop.f32.mrb[0].mxu0
        %1626 = vmatprep.mubr.f32.mxu0 0.0
        %1627 = vmatmul.mubr.f32.gmra.mrb[0].mxu0 %v1491
        %v1628 = vpop.f32.mrb[0].mxu0
        %v1629 = vadd.f32 0.0, %v1628
        %v1630 = vpop.f32.mrb[0].mxu0
        %1631 = vmatprep.mubr.f32.mxu0 0.0
        %1632 = vmatmul.mubr.f32.gmra.mrb[0].mxu0 %v1494
        %v1633 = vpop.f32.mrb[0].mxu0
        %v1634 = vadd.f32 0.0, %v1633
        %v1635 = vpop.f32.mrb[0].mxu0
        %1636 = vmatprep.mubr.f32.mxu0 0.0
        %1637 = vmatmul.mubr.f32.gmra.mrb[0].mxu0 %v1497
        %v1638 = vpop.f32.mrb[0].mxu0
        %v1639 = vadd.f32 0.0, %v1638
        %v1640 = vpop.f32.mrb[0].mxu0
        %1641 = vmatprep.mubr.f32.mxu0 0.0
        %1642 = vmatmul.mubr.f32.gmra.mrb[0].mxu0 %v1500
        %v1643 = vpop.f32.mrb[0].mxu0
        %v1644 = vadd.f32 0.0, %v1643
        %v1645 = vpop.f32.mrb[0].mxu0
        %1646 = vdwg.mxu0
        %v1648 = vsel %vm333, %v1402, 0
        %v1651 = vsel %vm333, %v1403, 0
        %v1654 = vsel %vm333, %v1404, 0
        %v1657 = vsel %vm333, %v1405, 0
        %v1660 = vsel %vm333, %v1406, 0
        %v1663 = vsel %vm333, %v1407, 0
        %v1666 = vsel %vm333, %v1408, 0
        %v1669 = vsel %vm333, %v1409, 0
        %v1672 = vsel %vm333, %v1410, 0
        %v1675 = vsel %vm333, %v1411, 0
        %v1678 = vsel %vm333, %v1412, 0
        %v1681 = vsel %vm333, %v1413, 0
        %v1684 = vsel %vm333, %v1414, 0
        %v1687 = vsel %vm333, %v1415, 0
        %v1690 = vsel %vm333, %v1416, 0
        %v1693 = vsel %vm333, %v1417, 0
        %1695 = vmatprep.subr.mxu0 0.0
        %1696 = vmatpush1.msra.mxu0 %v1450
        %1697 = vmatprep.subr.mxu0 0.0
        %1698 = vmatpush1.msra.mxu0 %v1451
        %1699 = vmatprep.subr.mxu0 0.0
        %1700 = vmatpush1.msra.mxu0 0.0
        %1701 = vmatprep.subr.mxu0 0.0
        %1702 = vmatpush1.msra.mxu0 0.0
        %1703 = vmatprep.subr.mxu0 0.0
        %1704 = vmatpush1.msra.mxu0 0.0
        %1705 = vmatprep.subr.mxu0 0.0
        %1706 = vmatpush1.msra.mxu0 0.0
        %1707 = vmatprep.subr.mxu0 0.0
        %1708 = vmatpush1.msra.mxu0 0.0
        %1709 = vmatprep.subr.mxu0 0.0
        %1710 = vmatpush1.msra.mxu0 0.0
        %1711 = vmatprep.subr.mxu0 0.0
        %1712 = vmatpush1.msra.mxu0 0.0
        %1713 = vmatprep.subr.mxu0 0.0
        %1714 = vmatpush1.msra.mxu0 0.0
        %1715 = vmatprep.subr.mxu0 0.0
        %1716 = vmatpush1.msra.mxu0 0.0
        %1717 = vmatprep.subr.mxu0 0.0
        %1718 = vmatpush1.msra.mxu0 0.0
        %1719 = vmatprep.subr.mxu0 0.0
        %1720 = vmatpush1.msra.mxu0 0.0
        %1721 = vmatprep.subr.mxu0 0.0
        %1722 = vmatpush1.msra.mxu0 0.0
        %1723 = vmatprep.subr.mxu0 0.0
        %1724 = vmatpush1.msra.mxu0 0.0
        %1725 = vmatprep.subr.mxu0 0.0
        %1726 = vmatpush1.msra.mxu0 0.0
        %1727 = vmatprep.subr.mxu0 0.0
        %1728 = vmatpush1.msra.mxu0 0.0
        %1729 = vmatprep.subr.mxu0 0.0
        %1730 = vmatpush1.msra.mxu0 0.0
        %1731 = vmatprep.subr.mxu0 0.0
        %1732 = vmatpush1.msra.mxu0 0.0
        %1733 = vmatprep.subr.mxu0 0.0
        %1734 = vmatpush1.msra.mxu0 0.0
        %1735 = vmatprep.subr.mxu0 0.0
        %1736 = vmatpush1.msra.mxu0 0.0
        %1737 = vmatprep.subr.mxu0 0.0
        %1738 = vmatpush1.msra.mxu0 0.0
        %1739 = vmatprep.subr.mxu0 0.0
        %1740 = vmatpush1.msra.mxu0 0.0
        %1741 = vmatprep.subr.mxu0 0.0
        %1742 = vmatpush1.msra.mxu0 0.0
        %1743 = vmatprep.subr.mxu0 0.0
        %1744 = vmatpush1.msra.mxu0 0.0
        %1745 = vmatprep.subr.mxu0 0.0
        %1746 = vmatpush1.msra.mxu0 0.0
        %1747 = vmatprep.subr.mxu0 0.0
        %1748 = vmatpush1.msra.mxu0 0.0
        %1749 = vmatprep.subr.mxu0 0.0
        %1750 = vmatpush1.msra.mxu0 0.0
        %1751 = vmatprep.subr.mxu0 0.0
        %1752 = vmatpush1.msra.mxu0 0.0
        %1753 = vmatprep.subr.mxu0 0.0
        %1754 = vmatpush1.msra.mxu0 0.0
        %1755 = vmatprep.subr.mxu0 0.0
        %1756 = vmatpush1.msra.mxu0 0.0
        %1757 = vmatprep.subr.mxu0 0.0
        %1758 = vmatpush1.msra.mxu0 0.0
        %1759 = vmatprep.mubr.f32.mxu0 0.0
        %1760 = vmatmul.mubr.f32.gmra.mrb[0].mxu0 %v1648
        %v1761 = vpop.f32.mrb[0].mxu0
        %v1762 = vadd.f32 %v1569, %v1761
        %v1763 = vpop.f32.mrb[0].mxu0
        %1764 = vmatprep.mubr.f32.mxu0 0.0
        %1765 = vmatmul.mubr.f32.gmra.mrb[0].mxu0 %v1651
        %v1766 = vpop.f32.mrb[0].mxu0
        %v1767 = vadd.f32 %v1574, %v1766
        %v1768 = vpop.f32.mrb[0].mxu0
        %1769 = vmatprep.mubr.f32.mxu0 0.0
        %1770 = vmatmul.mubr.f32.gmra.mrb[0].mxu0 %v1654
        %v1771 = vpop.f32.mrb[0].mxu0
        %v1772 = vadd.f32 %v1579, %v1771
        %v1773 = vpop.f32.mrb[0].mxu0
        %1774 = vmatprep.mubr.f32.mxu0 0.0
        %1775 = vmatmul.mubr.f32.gmra.mrb[0].mxu0 %v1657
        %v1776 = vpop.f32.mrb[0].mxu0
        %v1777 = vadd.f32 %v1584, %v1776
        %v1778 = vpop.f32.mrb[0].mxu0
        %1779 = vmatprep.mubr.f32.mxu0 0.0
        %1780 = vmatmul.mubr.f32.gmra.mrb[0].mxu0 %v1660
        %v1781 = vpop.f32.mrb[0].mxu0
        %v1782 = vadd.f32 %v1589, %v1781
        %v1783 = vpop.f32.mrb[0].mxu0
        %1784 = vmatprep.mubr.f32.mxu0 0.0
        %1785 = vmatmul.mubr.f32.gmra.mrb[0].mxu0 %v1663
        %v1786 = vpop.f32.mrb[0].mxu0
        %v1787 = vadd.f32 %v1594, %v1786
        %v1788 = vpop.f32.mrb[0].mxu0
        %1789 = vmatprep.mubr.f32.mxu0 0.0
        %1790 = vmatmul.mubr.f32.gmra.mrb[0].mxu0 %v1666
        %v1791 = vpop.f32.mrb[0].mxu0
        %v1792 = vadd.f32 %v1599, %v1791
        %v1793 = vpop.f32.mrb[0].mxu0
        %1794 = vmatprep.mubr.f32.mxu0 0.0
        %1795 = vmatmul.mubr.f32.gmra.mrb[0].mxu0 %v1669
        %v1796 = vpop.f32.mrb[0].mxu0
        %v1797 = vadd.f32 %v1604, %v1796
        %v1798 = vpop.f32.mrb[0].mxu0
        %1799 = vmatprep.mubr.f32.mxu0 0.0
        %1800 = vmatmul.mubr.f32.gmra.mrb[0].mxu0 %v1672
        %v1801 = vpop.f32.mrb[0].mxu0
        %v1802 = vadd.f32 %v1609, %v1801
        %v1803 = vpop.f32.mrb[0].mxu0
        %1804 = vmatprep.mubr.f32.mxu0 0.0
        %1805 = vmatmul.mubr.f32.gmra.mrb[0].mxu0 %v1675
        %v1806 = vpop.f32.mrb[0].mxu0
        %v1807 = vadd.f32 %v1614, %v1806
        %v1808 = vpop.f32.mrb[0].mxu0
        %1809 = vmatprep.mubr.f32.mxu0 0.0
        %1810 = vmatmul.mubr.f32.gmra.mrb[0].mxu0 %v1678
        %v1811 = vpop.f32.mrb[0].mxu0
        %v1812 = vadd.f32 %v1619, %v1811
        %v1813 = vpop.f32.mrb[0].mxu0
        %1814 = vmatprep.mubr.f32.mxu0 0.0
        %1815 = vmatmul.mubr.f32.gmra.mrb[0].mxu0 %v1681
        %v1816 = vpop.f32.mrb[0].mxu0
        %v1817 = vadd.f32 %v1624, %v1816
        %v1818 = vpop.f32.mrb[0].mxu0
        %1819 = vmatprep.mubr.f32.mxu0 0.0
        %1820 = vmatmul.mubr.f32.gmra.mrb[0].mxu0 %v1684
        %v1821 = vpop.f32.mrb[0].mxu0
        %v1822 = vadd.f32 %v1629, %v1821
        %v1823 = vpop.f32.mrb[0].mxu0
        %1824 = vmatprep.mubr.f32.mxu0 0.0
        %1825 = vmatmul.mubr.f32.gmra.mrb[0].mxu0 %v1687
        %v1826 = vpop.f32.mrb[0].mxu0
        %v1827 = vadd.f32 %v1634, %v1826
        %v1828 = vpop.f32.mrb[0].mxu0
        %1829 = vmatprep.mubr.f32.mxu0 0.0
        %1830 = vmatmul.mubr.f32.gmra.mrb[0].mxu0 %v1690
        %v1831 = vpop.f32.mrb[0].mxu0
        %v1832 = vadd.f32 %v1639, %v1831
        %v1833 = vpop.f32.mrb[0].mxu0
        %1834 = vmatprep.mubr.f32.mxu0 0.0
        %1835 = vmatmul.mubr.f32.gmra.mrb[0].mxu0 %v1693
        %v1836 = vpop.f32.mrb[0].mxu0
        %v1837 = vadd.f32 %v1644, %v1836
        %v1838 = vpop.f32.mrb[0].mxu0
        %1839 = vdwg.mxu0
        %v1840 = vld [vmem:[%s2 + $0x20] sm:$0xff]
        %v1841 = vld [vmem:[%s2 + $0x28] sm:$0xff]
        %v1843 = vsel %vm333, %v1434, 0
        %v1846 = vsel %vm333, %v1435, 0
        %v1849 = vsel %vm333, %v1436, 0
        %v1852 = vsel %vm333, %v1437, 0
        %v1855 = vsel %vm333, %v1438, 0
        %v1858 = vsel %vm333, %v1439, 0
        %v1861 = vsel %vm333, %v1440, 0
        %v1864 = vsel %vm333, %v1441, 0
        %v1867 = vsel %vm333, %v1442, 0
        %v1870 = vsel %vm333, %v1443, 0
        %v1873 = vsel %vm333, %v1444, 0
        %v1876 = vsel %vm333, %v1445, 0
        %v1879 = vsel %vm333, %v1446, 0
        %v1882 = vsel %vm333, %v1447, 0
        %v1885 = vsel %vm333, %v1448, 0
        %v1888 = vsel %vm333, %v1449, 0
        %1890 = vmatprep.subr.mxu0 0.0
        %1891 = vmatpush1.msra.mxu0 %v1840
        %1892 = vmatprep.subr.mxu0 0.0
        %1893 = vmatpush1.msra.mxu0 %v1841
        %1894 = vmatprep.subr.mxu0 0.0
        %1895 = vmatpush1.msra.mxu0 0.0
        %1896 = vmatprep.subr.mxu0 0.0
        %1897 = vmatpush1.msra.mxu0 0.0
        %1898 = vmatprep.subr.mxu0 0.0
        %1899 = vmatpush1.msra.mxu0 0.0
        %1900 = vmatprep.subr.mxu0 0.0
        %1901 = vmatpush1.msra.mxu0 0.0
        %1902 = vmatprep.subr.mxu0 0.0
        %1903 = vmatpush1.msra.mxu0 0.0
        %1904 = vmatprep.subr.mxu0 0.0
        %1905 = vmatpush1.msra.mxu0 0.0
        %1906 = vmatprep.subr.mxu0 0.0
        %1907 = vmatpush1.msra.mxu0 0.0
        %1908 = vmatprep.subr.mxu0 0.0
        %1909 = vmatpush1.msra.mxu0 0.0
        %1910 = vmatprep.subr.mxu0 0.0
        %1911 = vmatpush1.msra.mxu0 0.0
        %1912 = vmatprep.subr.mxu0 0.0
        %1913 = vmatpush1.msra.mxu0 0.0
        %1914 = vmatprep.subr.mxu0 0.0
        %1915 = vmatpush1.msra.mxu0 0.0
        %1916 = vmatprep.subr.mxu0 0.0
        %1917 = vmatpush1.msra.mxu0 0.0
        %1918 = vmatprep.subr.mxu0 0.0
        %1919 = vmatpush1.msra.mxu0 0.0
        %1920 = vmatprep.subr.mxu0 0.0
        %1921 = vmatpush1.msra.mxu0 0.0
        %1922 = vmatprep.subr.mxu0 0.0
        %1923 = vmatpush1.msra.mxu0 0.0
        %1924 = vmatprep.subr.mxu0 0.0
        %1925 = vmatpush1.msra.mxu0 0.0
        %1926 = vmatprep.subr.mxu0 0.0
        %1927 = vmatpush1.msra.mxu0 0.0
        %1928 = vmatprep.subr.mxu0 0.0
        %1929 = vmatpush1.msra.mxu0 0.0
        %1930 = vmatprep.subr.mxu0 0.0
        %1931 = vmatpush1.msra.mxu0 0.0
        %1932 = vmatprep.subr.mxu0 0.0
        %1933 = vmatpush1.msra.mxu0 0.0
        %1934 = vmatprep.subr.mxu0 0.0
        %1935 = vmatpush1.msra.mxu0 0.0
        %1936 = vmatprep.subr.mxu0 0.0
        %1937 = vmatpush1.msra.mxu0 0.0
        %1938 = vmatprep.subr.mxu0 0.0
        %1939 = vmatpush1.msra.mxu0 0.0
        %1940 = vmatprep.subr.mxu0 0.0
        %1941 = vmatpush1.msra.mxu0 0.0
        %1942 = vmatprep.subr.mxu0 0.0
        %1943 = vmatpush1.msra.mxu0 0.0
        %1944 = vmatprep.subr.mxu0 0.0
        %1945 = vmatpush1.msra.mxu0 0.0
        %1946 = vmatprep.subr.mxu0 0.0
        %1947 = vmatpush1.msra.mxu0 0.0
        %1948 = vmatprep.subr.mxu0 0.0
        %1949 = vmatpush1.msra.mxu0 0.0
        %1950 = vmatprep.subr.mxu0 0.0
        %1951 = vmatpush1.msra.mxu0 0.0
        %1952 = vmatprep.subr.mxu0 0.0
        %1953 = vmatpush1.msra.mxu0 0.0
        %1954 = vmatprep.mubr.f32.mxu0 0.0
        %1955 = vmatmul.mubr.f32.gmra.mrb[0].mxu0 %v1843
        %v1956 = vpop.f32.mrb[0].mxu0
        %v1957 = vadd.f32 0.0, %v1956
        %v1958 = vpop.f32.mrb[0].mxu0
        %1959 = vmatprep.mubr.f32.mxu0 0.0
        %1960 = vmatmul.mubr.f32.gmra.mrb[0].mxu0 %v1846
        %v1961 = vpop.f32.mrb[0].mxu0
        %v1962 = vadd.f32 0.0, %v1961
        %v1963 = vpop.f32.mrb[0].mxu0
        %1964 = vmatprep.mubr.f32.mxu0 0.0
        %1965 = vmatmul.mubr.f32.gmra.mrb[0].mxu0 %v1849
        %v1966 = vpop.f32.mrb[0].mxu0
        %v1967 = vadd.f32 0.0, %v1966
        %v1968 = vpop.f32.mrb[0].mxu0
        %1969 = vmatprep.mubr.f32.mxu0 0.0
        %1970 = vmatmul.mubr.f32.gmra.mrb[0].mxu0 %v1852
        %v1971 = vpop.f32.mrb[0].mxu0
        %v1972 = vadd.f32 0.0, %v1971
        %v1973 = vpop.f32.mrb[0].mxu0
        %1974 = vmatprep.mubr.f32.mxu0 0.0
        %1975 = vmatmul.mubr.f32.gmra.mrb[0].mxu0 %v1855
        %v1976 = vpop.f32.mrb[0].mxu0
        %v1977 = vadd.f32 0.0, %v1976
        %v1978 = vpop.f32.mrb[0].mxu0
        %1979 = vmatprep.mubr.f32.mxu0 0.0
        %1980 = vmatmul.mubr.f32.gmra.mrb[0].mxu0 %v1858
        %v1981 = vpop.f32.mrb[0].mxu0
        %v1982 = vadd.f32 0.0, %v1981
        %v1983 = vpop.f32.mrb[0].mxu0
        %1984 = vmatprep.mubr.f32.mxu0 0.0
        %1985 = vmatmul.mubr.f32.gmra.mrb[0].mxu0 %v1861
        %v1986 = vpop.f32.mrb[0].mxu0
        %v1987 = vadd.f32 0.0, %v1986
        %v1988 = vpop.f32.mrb[0].mxu0
        %1989 = vmatprep.mubr.f32.mxu0 0.0
        %1990 = vmatmul.mubr.f32.gmra.mrb[0].mxu0 %v1864
        %v1991 = vpop.f32.mrb[0].mxu0
        %v1992 = vadd.f32 0.0, %v1991
        %v1993 = vpop.f32.mrb[0].mxu0
        %1994 = vmatprep.mubr.f32.mxu0 0.0
        %1995 = vmatmul.mubr.f32.gmra.mrb[0].mxu0 %v1867
        %v1996 = vpop.f32.mrb[0].mxu0
        %v1997 = vadd.f32 0.0, %v1996
        %v1998 = vpop.f32.mrb[0].mxu0
        %1999 = vmatprep.mubr.f32.mxu0 0.0
        %2000 = vmatmul.mubr.f32.gmra.mrb[0].mxu0 %v1870
        %v2001 = vpop.f32.mrb[0].mxu0
        %v2002 = vadd.f32 0.0, %v2001
        %v2003 = vpop.f32.mrb[0].mxu0
        %2004 = vmatprep.mubr.f32.mxu0 0.0
        %2005 = vmatmul.mubr.f32.gmra.mrb[0].mxu0 %v1873
        %v2006 = vpop.f32.mrb[0].mxu0
        %v2007 = vadd.f32 0.0, %v2006
        %v2008 = vpop.f32.mrb[0].mxu0
        %2009 = vmatprep.mubr.f32.mxu0 0.0
        %2010 = vmatmul.mubr.f32.gmra.mrb[0].mxu0 %v1876
        %v2011 = vpop.f32.mrb[0].mxu0
        %v2012 = vadd.f32 0.0, %v2011
        %v2013 = vpop.f32.mrb[0].mxu0
        %2014 = vmatprep.mubr.f32.mxu0 0.0
        %2015 = vmatmul.mubr.f32.gmra.mrb[0].mxu0 %v1879
        %v2016 = vpop.f32.mrb[0].mxu0
        %v2017 = vadd.f32 0.0, %v2016
        %v2018 = vpop.f32.mrb[0].mxu0
        %2019 = vmatprep.mubr.f32.mxu0 0.0
        %2020 = vmatmul.mubr.f32.gmra.mrb[0].mxu0 %v1882
        %v2021 = vpop.f32.mrb[0].mxu0
        %v2022 = vadd.f32 0.0, %v2021
        %v2023 = vpop.f32.mrb[0].mxu0
        %2024 = vmatprep.mubr.f32.mxu0 0.0
        %2025 = vmatmul.mubr.f32.gmra.mrb[0].mxu0 %v1885
        %v2026 = vpop.f32.mrb[0].mxu0
        %v2027 = vadd.f32 0.0, %v2026
        %v2028 = vpop.f32.mrb[0].mxu0
        %2029 = vmatprep.mubr.f32.mxu0 0.0
        %2030 = vmatmul.mubr.f32.gmra.mrb[0].mxu0 %v1888
        %v2031 = vpop.f32.mrb[0].mxu0
        %v2032 = vadd.f32 0.0, %v2031
        %v2033 = vpop.f32.mrb[0].mxu0
        %2034 = vdwg.mxu0
        %v2035 = vadd.f32 %v1762, %v1957
        %v2036 = vadd.f32 %v1767, %v1962
        %v2037 = vadd.f32 %v1772, %v1967
        %v2038 = vadd.f32 %v1777, %v1972
        %v2039 = vadd.f32 %v1782, %v1977
        %v2040 = vadd.f32 %v1787, %v1982
        %v2041 = vadd.f32 %v1792, %v1987
        %v2042 = vadd.f32 %v1797, %v1992
        %v2043 = vadd.f32 %v1802, %v1997
        %v2044 = vadd.f32 %v1807, %v2002
        %v2045 = vadd.f32 %v1812, %v2007
        %v2046 = vadd.f32 %v1817, %v2012
        %v2047 = vadd.f32 %v1822, %v2017
        %v2048 = vadd.f32 %v1827, %v2022
        %v2049 = vadd.f32 %v1832, %v2027
        %v2050 = vadd.f32 %v1837, %v2032
        %v2051 = vadd.f32 %v2035, %v352
        %v2052 = vadd.f32 %v2036, %v353
        %v2053 = vadd.f32 %v2037, %v354
        %v2054 = vadd.f32 %v2038, %v355
        %v2055 = vadd.f32 %v2039, %v356
        %v2056 = vadd.f32 %v2040, %v357
        %v2057 = vadd.f32 %v2041, %v358
        %v2058 = vadd.f32 %v2042, %v359
        %v2059 = vadd.f32 %v2043, %v360
        %v2060 = vadd.f32 %v2044, %v361
        %v2061 = vadd.f32 %v2045, %v362
        %v2062 = vadd.f32 %v2046, %v363
        %v2063 = vadd.f32 %v2047, %v364
        %v2064 = vadd.f32 %v2048, %v365
        %v2065 = vadd.f32 %v2049, %v366
        %v2066 = vadd.f32 %v2050, %v367
        %v2067 = vmax.f32 %v2051, 0.0
        %v2068 = vmax.f32 %v2052, 0.0
        %v2069 = vmax.f32 %v2053, 0.0
        %v2070 = vmax.f32 %v2054, 0.0
        %v2071 = vmax.f32 %v2055, 0.0
        %v2072 = vmax.f32 %v2056, 0.0
        %v2073 = vmax.f32 %v2057, 0.0
        %v2074 = vmax.f32 %v2058, 0.0
        %v2075 = vmax.f32 %v2059, 0.0
        %v2076 = vmax.f32 %v2060, 0.0
        %v2077 = vmax.f32 %v2061, 0.0
        %v2078 = vmax.f32 %v2062, 0.0
        %v2079 = vmax.f32 %v2063, 0.0
        %v2080 = vmax.f32 %v2064, 0.0
        %v2081 = vmax.f32 %v2065, 0.0
        %v2082 = vmax.f32 %v2066, 0.0
        %2083 = vst.msk [vmem:[#allocation2 + $0x8] sm:$0xff] %vm333, %v2067
        %2084 = vst.msk [vmem:[#allocation2 + $0x10] sm:$0xff] %vm333, %v2068
        %2085 = vst.msk [vmem:[#allocation2 + $0x18] sm:$0xff] %vm333, %v2069
        %2086 = vst.msk [vmem:[#allocation2 + $0x20] sm:$0xff] %vm333, %v2070
        %2087 = vst.msk [vmem:[#allocation2 + $0x28] sm:$0xff] %vm333, %v2071
        %2088 = vst.msk [vmem:[#allocation2 + $0x30] sm:$0xff] %vm333, %v2072
        %2089 = vst.msk [vmem:[#allocation2 + $0x38] sm:$0xff] %vm333, %v2073
        %2090 = vst.msk [vmem:[#allocation2 + $0x40] sm:$0xff] %vm333, %v2074
        %2091 = vst.msk [vmem:[#allocation2 + $0x48] sm:$0xff] %vm333, %v2075
        %2092 = vst.msk [vmem:[#allocation2 + $0x50] sm:$0xff] %vm333, %v2076
        %2093 = vst.msk [vmem:[#allocation2 + $0x58] sm:$0xff] %vm333, %v2077
        %2094 = vst.msk [vmem:[#allocation2 + $0x60] sm:$0xff] %vm333, %v2078
        %2095 = vst.msk [vmem:[#allocation2 + $0x68] sm:$0xff] %vm333, %v2079
        %2096 = vst.msk [vmem:[#allocation2 + $0x70] sm:$0xff] %vm333, %v2080
        %2097 = vst.msk [vmem:[#allocation2 + $0x78] sm:$0xff] %vm333, %v2081
        %2098 = vst.msk [vmem:[#allocation2 + $0x80] sm:$0xff] %vm333, %v2082
        %v2099 = vld [vmem:[#allocation2 + $0x7] sm:$0xff]
        %v2100 = vld [vmem:[#allocation2 + $0xf] sm:$0xff]
        %v2101 = vld [vmem:[#allocation2 + $0x17] sm:$0xff]
        %v2102 = vld [vmem:[#allocation2 + $0x1f] sm:$0xff]
        %v2103 = vld [vmem:[#allocation2 + $0x27] sm:$0xff]
        %v2104 = vld [vmem:[#allocation2 + $0x2f] sm:$0xff]
        %v2105 = vld [vmem:[#allocation2 + $0x37] sm:$0xff]
        %v2106 = vld [vmem:[#allocation2 + $0x3f] sm:$0xff]
        %v2107 = vld [vmem:[#allocation2 + $0x47] sm:$0xff]
        %v2108 = vld [vmem:[#allocation2 + $0x4f] sm:$0xff]
        %v2109 = vld [vmem:[#allocation2 + $0x57] sm:$0xff]
        %v2110 = vld [vmem:[#allocation2 + $0x5f] sm:$0xff]
        %v2111 = vld [vmem:[#allocation2 + $0x67] sm:$0xff]
        %v2112 = vld [vmem:[#allocation2 + $0x6f] sm:$0xff]
        %v2113 = vld [vmem:[#allocation2 + $0x77] sm:$0xff]
        %v2114 = vld [vmem:[#allocation2 + $0x7f] sm:$0xff]
        %v2115 = vmul.f32 %v2099, %v609
        %v2116 = vmul.f32 %v2100, %v610
        %v2117 = vmul.f32 %v2101, %v611
        %v2118 = vmul.f32 %v2102, %v612
        %v2119 = vmul.f32 %v2103, %v613
        %v2120 = vmul.f32 %v2104, %v614
        %v2121 = vmul.f32 %v2105, %v615
        %v2122 = vmul.f32 %v2106, %v616
        %v2123 = vmul.f32 %v2107, %v617
        %v2124 = vmul.f32 %v2108, %v618
        %v2125 = vmul.f32 %v2109, %v619
        %v2126 = vmul.f32 %v2110, %v620
        %v2127 = vmul.f32 %v2111, %v621
        %v2128 = vmul.f32 %v2112, %v622
        %v2129 = vmul.f32 %v2113, %v623
        %v2130 = vmul.f32 %v2114, %v624
        %v2131 = vld [vmem:[#allocation2 + $0x9] sm:$0xff]
        %v2132 = vld [vmem:[#allocation2 + $0x11] sm:$0xff]
        %v2133 = vld [vmem:[#allocation2 + $0x19] sm:$0xff]
        %v2134 = vld [vmem:[#allocation2 + $0x21] sm:$0xff]
        %v2135 = vld [vmem:[#allocation2 + $0x29] sm:$0xff]
        %v2136 = vld [vmem:[#allocation2 + $0x31] sm:$0xff]
        %v2137 = vld [vmem:[#allocation2 + $0x39] sm:$0xff]
        %v2138 = vld [vmem:[#allocation2 + $0x41] sm:$0xff]
        %v2139 = vld [vmem:[#allocation2 + $0x49] sm:$0xff]
        %v2140 = vld [vmem:[#allocation2 + $0x51] sm:$0xff]
        %v2141 = vld [vmem:[#allocation2 + $0x59] sm:$0xff]
        %v2142 = vld [vmem:[#allocation2 + $0x61] sm:$0xff]
        %v2143 = vld [vmem:[#allocation2 + $0x69] sm:$0xff]
        %v2144 = vld [vmem:[#allocation2 + $0x71] sm:$0xff]
        %v2145 = vld [vmem:[#allocation2 + $0x79] sm:$0xff]
        %v2146 = vld [vmem:[#allocation2 + $0x81] sm:$0xff]
        %v2147 = vmul.f32 %v2131, %v657
        %v2148 = vmul.f32 %v2132, %v658
        %v2149 = vmul.f32 %v2133, %v659
        %v2150 = vmul.f32 %v2134, %v660
        %v2151 = vmul.f32 %v2135, %v661
        %v2152 = vmul.f32 %v2136, %v662
        %v2153 = vmul.f32 %v2137, %v663
        %v2154 = vmul.f32 %v2138, %v664
        %v2155 = vmul.f32 %v2139, %v665
        %v2156 = vmul.f32 %v2140, %v666
        %v2157 = vmul.f32 %v2141, %v667
        %v2158 = vmul.f32 %v2142, %v668
        %v2159 = vmul.f32 %v2143, %v669
        %v2160 = vmul.f32 %v2144, %v670
        %v2161 = vmul.f32 %v2145, %v671
        %v2162 = vmul.f32 %v2146, %v672
        %v2163 = vld [vmem:[%s3] sm:$0xff]
        %v2164 = vld [vmem:[%s3 + $0x8] sm:$0xff]
        %v2165 = vld [vmem:[%s3 + $0x10] sm:$0xff]
        %v2166 = vld [vmem:[%s3 + $0x18] sm:$0xff]
        %v2168 = vsel %vm333, %v2067, 0
        %v2171 = vsel %vm333, %v2068, 0
        %v2174 = vsel %vm333, %v2069, 0
        %v2177 = vsel %vm333, %v2070, 0
        %v2180 = vsel %vm333, %v2071, 0
        %v2183 = vsel %vm333, %v2072, 0
        %v2186 = vsel %vm333, %v2073, 0
        %v2189 = vsel %vm333, %v2074, 0
        %v2192 = vsel %vm333, %v2075, 0
        %v2195 = vsel %vm333, %v2076, 0
        %v2198 = vsel %vm333, %v2077, 0
        %v2201 = vsel %vm333, %v2078, 0
        %v2204 = vsel %vm333, %v2079, 0
        %v2207 = vsel %vm333, %v2080, 0
        %v2210 = vsel %vm333, %v2081, 0
        %v2213 = vsel %vm333, %v2082, 0
        %2215 = vmatprep.subr.mxu0 0.0
        %2216 = vmatpush1.msra.mxu0 %v2165
        %2217 = vmatprep.subr.mxu0 0.0
        %2218 = vmatpush1.msra.mxu0 %v2166
        %2219 = vmatprep.subr.mxu0 0.0
        %2220 = vmatpush1.msra.mxu0 0.0
        %2221 = vmatprep.subr.mxu0 0.0
        %2222 = vmatpush1.msra.mxu0 0.0
        %2223 = vmatprep.subr.mxu0 0.0
        %2224 = vmatpush1.msra.mxu0 0.0
        %2225 = vmatprep.subr.mxu0 0.0
        %2226 = vmatpush1.msra.mxu0 0.0
        %2227 = vmatprep.subr.mxu0 0.0
        %2228 = vmatpush1.msra.mxu0 0.0
        %2229 = vmatprep.subr.mxu0 0.0
        %2230 = vmatpush1.msra.mxu0 0.0
        %2231 = vmatprep.subr.mxu0 0.0
        %2232 = vmatpush1.msra.mxu0 0.0
        %2233 = vmatprep.subr.mxu0 0.0
        %2234 = vmatpush1.msra.mxu0 0.0
        %2235 = vmatprep.subr.mxu0 0.0
        %2236 = vmatpush1.msra.mxu0 0.0
        %2237 = vmatprep.subr.mxu0 0.0
        %2238 = vmatpush1.msra.mxu0 0.0
        %2239 = vmatprep.subr.mxu0 0.0
        %2240 = vmatpush1.msra.mxu0 0.0
        %2241 = vmatprep.subr.mxu0 0.0
        %2242 = vmatpush1.msra.mxu0 0.0
        %2243 = vmatprep.subr.mxu0 0.0
        %2244 = vmatpush1.msra.mxu0 0.0
        %2245 = vmatprep.subr.mxu0 0.0
        %2246 = vmatpush1.msra.mxu0 0.0
        %2247 = vmatprep.subr.mxu0 0.0
        %2248 = vmatpush1.msra.mxu0 0.0
        %2249 = vmatprep.subr.mxu0 0.0
        %2250 = vmatpush1.msra.mxu0 0.0
        %2251 = vmatprep.subr.mxu0 0.0
        %2252 = vmatpush1.msra.mxu0 0.0
        %2253 = vmatprep.subr.mxu0 0.0
        %2254 = vmatpush1.msra.mxu0 0.0
        %2255 = vmatprep.subr.mxu0 0.0
        %2256 = vmatpush1.msra.mxu0 0.0
        %2257 = vmatprep.subr.mxu0 0.0
        %2258 = vmatpush1.msra.mxu0 0.0
        %2259 = vmatprep.subr.mxu0 0.0
        %2260 = vmatpush1.msra.mxu0 0.0
        %2261 = vmatprep.subr.mxu0 0.0
        %2262 = vmatpush1.msra.mxu0 0.0
        %2263 = vmatprep.subr.mxu0 0.0
        %2264 = vmatpush1.msra.mxu0 0.0
        %2265 = vmatprep.subr.mxu0 0.0
        %2266 = vmatpush1.msra.mxu0 0.0
        %2267 = vmatprep.subr.mxu0 0.0
        %2268 = vmatpush1.msra.mxu0 0.0
        %2269 = vmatprep.subr.mxu0 0.0
        %2270 = vmatpush1.msra.mxu0 0.0
        %2271 = vmatprep.subr.mxu0 0.0
        %2272 = vmatpush1.msra.mxu0 0.0
        %2273 = vmatprep.subr.mxu0 0.0
        %2274 = vmatpush1.msra.mxu0 0.0
        %2275 = vmatprep.subr.mxu0 0.0
        %2276 = vmatpush1.msra.mxu0 0.0
        %2277 = vmatprep.subr.mxu0 0.0
        %2278 = vmatpush1.msra.mxu0 0.0
        %2279 = vmatprep.mubr.f32.mxu0 0.0
        %2280 = vmatmul.mubr.f32.gmra.mrb[0].mxu0 %v2168
        %v2281 = vpop.f32.mrb[0].mxu0
        %v2282 = vadd.f32 0.0, %v2281
        %v2283 = vpop.f32.mrb[0].mxu0
        %2284 = vmatprep.mubr.f32.mxu0 0.0
        %2285 = vmatmul.mubr.f32.gmra.mrb[0].mxu0 %v2171
        %v2286 = vpop.f32.mrb[0].mxu0
        %v2287 = vadd.f32 0.0, %v2286
        %v2288 = vpop.f32.mrb[0].mxu0
        %2289 = vmatprep.mubr.f32.mxu0 0.0
        %2290 = vmatmul.mubr.f32.gmra.mrb[0].mxu0 %v2174
        %v2291 = vpop.f32.mrb[0].mxu0
        %v2292 = vadd.f32 0.0, %v2291
        %v2293 = vpop.f32.mrb[0].mxu0
        %2294 = vmatprep.mubr.f32.mxu0 0.0
        %2295 = vmatmul.mubr.f32.gmra.mrb[0].mxu0 %v2177
        %v2296 = vpop.f32.mrb[0].mxu0
        %v2297 = vadd.f32 0.0, %v2296
        %v2298 = vpop.f32.mrb[0].mxu0
        %2299 = vmatprep.mubr.f32.mxu0 0.0
        %2300 = vmatmul.mubr.f32.gmra.mrb[0].mxu0 %v2180
        %v2301 = vpop.f32.mrb[0].mxu0
        %v2302 = vadd.f32 0.0, %v2301
        %v2303 = vpop.f32.mrb[0].mxu0
        %2304 = vmatprep.mubr.f32.mxu0 0.0
        %2305 = vmatmul.mubr.f32.gmra.mrb[0].mxu0 %v2183
        %v2306 = vpop.f32.mrb[0].mxu0
        %v2307 = vadd.f32 0.0, %v2306
        %v2308 = vpop.f32.mrb[0].mxu0
        %2309 = vmatprep.mubr.f32.mxu0 0.0
        %2310 = vmatmul.mubr.f32.gmra.mrb[0].mxu0 %v2186
        %v2311 = vpop.f32.mrb[0].mxu0
        %v2312 = vadd.f32 0.0, %v2311
        %v2313 = vpop.f32.mrb[0].mxu0
        %2314 = vmatprep.mubr.f32.mxu0 0.0
        %2315 = vmatmul.mubr.f32.gmra.mrb[0].mxu0 %v2189
        %v2316 = vpop.f32.mrb[0].mxu0
        %v2317 = vadd.f32 0.0, %v2316
        %v2318 = vpop.f32.mrb[0].mxu0
        %2319 = vmatprep.mubr.f32.mxu0 0.0
        %2320 = vmatmul.mubr.f32.gmra.mrb[0].mxu0 %v2192
        %v2321 = vpop.f32.mrb[0].mxu0
        %v2322 = vadd.f32 0.0, %v2321
        %v2323 = vpop.f32.mrb[0].mxu0
        %2324 = vmatprep.mubr.f32.mxu0 0.0
        %2325 = vmatmul.mubr.f32.gmra.mrb[0].mxu0 %v2195
        %v2326 = vpop.f32.mrb[0].mxu0
        %v2327 = vadd.f32 0.0, %v2326
        %v2328 = vpop.f32.mrb[0].mxu0
        %2329 = vmatprep.mubr.f32.mxu0 0.0
        %2330 = vmatmul.mubr.f32.gmra.mrb[0].mxu0 %v2198
        %v2331 = vpop.f32.mrb[0].mxu0
        %v2332 = vadd.f32 0.0, %v2331
        %v2333 = vpop.f32.mrb[0].mxu0
        %2334 = vmatprep.mubr.f32.mxu0 0.0
        %2335 = vmatmul.mubr.f32.gmra.mrb[0].mxu0 %v2201
        %v2336 = vpop.f32.mrb[0].mxu0
        %v2337 = vadd.f32 0.0, %v2336
        %v2338 = vpop.f32.mrb[0].mxu0
        %2339 = vmatprep.mubr.f32.mxu0 0.0
        %2340 = vmatmul.mubr.f32.gmra.mrb[0].mxu0 %v2204
        %v2341 = vpop.f32.mrb[0].mxu0
        %v2342 = vadd.f32 0.0, %v2341
        %v2343 = vpop.f32.mrb[0].mxu0
        %2344 = vmatprep.mubr.f32.mxu0 0.0
        %2345 = vmatmul.mubr.f32.gmra.mrb[0].mxu0 %v2207
        %v2346 = vpop.f32.mrb[0].mxu0
        %v2347 = vadd.f32 0.0, %v2346
        %v2348 = vpop.f32.mrb[0].mxu0
        %2349 = vmatprep.mubr.f32.mxu0 0.0
        %2350 = vmatmul.mubr.f32.gmra.mrb[0].mxu0 %v2210
        %v2351 = vpop.f32.mrb[0].mxu0
        %v2352 = vadd.f32 0.0, %v2351
        %v2353 = vpop.f32.mrb[0].mxu0
        %2354 = vmatprep.mubr.f32.mxu0 0.0
        %2355 = vmatmul.mubr.f32.gmra.mrb[0].mxu0 %v2213
        %v2356 = vpop.f32.mrb[0].mxu0
        %v2357 = vadd.f32 0.0, %v2356
        %v2358 = vpop.f32.mrb[0].mxu0
        %2359 = vdwg.mxu0
        %v2361 = vsel %vm333, %v2115, 0
        %v2364 = vsel %vm333, %v2116, 0
        %v2367 = vsel %vm333, %v2117, 0
        %v2370 = vsel %vm333, %v2118, 0
        %v2373 = vsel %vm333, %v2119, 0
        %v2376 = vsel %vm333, %v2120, 0
        %v2379 = vsel %vm333, %v2121, 0
        %v2382 = vsel %vm333, %v2122, 0
        %v2385 = vsel %vm333, %v2123, 0
        %v2388 = vsel %vm333, %v2124, 0
        %v2391 = vsel %vm333, %v2125, 0
        %v2394 = vsel %vm333, %v2126, 0
        %v2397 = vsel %vm333, %v2127, 0
        %v2400 = vsel %vm333, %v2128, 0
        %v2403 = vsel %vm333, %v2129, 0
        %v2406 = vsel %vm333, %v2130, 0
        %2408 = vmatprep.subr.mxu0 0.0
        %2409 = vmatpush1.msra.mxu0 %v2163
        %2410 = vmatprep.subr.mxu0 0.0
        %2411 = vmatpush1.msra.mxu0 %v2164
        %2412 = vmatprep.subr.mxu0 0.0
        %2413 = vmatpush1.msra.mxu0 0.0
        %2414 = vmatprep.subr.mxu0 0.0
        %2415 = vmatpush1.msra.mxu0 0.0
        %2416 = vmatprep.subr.mxu0 0.0
        %2417 = vmatpush1.msra.mxu0 0.0
        %2418 = vmatprep.subr.mxu0 0.0
        %2419 = vmatpush1.msra.mxu0 0.0
        %2420 = vmatprep.subr.mxu0 0.0
        %2421 = vmatpush1.msra.mxu0 0.0
        %2422 = vmatprep.subr.mxu0 0.0
        %2423 = vmatpush1.msra.mxu0 0.0
        %2424 = vmatprep.subr.mxu0 0.0
        %2425 = vmatpush1.msra.mxu0 0.0
        %2426 = vmatprep.subr.mxu0 0.0
        %2427 = vmatpush1.msra.mxu0 0.0
        %2428 = vmatprep.subr.mxu0 0.0
        %2429 = vmatpush1.msra.mxu0 0.0
        %2430 = vmatprep.subr.mxu0 0.0
        %2431 = vmatpush1.msra.mxu0 0.0
        %2432 = vmatprep.subr.mxu0 0.0
        %2433 = vmatpush1.msra.mxu0 0.0
        %2434 = vmatprep.subr.mxu0 0.0
        %2435 = vmatpush1.msra.mxu0 0.0
        %2436 = vmatprep.subr.mxu0 0.0
        %2437 = vmatpush1.msra.mxu0 0.0
        %2438 = vmatprep.subr.mxu0 0.0
        %2439 = vmatpush1.msra.mxu0 0.0
        %2440 = vmatprep.subr.mxu0 0.0
        %2441 = vmatpush1.msra.mxu0 0.0
        %2442 = vmatprep.subr.mxu0 0.0
        %2443 = vmatpush1.msra.mxu0 0.0
        %2444 = vmatprep.subr.mxu0 0.0
        %2445 = vmatpush1.msra.mxu0 0.0
        %2446 = vmatprep.subr.mxu0 0.0
        %2447 = vmatpush1.msra.mxu0 0.0
        %2448 = vmatprep.subr.mxu0 0.0
        %2449 = vmatpush1.msra.mxu0 0.0
        %2450 = vmatprep.subr.mxu0 0.0
        %2451 = vmatpush1.msra.mxu0 0.0
        %2452 = vmatprep.subr.mxu0 0.0
        %2453 = vmatpush1.msra.mxu0 0.0
        %2454 = vmatprep.subr.mxu0 0.0
        %2455 = vmatpush1.msra.mxu0 0.0
        %2456 = vmatprep.subr.mxu0 0.0
        %2457 = vmatpush1.msra.mxu0 0.0
        %2458 = vmatprep.subr.mxu0 0.0
        %2459 = vmatpush1.msra.mxu0 0.0
        %2460 = vmatprep.subr.mxu0 0.0
        %2461 = vmatpush1.msra.mxu0 0.0
        %2462 = vmatprep.subr.mxu0 0.0
        %2463 = vmatpush1.msra.mxu0 0.0
        %2464 = vmatprep.subr.mxu0 0.0
        %2465 = vmatpush1.msra.mxu0 0.0
        %2466 = vmatprep.subr.mxu0 0.0
        %2467 = vmatpush1.msra.mxu0 0.0
        %2468 = vmatprep.subr.mxu0 0.0
        %2469 = vmatpush1.msra.mxu0 0.0
        %2470 = vmatprep.subr.mxu0 0.0
        %2471 = vmatpush1.msra.mxu0 0.0
        %2472 = vmatprep.mubr.f32.mxu0 0.0
        %2473 = vmatmul.mubr.f32.gmra.mrb[0].mxu0 %v2361
        %v2474 = vpop.f32.mrb[0].mxu0
        %v2475 = vadd.f32 %v2282, %v2474
        %v2476 = vpop.f32.mrb[0].mxu0
        %2477 = vmatprep.mubr.f32.mxu0 0.0
        %2478 = vmatmul.mubr.f32.gmra.mrb[0].mxu0 %v2364
        %v2479 = vpop.f32.mrb[0].mxu0
        %v2480 = vadd.f32 %v2287, %v2479
        %v2481 = vpop.f32.mrb[0].mxu0
        %2482 = vmatprep.mubr.f32.mxu0 0.0
        %2483 = vmatmul.mubr.f32.gmra.mrb[0].mxu0 %v2367
        %v2484 = vpop.f32.mrb[0].mxu0
        %v2485 = vadd.f32 %v2292, %v2484
        %v2486 = vpop.f32.mrb[0].mxu0
        %2487 = vmatprep.mubr.f32.mxu0 0.0
        %2488 = vmatmul.mubr.f32.gmra.mrb[0].mxu0 %v2370
        %v2489 = vpop.f32.mrb[0].mxu0
        %v2490 = vadd.f32 %v2297, %v2489
        %v2491 = vpop.f32.mrb[0].mxu0
        %2492 = vmatprep.mubr.f32.mxu0 0.0
        %2493 = vmatmul.mubr.f32.gmra.mrb[0].mxu0 %v2373
        %v2494 = vpop.f32.mrb[0].mxu0
        %v2495 = vadd.f32 %v2302, %v2494
        %v2496 = vpop.f32.mrb[0].mxu0
        %2497 = vmatprep.mubr.f32.mxu0 0.0
        %2498 = vmatmul.mubr.f32.gmra.mrb[0].mxu0 %v2376
        %v2499 = vpop.f32.mrb[0].mxu0
        %v2500 = vadd.f32 %v2307, %v2499
        %v2501 = vpop.f32.mrb[0].mxu0
        %2502 = vmatprep.mubr.f32.mxu0 0.0
        %2503 = vmatmul.mubr.f32.gmra.mrb[0].mxu0 %v2379
        %v2504 = vpop.f32.mrb[0].mxu0
        %v2505 = vadd.f32 %v2312, %v2504
        %v2506 = vpop.f32.mrb[0].mxu0
        %2507 = vmatprep.mubr.f32.mxu0 0.0
        %2508 = vmatmul.mubr.f32.gmra.mrb[0].mxu0 %v2382
        %v2509 = vpop.f32.mrb[0].mxu0
        %v2510 = vadd.f32 %v2317, %v2509
        %v2511 = vpop.f32.mrb[0].mxu0
        %2512 = vmatprep.mubr.f32.mxu0 0.0
        %2513 = vmatmul.mubr.f32.gmra.mrb[0].mxu0 %v2385
        %v2514 = vpop.f32.mrb[0].mxu0
        %v2515 = vadd.f32 %v2322, %v2514
        %v2516 = vpop.f32.mrb[0].mxu0
        %2517 = vmatprep.mubr.f32.mxu0 0.0
        %2518 = vmatmul.mubr.f32.gmra.mrb[0].mxu0 %v2388
        %v2519 = vpop.f32.mrb[0].mxu0
        %v2520 = vadd.f32 %v2327, %v2519
        %v2521 = vpop.f32.mrb[0].mxu0
        %2522 = vmatprep.mubr.f32.mxu0 0.0
        %2523 = vmatmul.mubr.f32.gmra.mrb[0].mxu0 %v2391
        %v2524 = vpop.f32.mrb[0].mxu0
        %v2525 = vadd.f32 %v2332, %v2524
        %v2526 = vpop.f32.mrb[0].mxu0
        %2527 = vmatprep.mubr.f32.mxu0 0.0
        %2528 = vmatmul.mubr.f32.gmra.mrb[0].mxu0 %v2394
        %v2529 = vpop.f32.mrb[0].mxu0
        %v2530 = vadd.f32 %v2337, %v2529
        %v2531 = vpop.f32.mrb[0].mxu0
        %2532 = vmatprep.mubr.f32.mxu0 0.0
        %2533 = vmatmul.mubr.f32.gmra.mrb[0].mxu0 %v2397
        %v2534 = vpop.f32.mrb[0].mxu0
        %v2535 = vadd.f32 %v2342, %v2534
        %v2536 = vpop.f32.mrb[0].mxu0
        %2537 = vmatprep.mubr.f32.mxu0 0.0
        %2538 = vmatmul.mubr.f32.gmra.mrb[0].mxu0 %v2400
        %v2539 = vpop.f32.mrb[0].mxu0
        %v2540 = vadd.f32 %v2347, %v2539
        %v2541 = vpop.f32.mrb[0].mxu0
        %2542 = vmatprep.mubr.f32.mxu0 0.0
        %2543 = vmatmul.mubr.f32.gmra.mrb[0].mxu0 %v2403
        %v2544 = vpop.f32.mrb[0].mxu0
        %v2545 = vadd.f32 %v2352, %v2544
        %v2546 = vpop.f32.mrb[0].mxu0
        %2547 = vmatprep.mubr.f32.mxu0 0.0
        %2548 = vmatmul.mubr.f32.gmra.mrb[0].mxu0 %v2406
        %v2549 = vpop.f32.mrb[0].mxu0
        %v2550 = vadd.f32 %v2357, %v2549
        %v2551 = vpop.f32.mrb[0].mxu0
        %2552 = vdwg.mxu0
        %v2553 = vld [vmem:[%s3 + $0x20] sm:$0xff]
        %v2554 = vld [vmem:[%s3 + $0x28] sm:$0xff]
        %v2556 = vsel %vm333, %v2147, 0
        %v2559 = vsel %vm333, %v2148, 0
        %v2562 = vsel %vm333, %v2149, 0
        %v2565 = vsel %vm333, %v2150, 0
        %v2568 = vsel %vm333, %v2151, 0
        %v2571 = vsel %vm333, %v2152, 0
        %v2574 = vsel %vm333, %v2153, 0
        %v2577 = vsel %vm333, %v2154, 0
        %v2580 = vsel %vm333, %v2155, 0
        %v2583 = vsel %vm333, %v2156, 0
        %v2586 = vsel %vm333, %v2157, 0
        %v2589 = vsel %vm333, %v2158, 0
        %v2592 = vsel %vm333, %v2159, 0
        %v2595 = vsel %vm333, %v2160, 0
        %v2598 = vsel %vm333, %v2161, 0
        %v2601 = vsel %vm333, %v2162, 0
        %2603 = vmatprep.subr.mxu0 0.0
        %2604 = vmatpush1.msra.mxu0 %v2553
        %2605 = vmatprep.subr.mxu0 0.0
        %2606 = vmatpush1.msra.mxu0 %v2554
        %2607 = vmatprep.subr.mxu0 0.0
        %2608 = vmatpush1.msra.mxu0 0.0
        %2609 = vmatprep.subr.mxu0 0.0
        %2610 = vmatpush1.msra.mxu0 0.0
        %2611 = vmatprep.subr.mxu0 0.0
        %2612 = vmatpush1.msra.mxu0 0.0
        %2613 = vmatprep.subr.mxu0 0.0
        %2614 = vmatpush1.msra.mxu0 0.0
        %2615 = vmatprep.subr.mxu0 0.0
        %2616 = vmatpush1.msra.mxu0 0.0
        %2617 = vmatprep.subr.mxu0 0.0
        %2618 = vmatpush1.msra.mxu0 0.0
        %2619 = vmatprep.subr.mxu0 0.0
        %2620 = vmatpush1.msra.mxu0 0.0
        %2621 = vmatprep.subr.mxu0 0.0
        %2622 = vmatpush1.msra.mxu0 0.0
        %2623 = vmatprep.subr.mxu0 0.0
        %2624 = vmatpush1.msra.mxu0 0.0
        %2625 = vmatprep.subr.mxu0 0.0
        %2626 = vmatpush1.msra.mxu0 0.0
        %2627 = vmatprep.subr.mxu0 0.0
        %2628 = vmatpush1.msra.mxu0 0.0
        %2629 = vmatprep.subr.mxu0 0.0
        %2630 = vmatpush1.msra.mxu0 0.0
        %2631 = vmatprep.subr.mxu0 0.0
        %2632 = vmatpush1.msra.mxu0 0.0
        %2633 = vmatprep.subr.mxu0 0.0
        %2634 = vmatpush1.msra.mxu0 0.0
        %2635 = vmatprep.subr.mxu0 0.0
        %2636 = vmatpush1.msra.mxu0 0.0
        %2637 = vmatprep.subr.mxu0 0.0
        %2638 = vmatpush1.msra.mxu0 0.0
        %2639 = vmatprep.subr.mxu0 0.0
        %2640 = vmatpush1.msra.mxu0 0.0
        %2641 = vmatprep.subr.mxu0 0.0
        %2642 = vmatpush1.msra.mxu0 0.0
        %2643 = vmatprep.subr.mxu0 0.0
        %2644 = vmatpush1.msra.mxu0 0.0
        %2645 = vmatprep.subr.mxu0 0.0
        %2646 = vmatpush1.msra.mxu0 0.0
        %2647 = vmatprep.subr.mxu0 0.0
        %2648 = vmatpush1.msra.mxu0 0.0
        %2649 = vmatprep.subr.mxu0 0.0
        %2650 = vmatpush1.msra.mxu0 0.0
        %2651 = vmatprep.subr.mxu0 0.0
        %2652 = vmatpush1.msra.mxu0 0.0
        %2653 = vmatprep.subr.mxu0 0.0
        %2654 = vmatpush1.msra.mxu0 0.0
        %2655 = vmatprep.subr.mxu0 0.0
        %2656 = vmatpush1.msra.mxu0 0.0
        %2657 = vmatprep.subr.mxu0 0.0
        %2658 = vmatpush1.msra.mxu0 0.0
        %2659 = vmatprep.subr.mxu0 0.0
        %2660 = vmatpush1.msra.mxu0 0.0
        %2661 = vmatprep.subr.mxu0 0.0
        %2662 = vmatpush1.msra.mxu0 0.0
        %2663 = vmatprep.subr.mxu0 0.0
        %2664 = vmatpush1.msra.mxu0 0.0
        %2665 = vmatprep.subr.mxu0 0.0
        %2666 = vmatpush1.msra.mxu0 0.0
        %2667 = vmatprep.mubr.f32.mxu0 0.0
        %2668 = vmatmul.mubr.f32.gmra.mrb[0].mxu0 %v2556
        %v2669 = vpop.f32.mrb[0].mxu0
        %v2670 = vadd.f32 0.0, %v2669
        %v2671 = vpop.f32.mrb[0].mxu0
        %2672 = vmatprep.mubr.f32.mxu0 0.0
        %2673 = vmatmul.mubr.f32.gmra.mrb[0].mxu0 %v2559
        %v2674 = vpop.f32.mrb[0].mxu0
        %v2675 = vadd.f32 0.0, %v2674
        %v2676 = vpop.f32.mrb[0].mxu0
        %2677 = vmatprep.mubr.f32.mxu0 0.0
        %2678 = vmatmul.mubr.f32.gmra.mrb[0].mxu0 %v2562
        %v2679 = vpop.f32.mrb[0].mxu0
        %v2680 = vadd.f32 0.0, %v2679
        %v2681 = vpop.f32.mrb[0].mxu0
        %2682 = vmatprep.mubr.f32.mxu0 0.0
        %2683 = vmatmul.mubr.f32.gmra.mrb[0].mxu0 %v2565
        %v2684 = vpop.f32.mrb[0].mxu0
        %v2685 = vadd.f32 0.0, %v2684
        %v2686 = vpop.f32.mrb[0].mxu0
        %2687 = vmatprep.mubr.f32.mxu0 0.0
        %2688 = vmatmul.mubr.f32.gmra.mrb[0].mxu0 %v2568
        %v2689 = vpop.f32.mrb[0].mxu0
        %v2690 = vadd.f32 0.0, %v2689
        %v2691 = vpop.f32.mrb[0].mxu0
        %2692 = vmatprep.mubr.f32.mxu0 0.0
        %2693 = vmatmul.mubr.f32.gmra.mrb[0].mxu0 %v2571
        %v2694 = vpop.f32.mrb[0].mxu0
        %v2695 = vadd.f32 0.0, %v2694
        %v2696 = vpop.f32.mrb[0].mxu0
        %2697 = vmatprep.mubr.f32.mxu0 0.0
        %2698 = vmatmul.mubr.f32.gmra.mrb[0].mxu0 %v2574
        %v2699 = vpop.f32.mrb[0].mxu0
        %v2700 = vadd.f32 0.0, %v2699
        %v2701 = vpop.f32.mrb[0].mxu0
        %2702 = vmatprep.mubr.f32.mxu0 0.0
        %2703 = vmatmul.mubr.f32.gmra.mrb[0].mxu0 %v2577
        %v2704 = vpop.f32.mrb[0].mxu0
        %v2705 = vadd.f32 0.0, %v2704
        %v2706 = vpop.f32.mrb[0].mxu0
        %2707 = vmatprep.mubr.f32.mxu0 0.0
        %2708 = vmatmul.mubr.f32.gmra.mrb[0].mxu0 %v2580
        %v2709 = vpop.f32.mrb[0].mxu0
        %v2710 = vadd.f32 0.0, %v2709
        %v2711 = vpop.f32.mrb[0].mxu0
        %2712 = vmatprep.mubr.f32.mxu0 0.0
        %2713 = vmatmul.mubr.f32.gmra.mrb[0].mxu0 %v2583
        %v2714 = vpop.f32.mrb[0].mxu0
        %v2715 = vadd.f32 0.0, %v2714
        %v2716 = vpop.f32.mrb[0].mxu0
        %2717 = vmatprep.mubr.f32.mxu0 0.0
        %2718 = vmatmul.mubr.f32.gmra.mrb[0].mxu0 %v2586
        %v2719 = vpop.f32.mrb[0].mxu0
        %v2720 = vadd.f32 0.0, %v2719
        %v2721 = vpop.f32.mrb[0].mxu0
        %2722 = vmatprep.mubr.f32.mxu0 0.0
        %2723 = vmatmul.mubr.f32.gmra.mrb[0].mxu0 %v2589
        %v2724 = vpop.f32.mrb[0].mxu0
        %v2725 = vadd.f32 0.0, %v2724
        %v2726 = vpop.f32.mrb[0].mxu0
        %2727 = vmatprep.mubr.f32.mxu0 0.0
        %2728 = vmatmul.mubr.f32.gmra.mrb[0].mxu0 %v2592
        %v2729 = vpop.f32.mrb[0].mxu0
        %v2730 = vadd.f32 0.0, %v2729
        %v2731 = vpop.f32.mrb[0].mxu0
        %2732 = vmatprep.mubr.f32.mxu0 0.0
        %2733 = vmatmul.mubr.f32.gmra.mrb[0].mxu0 %v2595
        %v2734 = vpop.f32.mrb[0].mxu0
        %v2735 = vadd.f32 0.0, %v2734
        %v2736 = vpop.f32.mrb[0].mxu0
        %2737 = vmatprep.mubr.f32.mxu0 0.0
        %2738 = vmatmul.mubr.f32.gmra.mrb[0].mxu0 %v2598
        %v2739 = vpop.f32.mrb[0].mxu0
        %v2740 = vadd.f32 0.0, %v2739
        %v2741 = vpop.f32.mrb[0].mxu0
        %2742 = vmatprep.mubr.f32.mxu0 0.0
        %2743 = vmatmul.mubr.f32.gmra.mrb[0].mxu0 %v2601
        %v2744 = vpop.f32.mrb[0].mxu0
        %v2745 = vadd.f32 0.0, %v2744
        %v2746 = vpop.f32.mrb[0].mxu0
        %2747 = vdwg.mxu0
        %v2748 = vadd.f32 %v2475, %v2670
        %v2749 = vadd.f32 %v2480, %v2675
        %v2750 = vadd.f32 %v2485, %v2680
        %v2751 = vadd.f32 %v2490, %v2685
        %v2752 = vadd.f32 %v2495, %v2690
        %v2753 = vadd.f32 %v2500, %v2695
        %v2754 = vadd.f32 %v2505, %v2700
        %v2755 = vadd.f32 %v2510, %v2705
        %v2756 = vadd.f32 %v2515, %v2710
        %v2757 = vadd.f32 %v2520, %v2715
        %v2758 = vadd.f32 %v2525, %v2720
        %v2759 = vadd.f32 %v2530, %v2725
        %v2760 = vadd.f32 %v2535, %v2730
        %v2761 = vadd.f32 %v2540, %v2735
        %v2762 = vadd.f32 %v2545, %v2740
        %v2763 = vadd.f32 %v2550, %v2745
        %v2764 = vmax.f32 %v2748, 0.0
        %v2765 = vmax.f32 %v2749, 0.0
        %v2766 = vmax.f32 %v2750, 0.0
        %v2767 = vmax.f32 %v2751, 0.0
        %v2768 = vmax.f32 %v2752, 0.0
        %v2769 = vmax.f32 %v2753, 0.0
        %v2770 = vmax.f32 %v2754, 0.0
        %v2771 = vmax.f32 %v2755, 0.0
        %v2772 = vmax.f32 %v2756, 0.0
        %v2773 = vmax.f32 %v2757, 0.0
        %v2774 = vmax.f32 %v2758, 0.0
        %v2775 = vmax.f32 %v2759, 0.0
        %v2776 = vmax.f32 %v2760, 0.0
        %v2777 = vmax.f32 %v2761, 0.0
        %v2778 = vmax.f32 %v2762, 0.0
        %v2779 = vmax.f32 %v2763, 0.0
        %2780 = vst.msk [vmem:[#allocation2 + $0x8] sm:$0xff] %vm333, %v2764
        %2781 = vst.msk [vmem:[#allocation2 + $0x10] sm:$0xff] %vm333, %v2765
        %2782 = vst.msk [vmem:[#allocation2 + $0x18] sm:$0xff] %vm333, %v2766
        %2783 = vst.msk [vmem:[#allocation2 + $0x20] sm:$0xff] %vm333, %v2767
        %2784 = vst.msk [vmem:[#allocation2 + $0x28] sm:$0xff] %vm333, %v2768
        %2785 = vst.msk [vmem:[#allocation2 + $0x30] sm:$0xff] %vm333, %v2769
        %2786 = vst.msk [vmem:[#allocation2 + $0x38] sm:$0xff] %vm333, %v2770
        %2787 = vst.msk [vmem:[#allocation2 + $0x40] sm:$0xff] %vm333, %v2771
        %2788 = vst.msk [vmem:[#allocation2 + $0x48] sm:$0xff] %vm333, %v2772
        %2789 = vst.msk [vmem:[#allocation2 + $0x50] sm:$0xff] %vm333, %v2773
        %2790 = vst.msk [vmem:[#allocation2 + $0x58] sm:$0xff] %vm333, %v2774
        %2791 = vst.msk [vmem:[#allocation2 + $0x60] sm:$0xff] %vm333, %v2775
        %2792 = vst.msk [vmem:[#allocation2 + $0x68] sm:$0xff] %vm333, %v2776
        %2793 = vst.msk [vmem:[#allocation2 + $0x70] sm:$0xff] %vm333, %v2777
        %2794 = vst.msk [vmem:[#allocation2 + $0x78] sm:$0xff] %vm333, %v2778
        %2795 = vst.msk [vmem:[#allocation2 + $0x80] sm:$0xff] %vm333, %v2779
        %v2796 = vld [vmem:[#allocation2 + $0x7] sm:$0xff]
        %v2797 = vld [vmem:[#allocation2 + $0xf] sm:$0xff]
        %v2798 = vld [vmem:[#allocation2 + $0x17] sm:$0xff]
        %v2799 = vld [vmem:[#allocation2 + $0x1f] sm:$0xff]
        %v2800 = vld [vmem:[#allocation2 + $0x27] sm:$0xff]
        %v2801 = vld [vmem:[#allocation2 + $0x2f] sm:$0xff]
        %v2802 = vld [vmem:[#allocation2 + $0x37] sm:$0xff]
        %v2803 = vld [vmem:[#allocation2 + $0x3f] sm:$0xff]
        %v2804 = vld [vmem:[#allocation2 + $0x47] sm:$0xff]
        %v2805 = vld [vmem:[#allocation2 + $0x4f] sm:$0xff]
        %v2806 = vld [vmem:[#allocation2 + $0x57] sm:$0xff]
        %v2807 = vld [vmem:[#allocation2 + $0x5f] sm:$0xff]
        %v2808 = vld [vmem:[#allocation2 + $0x67] sm:$0xff]
        %v2809 = vld [vmem:[#allocation2 + $0x6f] sm:$0xff]
        %v2810 = vld [vmem:[#allocation2 + $0x77] sm:$0xff]
        %v2811 = vld [vmem:[#allocation2 + $0x7f] sm:$0xff]
        %v2812 = vmul.f32 %v2796, %v609
        %v2813 = vmul.f32 %v2797, %v610
        %v2814 = vmul.f32 %v2798, %v611
        %v2815 = vmul.f32 %v2799, %v612
        %v2816 = vmul.f32 %v2800, %v613
        %v2817 = vmul.f32 %v2801, %v614
        %v2818 = vmul.f32 %v2802, %v615
        %v2819 = vmul.f32 %v2803, %v616
        %v2820 = vmul.f32 %v2804, %v617
        %v2821 = vmul.f32 %v2805, %v618
        %v2822 = vmul.f32 %v2806, %v619
        %v2823 = vmul.f32 %v2807, %v620
        %v2824 = vmul.f32 %v2808, %v621
        %v2825 = vmul.f32 %v2809, %v622
        %v2826 = vmul.f32 %v2810, %v623
        %v2827 = vmul.f32 %v2811, %v624
        %v2828 = vld [vmem:[#allocation2 + $0x9] sm:$0xff]
        %v2829 = vld [vmem:[#allocation2 + $0x11] sm:$0xff]
        %v2830 = vld [vmem:[#allocation2 + $0x19] sm:$0xff]
        %v2831 = vld [vmem:[#allocation2 + $0x21] sm:$0xff]
        %v2832 = vld [vmem:[#allocation2 + $0x29] sm:$0xff]
        %v2833 = vld [vmem:[#allocation2 + $0x31] sm:$0xff]
        %v2834 = vld [vmem:[#allocation2 + $0x39] sm:$0xff]
        %v2835 = vld [vmem:[#allocation2 + $0x41] sm:$0xff]
        %v2836 = vld [vmem:[#allocation2 + $0x49] sm:$0xff]
        %v2837 = vld [vmem:[#allocation2 + $0x51] sm:$0xff]
        %v2838 = vld [vmem:[#allocation2 + $0x59] sm:$0xff]
        %v2839 = vld [vmem:[#allocation2 + $0x61] sm:$0xff]
        %v2840 = vld [vmem:[#allocation2 + $0x69] sm:$0xff]
        %v2841 = vld [vmem:[#allocation2 + $0x71] sm:$0xff]
        %v2842 = vld [vmem:[#allocation2 + $0x79] sm:$0xff]
        %v2843 = vld [vmem:[#allocation2 + $0x81] sm:$0xff]
        %v2844 = vmul.f32 %v2828, %v657
        %v2845 = vmul.f32 %v2829, %v658
        %v2846 = vmul.f32 %v2830, %v659
        %v2847 = vmul.f32 %v2831, %v660
        %v2848 = vmul.f32 %v2832, %v661
        %v2849 = vmul.f32 %v2833, %v662
        %v2850 = vmul.f32 %v2834, %v663
        %v2851 = vmul.f32 %v2835, %v664
        %v2852 = vmul.f32 %v2836, %v665
        %v2853 = vmul.f32 %v2837, %v666
        %v2854 = vmul.f32 %v2838, %v667
        %v2855 = vmul.f32 %v2839, %v668
        %v2856 = vmul.f32 %v2840, %v669
        %v2857 = vmul.f32 %v2841, %v670
        %v2858 = vmul.f32 %v2842, %v671
        %v2859 = vmul.f32 %v2843, %v672
        %v2860 = vld [vmem:[%s4] sm:$0xff]
        %v2861 = vld [vmem:[%s4 + $0x8] sm:$0xff]
        %v2862 = vld [vmem:[%s4 + $0x10] sm:$0xff]
        %v2863 = vld [vmem:[%s4 + $0x18] sm:$0xff]
        %v2865 = vsel %vm333, %v2764, 0
        %v2868 = vsel %vm333, %v2765, 0
        %v2871 = vsel %vm333, %v2766, 0
        %v2874 = vsel %vm333, %v2767, 0
        %v2877 = vsel %vm333, %v2768, 0
        %v2880 = vsel %vm333, %v2769, 0
        %v2883 = vsel %vm333, %v2770, 0
        %v2886 = vsel %vm333, %v2771, 0
        %v2889 = vsel %vm333, %v2772, 0
        %v2892 = vsel %vm333, %v2773, 0
        %v2895 = vsel %vm333, %v2774, 0
        %v2898 = vsel %vm333, %v2775, 0
        %v2901 = vsel %vm333, %v2776, 0
        %v2904 = vsel %vm333, %v2777, 0
        %v2907 = vsel %vm333, %v2778, 0
        %v2910 = vsel %vm333, %v2779, 0
        %2912 = vmatprep.subr.mxu0 0.0
        %2913 = vmatpush1.msra.mxu0 %v2862
        %2914 = vmatprep.subr.mxu0 0.0
        %2915 = vmatpush1.msra.mxu0 %v2863
        %2916 = vmatprep.subr.mxu0 0.0
        %2917 = vmatpush1.msra.mxu0 0.0
        %2918 = vmatprep.subr.mxu0 0.0
        %2919 = vmatpush1.msra.mxu0 0.0
        %2920 = vmatprep.subr.mxu0 0.0
        %2921 = vmatpush1.msra.mxu0 0.0
        %2922 = vmatprep.subr.mxu0 0.0
        %2923 = vmatpush1.msra.mxu0 0.0
        %2924 = vmatprep.subr.mxu0 0.0
        %2925 = vmatpush1.msra.mxu0 0.0
        %2926 = vmatprep.subr.mxu0 0.0
        %2927 = vmatpush1.msra.mxu0 0.0
        %2928 = vmatprep.subr.mxu0 0.0
        %2929 = vmatpush1.msra.mxu0 0.0
        %2930 = vmatprep.subr.mxu0 0.0
        %2931 = vmatpush1.msra.mxu0 0.0
        %2932 = vmatprep.subr.mxu0 0.0
        %2933 = vmatpush1.msra.mxu0 0.0
        %2934 = vmatprep.subr.mxu0 0.0
        %2935 = vmatpush1.msra.mxu0 0.0
        %2936 = vmatprep.subr.mxu0 0.0
        %2937 = vmatpush1.msra.mxu0 0.0
        %2938 = vmatprep.subr.mxu0 0.0
        %2939 = vmatpush1.msra.mxu0 0.0
        %2940 = vmatprep.subr.mxu0 0.0
        %2941 = vmatpush1.msra.mxu0 0.0
        %2942 = vmatprep.subr.mxu0 0.0
        %2943 = vmatpush1.msra.mxu0 0.0
        %2944 = vmatprep.subr.mxu0 0.0
        %2945 = vmatpush1.msra.mxu0 0.0
        %2946 = vmatprep.subr.mxu0 0.0
        %2947 = vmatpush1.msra.mxu0 0.0
        %2948 = vmatprep.subr.mxu0 0.0
        %2949 = vmatpush1.msra.mxu0 0.0
        %2950 = vmatprep.subr.mxu0 0.0
        %2951 = vmatpush1.msra.mxu0 0.0
        %2952 = vmatprep.subr.mxu0 0.0
        %2953 = vmatpush1.msra.mxu0 0.0
        %2954 = vmatprep.subr.mxu0 0.0
        %2955 = vmatpush1.msra.mxu0 0.0
        %2956 = vmatprep.subr.mxu0 0.0
        %2957 = vmatpush1.msra.mxu0 0.0
        %2958 = vmatprep.subr.mxu0 0.0
        %2959 = vmatpush1.msra.mxu0 0.0
        %2960 = vmatprep.subr.mxu0 0.0
        %2961 = vmatpush1.msra.mxu0 0.0
        %2962 = vmatprep.subr.mxu0 0.0
        %2963 = vmatpush1.msra.mxu0 0.0
        %2964 = vmatprep.subr.mxu0 0.0
        %2965 = vmatpush1.msra.mxu0 0.0
        %2966 = vmatprep.subr.mxu0 0.0
        %2967 = vmatpush1.msra.mxu0 0.0
        %2968 = vmatprep.subr.mxu0 0.0
        %2969 = vmatpush1.msra.mxu0 0.0
        %2970 = vmatprep.subr.mxu0 0.0
        %2971 = vmatpush1.msra.mxu0 0.0
        %2972 = vmatprep.subr.mxu0 0.0
        %2973 = vmatpush1.msra.mxu0 0.0
        %2974 = vmatprep.subr.mxu0 0.0
        %2975 = vmatpush1.msra.mxu0 0.0
        %2976 = vmatprep.mubr.f32.mxu0 0.0
        %2977 = vmatmul.mubr.f32.gmra.mrb[0].mxu0 %v2865
        %v2978 = vpop.f32.mrb[0].mxu0
        %v2979 = vadd.f32 0.0, %v2978
        %v2980 = vpop.f32.mrb[0].mxu0
        %2981 = vmatprep.mubr.f32.mxu0 0.0
        %2982 = vmatmul.mubr.f32.gmra.mrb[0].mxu0 %v2868
        %v2983 = vpop.f32.mrb[0].mxu0
        %v2984 = vadd.f32 0.0, %v2983
        %v2985 = vpop.f32.mrb[0].mxu0
        %2986 = vmatprep.mubr.f32.mxu0 0.0
        %2987 = vmatmul.mubr.f32.gmra.mrb[0].mxu0 %v2871
        %v2988 = vpop.f32.mrb[0].mxu0
        %v2989 = vadd.f32 0.0, %v2988
        %v2990 = vpop.f32.mrb[0].mxu0
        %2991 = vmatprep.mubr.f32.mxu0 0.0
        %2992 = vmatmul.mubr.f32.gmra.mrb[0].mxu0 %v2874
        %v2993 = vpop.f32.mrb[0].mxu0
        %v2994 = vadd.f32 0.0, %v2993
        %v2995 = vpop.f32.mrb[0].mxu0
        %2996 = vmatprep.mubr.f32.mxu0 0.0
        %2997 = vmatmul.mubr.f32.gmra.mrb[0].mxu0 %v2877
        %v2998 = vpop.f32.mrb[0].mxu0
        %v2999 = vadd.f32 0.0, %v2998
        %v3000 = vpop.f32.mrb[0].mxu0
        %3001 = vmatprep.mubr.f32.mxu0 0.0
        %3002 = vmatmul.mubr.f32.gmra.mrb[0].mxu0 %v2880
        %v3003 = vpop.f32.mrb[0].mxu0
        %v3004 = vadd.f32 0.0, %v3003
        %v3005 = vpop.f32.mrb[0].mxu0
        %3006 = vmatprep.mubr.f32.mxu0 0.0
        %3007 = vmatmul.mubr.f32.gmra.mrb[0].mxu0 %v2883
        %v3008 = vpop.f32.mrb[0].mxu0
        %v3009 = vadd.f32 0.0, %v3008
        %v3010 = vpop.f32.mrb[0].mxu0
        %3011 = vmatprep.mubr.f32.mxu0 0.0
        %3012 = vmatmul.mubr.f32.gmra.mrb[0].mxu0 %v2886
        %v3013 = vpop.f32.mrb[0].mxu0
        %v3014 = vadd.f32 0.0, %v3013
        %v3015 = vpop.f32.mrb[0].mxu0
        %3016 = vmatprep.mubr.f32.mxu0 0.0
        %3017 = vmatmul.mubr.f32.gmra.mrb[0].mxu0 %v2889
        %v3018 = vpop.f32.mrb[0].mxu0
        %v3019 = vadd.f32 0.0, %v3018
        %v3020 = vpop.f32.mrb[0].mxu0
        %3021 = vmatprep.mubr.f32.mxu0 0.0
        %3022 = vmatmul.mubr.f32.gmra.mrb[0].mxu0 %v2892
        %v3023 = vpop.f32.mrb[0].mxu0
        %v3024 = vadd.f32 0.0, %v3023
        %v3025 = vpop.f32.mrb[0].mxu0
        %3026 = vmatprep.mubr.f32.mxu0 0.0
        %3027 = vmatmul.mubr.f32.gmra.mrb[0].mxu0 %v2895
        %v3028 = vpop.f32.mrb[0].mxu0
        %v3029 = vadd.f32 0.0, %v3028
        %v3030 = vpop.f32.mrb[0].mxu0
        %3031 = vmatprep.mubr.f32.mxu0 0.0
        %3032 = vmatmul.mubr.f32.gmra.mrb[0].mxu0 %v2898
        %v3033 = vpop.f32.mrb[0].mxu0
        %v3034 = vadd.f32 0.0, %v3033
        %v3035 = vpop.f32.mrb[0].mxu0
        %3036 = vmatprep.mubr.f32.mxu0 0.0
        %3037 = vmatmul.mubr.f32.gmra.mrb[0].mxu0 %v2901
        %v3038 = vpop.f32.mrb[0].mxu0
        %v3039 = vadd.f32 0.0, %v3038
        %v3040 = vpop.f32.mrb[0].mxu0
        %3041 = vmatprep.mubr.f32.mxu0 0.0
        %3042 = vmatmul.mubr.f32.gmra.mrb[0].mxu0 %v2904
        %v3043 = vpop.f32.mrb[0].mxu0
        %v3044 = vadd.f32 0.0, %v3043
        %v3045 = vpop.f32.mrb[0].mxu0
        %3046 = vmatprep.mubr.f32.mxu0 0.0
        %3047 = vmatmul.mubr.f32.gmra.mrb[0].mxu0 %v2907
        %v3048 = vpop.f32.mrb[0].mxu0
        %v3049 = vadd.f32 0.0, %v3048
        %v3050 = vpop.f32.mrb[0].mxu0
        %3051 = vmatprep.mubr.f32.mxu0 0.0
        %3052 = vmatmul.mubr.f32.gmra.mrb[0].mxu0 %v2910
        %v3053 = vpop.f32.mrb[0].mxu0
        %v3054 = vadd.f32 0.0, %v3053
        %v3055 = vpop.f32.mrb[0].mxu0
        %3056 = vdwg.mxu0
        %v3058 = vsel %vm333, %v2812, 0
        %v3061 = vsel %vm333, %v2813, 0
        %v3064 = vsel %vm333, %v2814, 0
        %v3067 = vsel %vm333, %v2815, 0
        %v3070 = vsel %vm333, %v2816, 0
        %v3073 = vsel %vm333, %v2817, 0
        %v3076 = vsel %vm333, %v2818, 0
        %v3079 = vsel %vm333, %v2819, 0
        %v3082 = vsel %vm333, %v2820, 0
        %v3085 = vsel %vm333, %v2821, 0
        %v3088 = vsel %vm333, %v2822, 0
        %v3091 = vsel %vm333, %v2823, 0
        %v3094 = vsel %vm333, %v2824, 0
        %v3097 = vsel %vm333, %v2825, 0
        %v3100 = vsel %vm333, %v2826, 0
        %v3103 = vsel %vm333, %v2827, 0
        %3105 = vmatprep.subr.mxu0 0.0
        %3106 = vmatpush1.msra.mxu0 %v2860
        %3107 = vmatprep.subr.mxu0 0.0
        %3108 = vmatpush1.msra.mxu0 %v2861
        %3109 = vmatprep.subr.mxu0 0.0
        %3110 = vmatpush1.msra.mxu0 0.0
        %3111 = vmatprep.subr.mxu0 0.0
        %3112 = vmatpush1.msra.mxu0 0.0
        %3113 = vmatprep.subr.mxu0 0.0
        %3114 = vmatpush1.msra.mxu0 0.0
        %3115 = vmatprep.subr.mxu0 0.0
        %3116 = vmatpush1.msra.mxu0 0.0
        %3117 = vmatprep.subr.mxu0 0.0
        %3118 = vmatpush1.msra.mxu0 0.0
        %3119 = vmatprep.subr.mxu0 0.0
        %3120 = vmatpush1.msra.mxu0 0.0
        %3121 = vmatprep.subr.mxu0 0.0
        %3122 = vmatpush1.msra.mxu0 0.0
        %3123 = vmatprep.subr.mxu0 0.0
        %3124 = vmatpush1.msra.mxu0 0.0
        %3125 = vmatprep.subr.mxu0 0.0
        %3126 = vmatpush1.msra.mxu0 0.0
        %3127 = vmatprep.subr.mxu0 0.0
        %3128 = vmatpush1.msra.mxu0 0.0
        %3129 = vmatprep.subr.mxu0 0.0
        %3130 = vmatpush1.msra.mxu0 0.0
        %3131 = vmatprep.subr.mxu0 0.0
        %3132 = vmatpush1.msra.mxu0 0.0
        %3133 = vmatprep.subr.mxu0 0.0
        %3134 = vmatpush1.msra.mxu0 0.0
        %3135 = vmatprep.subr.mxu0 0.0
        %3136 = vmatpush1.msra.mxu0 0.0
        %3137 = vmatprep.subr.mxu0 0.0
        %3138 = vmatpush1.msra.mxu0 0.0
        %3139 = vmatprep.subr.mxu0 0.0
        %3140 = vmatpush1.msra.mxu0 0.0
        %3141 = vmatprep.subr.mxu0 0.0
        %3142 = vmatpush1.msra.mxu0 0.0
        %3143 = vmatprep.subr.mxu0 0.0
        %3144 = vmatpush1.msra.mxu0 0.0
        %3145 = vmatprep.subr.mxu0 0.0
        %3146 = vmatpush1.msra.mxu0 0.0
        %3147 = vmatprep.subr.mxu0 0.0
        %3148 = vmatpush1.msra.mxu0 0.0
        %3149 = vmatprep.subr.mxu0 0.0
        %3150 = vmatpush1.msra.mxu0 0.0
        %3151 = vmatprep.subr.mxu0 0.0
        %3152 = vmatpush1.msra.mxu0 0.0
        %3153 = vmatprep.subr.mxu0 0.0
        %3154 = vmatpush1.msra.mxu0 0.0
        %3155 = vmatprep.subr.mxu0 0.0
        %3156 = vmatpush1.msra.mxu0 0.0
        %3157 = vmatprep.subr.mxu0 0.0
        %3158 = vmatpush1.msra.mxu0 0.0
        %3159 = vmatprep.subr.mxu0 0.0
        %3160 = vmatpush1.msra.mxu0 0.0
        %3161 = vmatprep.subr.mxu0 0.0
        %3162 = vmatpush1.msra.mxu0 0.0
        %3163 = vmatprep.subr.mxu0 0.0
        %3164 = vmatpush1.msra.mxu0 0.0
        %3165 = vmatprep.subr.mxu0 0.0
        %3166 = vmatpush1.msra.mxu0 0.0
        %3167 = vmatprep.subr.mxu0 0.0
        %3168 = vmatpush1.msra.mxu0 0.0
        %3169 = vmatprep.mubr.f32.mxu0 0.0
        %3170 = vmatmul.mubr.f32.gmra.mrb[0].mxu0 %v3058
        %v3171 = vpop.f32.mrb[0].mxu0
        %v3172 = vadd.f32 %v2979, %v3171
        %v3173 = vpop.f32.mrb[0].mxu0
        %3174 = vmatprep.mubr.f32.mxu0 0.0
        %3175 = vmatmul.mubr.f32.gmra.mrb[0].mxu0 %v3061
        %v3176 = vpop.f32.mrb[0].mxu0
        %v3177 = vadd.f32 %v2984, %v3176
        %v3178 = vpop.f32.mrb[0].mxu0
        %3179 = vmatprep.mubr.f32.mxu0 0.0
        %3180 = vmatmul.mubr.f32.gmra.mrb[0].mxu0 %v3064
        %v3181 = vpop.f32.mrb[0].mxu0
        %v3182 = vadd.f32 %v2989, %v3181
        %v3183 = vpop.f32.mrb[0].mxu0
        %3184 = vmatprep.mubr.f32.mxu0 0.0
        %3185 = vmatmul.mubr.f32.gmra.mrb[0].mxu0 %v3067
        %v3186 = vpop.f32.mrb[0].mxu0
        %v3187 = vadd.f32 %v2994, %v3186
        %v3188 = vpop.f32.mrb[0].mxu0
        %3189 = vmatprep.mubr.f32.mxu0 0.0
        %3190 = vmatmul.mubr.f32.gmra.mrb[0].mxu0 %v3070
        %v3191 = vpop.f32.mrb[0].mxu0
        %v3192 = vadd.f32 %v2999, %v3191
        %v3193 = vpop.f32.mrb[0].mxu0
        %3194 = vmatprep.mubr.f32.mxu0 0.0
        %3195 = vmatmul.mubr.f32.gmra.mrb[0].mxu0 %v3073
        %v3196 = vpop.f32.mrb[0].mxu0
        %v3197 = vadd.f32 %v3004, %v3196
        %v3198 = vpop.f32.mrb[0].mxu0
        %3199 = vmatprep.mubr.f32.mxu0 0.0
        %3200 = vmatmul.mubr.f32.gmra.mrb[0].mxu0 %v3076
        %v3201 = vpop.f32.mrb[0].mxu0
        %v3202 = vadd.f32 %v3009, %v3201
        %v3203 = vpop.f32.mrb[0].mxu0
        %3204 = vmatprep.mubr.f32.mxu0 0.0
        %3205 = vmatmul.mubr.f32.gmra.mrb[0].mxu0 %v3079
        %v3206 = vpop.f32.mrb[0].mxu0
        %v3207 = vadd.f32 %v3014, %v3206
        %v3208 = vpop.f32.mrb[0].mxu0
        %3209 = vmatprep.mubr.f32.mxu0 0.0
        %3210 = vmatmul.mubr.f32.gmra.mrb[0].mxu0 %v3082
        %v3211 = vpop.f32.mrb[0].mxu0
        %v3212 = vadd.f32 %v3019, %v3211
        %v3213 = vpop.f32.mrb[0].mxu0
        %3214 = vmatprep.mubr.f32.mxu0 0.0
        %3215 = vmatmul.mubr.f32.gmra.mrb[0].mxu0 %v3085
        %v3216 = vpop.f32.mrb[0].mxu0
        %v3217 = vadd.f32 %v3024, %v3216
        %v3218 = vpop.f32.mrb[0].mxu0
        %3219 = vmatprep.mubr.f32.mxu0 0.0
        %3220 = vmatmul.mubr.f32.gmra.mrb[0].mxu0 %v3088
        %v3221 = vpop.f32.mrb[0].mxu0
        %v3222 = vadd.f32 %v3029, %v3221
        %v3223 = vpop.f32.mrb[0].mxu0
        %3224 = vmatprep.mubr.f32.mxu0 0.0
        %3225 = vmatmul.mubr.f32.gmra.mrb[0].mxu0 %v3091
        %v3226 = vpop.f32.mrb[0].mxu0
        %v3227 = vadd.f32 %v3034, %v3226
        %v3228 = vpop.f32.mrb[0].mxu0
        %3229 = vmatprep.mubr.f32.mxu0 0.0
        %3230 = vmatmul.mubr.f32.gmra.mrb[0].mxu0 %v3094
        %v3231 = vpop.f32.mrb[0].mxu0
        %v3232 = vadd.f32 %v3039, %v3231
        %v3233 = vpop.f32.mrb[0].mxu0
        %3234 = vmatprep.mubr.f32.mxu0 0.0
        %3235 = vmatmul.mubr.f32.gmra.mrb[0].mxu0 %v3097
        %v3236 = vpop.f32.mrb[0].mxu0
        %v3237 = vadd.f32 %v3044, %v3236
        %v3238 = vpop.f32.mrb[0].mxu0
        %3239 = vmatprep.mubr.f32.mxu0 0.0
        %3240 = vmatmul.mubr.f32.gmra.mrb[0].mxu0 %v3100
        %v3241 = vpop.f32.mrb[0].mxu0
        %v3242 = vadd.f32 %v3049, %v3241
        %v3243 = vpop.f32.mrb[0].mxu0
        %3244 = vmatprep.mubr.f32.mxu0 0.0
        %3245 = vmatmul.mubr.f32.gmra.mrb[0].mxu0 %v3103
        %v3246 = vpop.f32.mrb[0].mxu0
        %v3247 = vadd.f32 %v3054, %v3246
        %v3248 = vpop.f32.mrb[0].mxu0
        %3249 = vdwg.mxu0
        %v3250 = vld [vmem:[%s4 + $0x20] sm:$0xff]
        %v3251 = vld [vmem:[%s4 + $0x28] sm:$0xff]
        %v3253 = vsel %vm333, %v2844, 0
        %v3256 = vsel %vm333, %v2845, 0
        %v3259 = vsel %vm333, %v2846, 0
        %v3262 = vsel %vm333, %v2847, 0
        %v3265 = vsel %vm333, %v2848, 0
        %v3268 = vsel %vm333, %v2849, 0
        %v3271 = vsel %vm333, %v2850, 0
        %v3274 = vsel %vm333, %v2851, 0
        %v3277 = vsel %vm333, %v2852, 0
        %v3280 = vsel %vm333, %v2853, 0
        %v3283 = vsel %vm333, %v2854, 0
        %v3286 = vsel %vm333, %v2855, 0
        %v3289 = vsel %vm333, %v2856, 0
        %v3292 = vsel %vm333, %v2857, 0
        %v3295 = vsel %vm333, %v2858, 0
        %v3298 = vsel %vm333, %v2859, 0
        %3300 = vmatprep.subr.mxu0 0.0
        %3301 = vmatpush1.msra.mxu0 %v3250
        %3302 = vmatprep.subr.mxu0 0.0
        %3303 = vmatpush1.msra.mxu0 %v3251
        %3304 = vmatprep.subr.mxu0 0.0
        %3305 = vmatpush1.msra.mxu0 0.0
        %3306 = vmatprep.subr.mxu0 0.0
        %3307 = vmatpush1.msra.mxu0 0.0
        %3308 = vmatprep.subr.mxu0 0.0
        %3309 = vmatpush1.msra.mxu0 0.0
        %3310 = vmatprep.subr.mxu0 0.0
        %3311 = vmatpush1.msra.mxu0 0.0
        %3312 = vmatprep.subr.mxu0 0.0
        %3313 = vmatpush1.msra.mxu0 0.0
        %3314 = vmatprep.subr.mxu0 0.0
        %3315 = vmatpush1.msra.mxu0 0.0
        %3316 = vmatprep.subr.mxu0 0.0
        %3317 = vmatpush1.msra.mxu0 0.0
        %3318 = vmatprep.subr.mxu0 0.0
        %3319 = vmatpush1.msra.mxu0 0.0
        %3320 = vmatprep.subr.mxu0 0.0
        %3321 = vmatpush1.msra.mxu0 0.0
        %3322 = vmatprep.subr.mxu0 0.0
        %3323 = vmatpush1.msra.mxu0 0.0
        %3324 = vmatprep.subr.mxu0 0.0
        %3325 = vmatpush1.msra.mxu0 0.0
        %3326 = vmatprep.subr.mxu0 0.0
        %3327 = vmatpush1.msra.mxu0 0.0
        %3328 = vmatprep.subr.mxu0 0.0
        %3329 = vmatpush1.msra.mxu0 0.0
        %3330 = vmatprep.subr.mxu0 0.0
        %3331 = vmatpush1.msra.mxu0 0.0
        %3332 = vmatprep.subr.mxu0 0.0
        %3333 = vmatpush1.msra.mxu0 0.0
        %3334 = vmatprep.subr.mxu0 0.0
        %3335 = vmatpush1.msra.mxu0 0.0
        %3336 = vmatprep.subr.mxu0 0.0
        %3337 = vmatpush1.msra.mxu0 0.0
        %3338 = vmatprep.subr.mxu0 0.0
        %3339 = vmatpush1.msra.mxu0 0.0
        %3340 = vmatprep.subr.mxu0 0.0
        %3341 = vmatpush1.msra.mxu0 0.0
        %3342 = vmatprep.subr.mxu0 0.0
        %3343 = vmatpush1.msra.mxu0 0.0
        %3344 = vmatprep.subr.mxu0 0.0
        %3345 = vmatpush1.msra.mxu0 0.0
        %3346 = vmatprep.subr.mxu0 0.0
        %3347 = vmatpush1.msra.mxu0 0.0
        %3348 = vmatprep.subr.mxu0 0.0
        %3349 = vmatpush1.msra.mxu0 0.0
        %3350 = vmatprep.subr.mxu0 0.0
        %3351 = vmatpush1.msra.mxu0 0.0
        %3352 = vmatprep.subr.mxu0 0.0
        %3353 = vmatpush1.msra.mxu0 0.0
        %3354 = vmatprep.subr.mxu0 0.0
        %3355 = vmatpush1.msra.mxu0 0.0
        %3356 = vmatprep.subr.mxu0 0.0
        %3357 = vmatpush1.msra.mxu0 0.0
        %3358 = vmatprep.subr.mxu0 0.0
        %3359 = vmatpush1.msra.mxu0 0.0
        %3360 = vmatprep.subr.mxu0 0.0
        %3361 = vmatpush1.msra.mxu0 0.0
        %3362 = vmatprep.subr.mxu0 0.0
        %3363 = vmatpush1.msra.mxu0 0.0
        %3364 = vmatprep.mubr.f32.mxu0 0.0
        %3365 = vmatmul.mubr.f32.gmra.mrb[0].mxu0 %v3253
        %v3366 = vpop.f32.mrb[0].mxu0
        %v3367 = vadd.f32 0.0, %v3366
        %v3368 = vpop.f32.mrb[0].mxu0
        %3369 = vmatprep.mubr.f32.mxu0 0.0
        %3370 = vmatmul.mubr.f32.gmra.mrb[0].mxu0 %v3256
        %v3371 = vpop.f32.mrb[0].mxu0
        %v3372 = vadd.f32 0.0, %v3371
        %v3373 = vpop.f32.mrb[0].mxu0
        %3374 = vmatprep.mubr.f32.mxu0 0.0
        %3375 = vmatmul.mubr.f32.gmra.mrb[0].mxu0 %v3259
        %v3376 = vpop.f32.mrb[0].mxu0
        %v3377 = vadd.f32 0.0, %v3376
        %v3378 = vpop.f32.mrb[0].mxu0
        %3379 = vmatprep.mubr.f32.mxu0 0.0
        %3380 = vmatmul.mubr.f32.gmra.mrb[0].mxu0 %v3262
        %v3381 = vpop.f32.mrb[0].mxu0
        %v3382 = vadd.f32 0.0, %v3381
        %v3383 = vpop.f32.mrb[0].mxu0
        %3384 = vmatprep.mubr.f32.mxu0 0.0
        %3385 = vmatmul.mubr.f32.gmra.mrb[0].mxu0 %v3265
        %v3386 = vpop.f32.mrb[0].mxu0
        %v3387 = vadd.f32 0.0, %v3386
        %v3388 = vpop.f32.mrb[0].mxu0
        %3389 = vmatprep.mubr.f32.mxu0 0.0
        %3390 = vmatmul.mubr.f32.gmra.mrb[0].mxu0 %v3268
        %v3391 = vpop.f32.mrb[0].mxu0
        %v3392 = vadd.f32 0.0, %v3391
        %v3393 = vpop.f32.mrb[0].mxu0
        %3394 = vmatprep.mubr.f32.mxu0 0.0
        %3395 = vmatmul.mubr.f32.gmra.mrb[0].mxu0 %v3271
        %v3396 = vpop.f32.mrb[0].mxu0
        %v3397 = vadd.f32 0.0, %v3396
        %v3398 = vpop.f32.mrb[0].mxu0
        %3399 = vmatprep.mubr.f32.mxu0 0.0
        %3400 = vmatmul.mubr.f32.gmra.mrb[0].mxu0 %v3274
        %v3401 = vpop.f32.mrb[0].mxu0
        %v3402 = vadd.f32 0.0, %v3401
        %v3403 = vpop.f32.mrb[0].mxu0
        %3404 = vmatprep.mubr.f32.mxu0 0.0
        %3405 = vmatmul.mubr.f32.gmra.mrb[0].mxu0 %v3277
        %v3406 = vpop.f32.mrb[0].mxu0
        %v3407 = vadd.f32 0.0, %v3406
        %v3408 = vpop.f32.mrb[0].mxu0
        %3409 = vmatprep.mubr.f32.mxu0 0.0
        %3410 = vmatmul.mubr.f32.gmra.mrb[0].mxu0 %v3280
        %v3411 = vpop.f32.mrb[0].mxu0
        %v3412 = vadd.f32 0.0, %v3411
        %v3413 = vpop.f32.mrb[0].mxu0
        %3414 = vmatprep.mubr.f32.mxu0 0.0
        %3415 = vmatmul.mubr.f32.gmra.mrb[0].mxu0 %v3283
        %v3416 = vpop.f32.mrb[0].mxu0
        %v3417 = vadd.f32 0.0, %v3416
        %v3418 = vpop.f32.mrb[0].mxu0
        %3419 = vmatprep.mubr.f32.mxu0 0.0
        %3420 = vmatmul.mubr.f32.gmra.mrb[0].mxu0 %v3286
        %v3421 = vpop.f32.mrb[0].mxu0
        %v3422 = vadd.f32 0.0, %v3421
        %v3423 = vpop.f32.mrb[0].mxu0
        %3424 = vmatprep.mubr.f32.mxu0 0.0
        %3425 = vmatmul.mubr.f32.gmra.mrb[0].mxu0 %v3289
        %v3426 = vpop.f32.mrb[0].mxu0
        %v3427 = vadd.f32 0.0, %v3426
        %v3428 = vpop.f32.mrb[0].mxu0
        %3429 = vmatprep.mubr.f32.mxu0 0.0
        %3430 = vmatmul.mubr.f32.gmra.mrb[0].mxu0 %v3292
        %v3431 = vpop.f32.mrb[0].mxu0
        %v3432 = vadd.f32 0.0, %v3431
        %v3433 = vpop.f32.mrb[0].mxu0
        %3434 = vmatprep.mubr.f32.mxu0 0.0
        %3435 = vmatmul.mubr.f32.gmra.mrb[0].mxu0 %v3295
        %v3436 = vpop.f32.mrb[0].mxu0
        %v3437 = vadd.f32 0.0, %v3436
        %v3438 = vpop.f32.mrb[0].mxu0
        %3439 = vmatprep.mubr.f32.mxu0 0.0
        %3440 = vmatmul.mubr.f32.gmra.mrb[0].mxu0 %v3298
        %v3441 = vpop.f32.mrb[0].mxu0
        %v3442 = vadd.f32 0.0, %v3441
        %v3443 = vpop.f32.mrb[0].mxu0
        %3444 = vdwg.mxu0
        %v3445 = vadd.f32 %v3172, %v3367
        %v3446 = vadd.f32 %v3177, %v3372
        %v3447 = vadd.f32 %v3182, %v3377
        %v3448 = vadd.f32 %v3187, %v3382
        %v3449 = vadd.f32 %v3192, %v3387
        %v3450 = vadd.f32 %v3197, %v3392
        %v3451 = vadd.f32 %v3202, %v3397
        %v3452 = vadd.f32 %v3207, %v3402
        %v3453 = vadd.f32 %v3212, %v3407
        %v3454 = vadd.f32 %v3217, %v3412
        %v3455 = vadd.f32 %v3222, %v3417
        %v3456 = vadd.f32 %v3227, %v3422
        %v3457 = vadd.f32 %v3232, %v3427
        %v3458 = vadd.f32 %v3237, %v3432
        %v3459 = vadd.f32 %v3242, %v3437
        %v3460 = vadd.f32 %v3247, %v3442
        %v3461 = vadd.f32 %v3445, %v2067
        %v3462 = vadd.f32 %v3446, %v2068
        %v3463 = vadd.f32 %v3447, %v2069
        %v3464 = vadd.f32 %v3448, %v2070
        %v3465 = vadd.f32 %v3449, %v2071
        %v3466 = vadd.f32 %v3450, %v2072
        %v3467 = vadd.f32 %v3451, %v2073
        %v3468 = vadd.f32 %v3452, %v2074
        %v3469 = vadd.f32 %v3453, %v2075
        %v3470 = vadd.f32 %v3454, %v2076
        %v3471 = vadd.f32 %v3455, %v2077
        %v3472 = vadd.f32 %v3456, %v2078
        %v3473 = vadd.f32 %v3457, %v2079
        %v3474 = vadd.f32 %v3458, %v2080
        %v3475 = vadd.f32 %v3459, %v2081
        %v3476 = vadd.f32 %v3460, %v2082
        %v3477 = vmax.f32 %v3461, 0.0
        %v3478 = vmax.f32 %v3462, 0.0
        %v3479 = vmax.f32 %v3463, 0.0
        %v3480 = vmax.f32 %v3464, 0.0
        %v3481 = vmax.f32 %v3465, 0.0
        %v3482 = vmax.f32 %v3466, 0.0
        %v3483 = vmax.f32 %v3467, 0.0
        %v3484 = vmax.f32 %v3468, 0.0
        %v3485 = vmax.f32 %v3469, 0.0
        %v3486 = vmax.f32 %v3470, 0.0
        %v3487 = vmax.f32 %v3471, 0.0
        %v3488 = vmax.f32 %v3472, 0.0
        %v3489 = vmax.f32 %v3473, 0.0
        %v3490 = vmax.f32 %v3474, 0.0
        %v3491 = vmax.f32 %v3475, 0.0
        %v3492 = vmax.f32 %v3476, 0.0
        %3493 = vst.msk [vmem:[#allocation2 + $0x8] sm:$0xff] %vm333, %v3477
        %3494 = vst.msk [vmem:[#allocation2 + $0x10] sm:$0xff] %vm333, %v3478
        %3495 = vst.msk [vmem:[#allocation2 + $0x18] sm:$0xff] %vm333, %v3479
        %3496 = vst.msk [vmem:[#allocation2 + $0x20] sm:$0xff] %vm333, %v3480
        %3497 = vst.msk [vmem:[#allocation2 + $0x28] sm:$0xff] %vm333, %v3481
        %3498 = vst.msk [vmem:[#allocation2 + $0x30] sm:$0xff] %vm333, %v3482
        %3499 = vst.msk [vmem:[#allocation2 + $0x38] sm:$0xff] %vm333, %v3483
        %3500 = vst.msk [vmem:[#allocation2 + $0x40] sm:$0xff] %vm333, %v3484
        %3501 = vst.msk [vmem:[#allocation2 + $0x48] sm:$0xff] %vm333, %v3485
        %3502 = vst.msk [vmem:[#allocation2 + $0x50] sm:$0xff] %vm333, %v3486
        %3503 = vst.msk [vmem:[#allocation2 + $0x58] sm:$0xff] %vm333, %v3487
        %3504 = vst.msk [vmem:[#allocation2 + $0x60] sm:$0xff] %vm333, %v3488
        %3505 = vst.msk [vmem:[#allocation2 + $0x68] sm:$0xff] %vm333, %v3489
        %3506 = vst.msk [vmem:[#allocation2 + $0x70] sm:$0xff] %vm333, %v3490
        %3507 = vst.msk [vmem:[#allocation2 + $0x78] sm:$0xff] %vm333, %v3491
        %3508 = vst.msk [vmem:[#allocation2 + $0x80] sm:$0xff] %vm333, %v3492
        %s3509 = scalar_lea.vmem [#allocation2], 8
        %v3510 = vld [vmem:[%s3509] ss:$2 sm:$0xff]
        %s3511 = scalar_lea.vmem [#allocation2], 24
        %v3512 = vld [vmem:[%s3511] ss:$2 sm:$0xff]
        %s3513 = scalar_lea.vmem [#allocation2], 40
        %v3514 = vld [vmem:[%s3513] ss:$2 sm:$0xff]
        %s3515 = scalar_lea.vmem [#allocation2], 56
        %v3516 = vld [vmem:[%s3515] ss:$2 sm:$0xff]
        %s3517 = scalar_lea.vmem [#allocation2], 72
        %v3518 = vld [vmem:[%s3517] ss:$2 sm:$0xff]
        %s3519 = scalar_lea.vmem [#allocation2], 88
        %v3520 = vld [vmem:[%s3519] ss:$2 sm:$0xff]
        %s3521 = scalar_lea.vmem [#allocation2], 104
        %v3522 = vld [vmem:[%s3521] ss:$2 sm:$0xff]
        %s3523 = scalar_lea.vmem [#allocation2], 120
        %v3524 = vld [vmem:[%s3523] ss:$2 sm:$0xff]
        %s3525 = scalar_lea.vmem [#allocation2], 9
        %v3526 = vld [vmem:[%s3525] ss:$2 sm:$0xff]
        %s3527 = scalar_lea.vmem [#allocation2], 25
        %v3528 = vld [vmem:[%s3527] ss:$2 sm:$0xff]
        %s3529 = scalar_lea.vmem [#allocation2], 41
        %v3530 = vld [vmem:[%s3529] ss:$2 sm:$0xff]
        %s3531 = scalar_lea.vmem [#allocation2], 57
        %v3532 = vld [vmem:[%s3531] ss:$2 sm:$0xff]
        %s3533 = scalar_lea.vmem [#allocation2], 73
        %v3534 = vld [vmem:[%s3533] ss:$2 sm:$0xff]
        %s3535 = scalar_lea.vmem [#allocation2], 89
        %v3536 = vld [vmem:[%s3535] ss:$2 sm:$0xff]
        %s3537 = scalar_lea.vmem [#allocation2], 105
        %v3538 = vld [vmem:[%s3537] ss:$2 sm:$0xff]
        %s3539 = scalar_lea.vmem [#allocation2], 121
        %v3540 = vld [vmem:[%s3539] ss:$2 sm:$0xff]
        %v3541 = vmax.f32 %v3510, %v3526
        %v3542 = vmax.f32 %v3512, %v3528
        %v3543 = vmax.f32 %v3514, %v3530
        %v3544 = vmax.f32 %v3516, %v3532
        %v3545 = vmax.f32 %v3518, %v3534
        %v3546 = vmax.f32 %v3520, %v3536
        %v3547 = vmax.f32 %v3522, %v3538
        %v3548 = vmax.f32 %v3524, %v3540
        %vm3549 = vcmp.lt.s32.totalorder %v369, 0
        %v3550 = vsub.s32 0, %v369
        %v3551 = vsel %vm3549, %v3550, %v369
        %v3552 = vshrl.u32 %v3551, 3
        %v3553 = vand.u32 %v3551, 7
        %v3554 = vsub.s32 0, %v3553
        %v3555 = vsel %vm3549, %v3554, %v3553
        %vm3556 = vcmp.lt.s32.totalorder %v370, 0
        %v3557 = vsub.s32 0, %v370
        %v3558 = vsel %vm3556, %v3557, %v370
        %v3559 = vshrl.u32 %v3558, 3
        %v3560 = vand.u32 %v3558, 7
        %v3561 = vsub.s32 0, %v3560
        %v3562 = vsel %vm3556, %v3561, %v3560
        %vm3563 = vcmp.lt.s32.totalorder %v371, 0
        %v3564 = vsub.s32 0, %v371
        %v3565 = vsel %vm3563, %v3564, %v371
        %v3566 = vshrl.u32 %v3565, 3
        %v3567 = vand.u32 %v3565, 7
        %v3568 = vsub.s32 0, %v3567
        %v3569 = vsel %vm3563, %v3568, %v3567
        %vm3570 = vcmp.lt.s32.totalorder %v372, 0
        %v3571 = vsub.s32 0, %v372
        %v3572 = vsel %vm3570, %v3571, %v372
        %v3573 = vshrl.u32 %v3572, 3
        %v3574 = vand.u32 %v3572, 7
        %v3575 = vsub.s32 0, %v3574
        %v3576 = vsel %vm3570, %v3575, %v3574
        %vm3577 = vcmp.lt.s32.totalorder %v373, 0
        %v3578 = vsub.s32 0, %v373
        %v3579 = vsel %vm3577, %v3578, %v373
        %v3580 = vshrl.u32 %v3579, 3
        %v3581 = vand.u32 %v3579, 7
        %v3582 = vsub.s32 0, %v3581
        %v3583 = vsel %vm3577, %v3582, %v3581
        %vm3584 = vcmp.lt.s32.totalorder %v374, 0
        %v3585 = vsub.s32 0, %v374
        %v3586 = vsel %vm3584, %v3585, %v374
        %v3587 = vshrl.u32 %v3586, 3
        %v3588 = vand.u32 %v3586, 7
        %v3589 = vsub.s32 0, %v3588
        %v3590 = vsel %vm3584, %v3589, %v3588
        %vm3591 = vcmp.lt.s32.totalorder %v375, 0
        %v3592 = vsub.s32 0, %v375
        %v3593 = vsel %vm3591, %v3592, %v375
        %v3594 = vshrl.u32 %v3593, 3
        %v3595 = vand.u32 %v3593, 7
        %v3596 = vsub.s32 0, %v3595
        %v3597 = vsel %vm3591, %v3596, %v3595
        %vm3598 = vcmp.lt.s32.totalorder %v376, 0
        %v3599 = vsub.s32 0, %v376
        %v3600 = vsel %vm3598, %v3599, %v376
        %v3601 = vshrl.u32 %v3600, 3
        %v3602 = vand.u32 %v3600, 7
        %v3603 = vsub.s32 0, %v3602
        %v3604 = vsel %vm3598, %v3603, %v3602
        %vm3605 = vcmp.ne.s32.totalorder %v3555, 0
        %vm3606 = vcmp.ne.s32.totalorder %v3562, 0
        %vm3607 = vcmp.ne.s32.totalorder %v3569, 0
        %vm3608 = vcmp.ne.s32.totalorder %v3576, 0
        %vm3609 = vcmp.ne.s32.totalorder %v3583, 0
        %vm3610 = vcmp.ne.s32.totalorder %v3590, 0
        %vm3611 = vcmp.ne.s32.totalorder %v3597, 0
        %vm3612 = vcmp.ne.s32.totalorder %v3604, 0
        %vm3613 = vcmp.lt.s32.totalorder %v3555, 0
        %vm3614 = vcmp.lt.s32.totalorder %v3562, 0
        %vm3615 = vcmp.lt.s32.totalorder %v3569, 0
        %vm3616 = vcmp.lt.s32.totalorder %v3576, 0
        %vm3617 = vcmp.lt.s32.totalorder %v3583, 0
        %vm3618 = vcmp.lt.s32.totalorder %v3590, 0
        %vm3619 = vcmp.lt.s32.totalorder %v3597, 0
        %vm3620 = vcmp.lt.s32.totalorder %v3604, 0
        %vm3621 = vmand %vm3613, %vm3605
        %vm3622 = vmand %vm3614, %vm3606
        %vm3623 = vmand %vm3615, %vm3607
        %vm3624 = vmand %vm3616, %vm3608
        %vm3625 = vmand %vm3617, %vm3609
        %vm3626 = vmand %vm3618, %vm3610
        %vm3627 = vmand %vm3619, %vm3611
        %vm3628 = vmand %vm3620, %vm3612
        %v3629 = vadd.s32 %v3555, 8
        %v3630 = vadd.s32 %v3562, 8
        %v3631 = vadd.s32 %v3569, 8
        %v3632 = vadd.s32 %v3576, 8
        %v3633 = vadd.s32 %v3583, 8
        %v3634 = vadd.s32 %v3590, 8
        %v3635 = vadd.s32 %v3597, 8
        %v3636 = vadd.s32 %v3604, 8
        %v3637 = vsel %vm3621, %v3629, %v3555
        %v3638 = vsel %vm3622, %v3630, %v3562
        %v3639 = vsel %vm3623, %v3631, %v3569
        %v3640 = vsel %vm3624, %v3632, %v3576
        %v3641 = vsel %vm3625, %v3633, %v3583
        %v3642 = vsel %vm3626, %v3634, %v3590
        %v3643 = vsel %vm3627, %v3635, %v3597
        %v3644 = vsel %vm3628, %v3636, %v3604
        %vm3645 = vcmp.ne.s32.totalorder %v3637, 0
        %vm3646 = vcmp.ne.s32.totalorder %v3638, 0
        %vm3647 = vcmp.ne.s32.totalorder %v3639, 0
        %vm3648 = vcmp.ne.s32.totalorder %v3640, 0
        %vm3649 = vcmp.ne.s32.totalorder %v3641, 0
        %vm3650 = vcmp.ne.s32.totalorder %v3642, 0
        %vm3651 = vcmp.ne.s32.totalorder %v3643, 0
        %vm3652 = vcmp.ne.s32.totalorder %v3644, 0
        %v3653 = vsel %vm3645, 1, 0
        %v3654 = vsel %vm3646, 1, 0
        %v3655 = vsel %vm3647, 1, 0
        %v3656 = vsel %vm3648, 1, 0
        %v3657 = vsel %vm3649, 1, 0
        %v3658 = vsel %vm3650, 1, 0
        %v3659 = vsel %vm3651, 1, 0
        %v3660 = vsel %vm3652, 1, 0
        %v3661 = vcvt.s32.f32 %v3653
        %v3662 = vcvt.s32.f32 %v3654
        %v3663 = vcvt.s32.f32 %v3655
        %v3664 = vcvt.s32.f32 %v3656
        %v3665 = vcvt.s32.f32 %v3657
        %v3666 = vcvt.s32.f32 %v3658
        %v3667 = vcvt.s32.f32 %v3659
        %v3668 = vcvt.s32.f32 %v3660
        %vm3669 = vcmp.ne.s32.totalorder %v3637, 7
        %vm3670 = vcmp.ne.s32.totalorder %v3638, 7
        %vm3671 = vcmp.ne.s32.totalorder %v3639, 7
        %vm3672 = vcmp.ne.s32.totalorder %v3640, 7
        %vm3673 = vcmp.ne.s32.totalorder %v3641, 7
        %vm3674 = vcmp.ne.s32.totalorder %v3642, 7
        %vm3675 = vcmp.ne.s32.totalorder %v3643, 7
        %vm3676 = vcmp.ne.s32.totalorder %v3644, 7
        %v3677 = vsel %vm3669, 1, 0
        %v3678 = vsel %vm3670, 1, 0
        %v3679 = vsel %vm3671, 1, 0
        %v3680 = vsel %vm3672, 1, 0
        %v3681 = vsel %vm3673, 1, 0
        %v3682 = vsel %vm3674, 1, 0
        %v3683 = vsel %vm3675, 1, 0
        %v3684 = vsel %vm3676, 1, 0
        %v3685 = vcvt.s32.f32 %v3677
        %v3686 = vcvt.s32.f32 %v3678
        %v3687 = vcvt.s32.f32 %v3679
        %v3688 = vcvt.s32.f32 %v3680
        %v3689 = vcvt.s32.f32 %v3681
        %v3690 = vcvt.s32.f32 %v3682
        %v3691 = vcvt.s32.f32 %v3683
        %v3692 = vcvt.s32.f32 %v3684
        %3693 = vst.msk [vmem:[#allocation2 + $0x8] sm:$0xff] %vm333, %v3541
        %3694 = vst.msk [vmem:[#allocation2 + $0x10] sm:$0xff] %vm333, %v3542
        %3695 = vst.msk [vmem:[#allocation2 + $0x18] sm:$0xff] %vm333, %v3543
        %3696 = vst.msk [vmem:[#allocation2 + $0x20] sm:$0xff] %vm333, %v3544
        %3697 = vst.msk [vmem:[#allocation2 + $0x28] sm:$0xff] %vm333, %v3545
        %3698 = vst.msk [vmem:[#allocation2 + $0x30] sm:$0xff] %vm333, %v3546
        %3699 = vst.msk [vmem:[#allocation2 + $0x38] sm:$0xff] %vm333, %v3547
        %3700 = vst.msk [vmem:[#allocation2 + $0x40] sm:$0xff] %vm333, %v3548
        %v3701 = vld [vmem:[#allocation2 + $0x7] sm:$0xff]
        %v3702 = vld [vmem:[#allocation2 + $0xf] sm:$0xff]
        %v3703 = vld [vmem:[#allocation2 + $0x17] sm:$0xff]
        %v3704 = vld [vmem:[#allocation2 + $0x1f] sm:$0xff]
        %v3705 = vld [vmem:[#allocation2 + $0x27] sm:$0xff]
        %v3706 = vld [vmem:[#allocation2 + $0x2f] sm:$0xff]
        %v3707 = vld [vmem:[#allocation2 + $0x37] sm:$0xff]
        %v3708 = vld [vmem:[#allocation2 + $0x3f] sm:$0xff]
        %v3709 = vmul.f32 %v3701, %v3661
        %v3710 = vmul.f32 %v3702, %v3662
        %v3711 = vmul.f32 %v3703, %v3663
        %v3712 = vmul.f32 %v3704, %v3664
        %v3713 = vmul.f32 %v3705, %v3665
        %v3714 = vmul.f32 %v3706, %v3666
        %v3715 = vmul.f32 %v3707, %v3667
        %v3716 = vmul.f32 %v3708, %v3668
        %v3717 = vld [vmem:[#allocation2 + $0x9] sm:$0xff]
        %v3718 = vld [vmem:[#allocation2 + $0x11] sm:$0xff]
        %v3719 = vld [vmem:[#allocation2 + $0x19] sm:$0xff]
        %v3720 = vld [vmem:[#allocation2 + $0x21] sm:$0xff]
        %v3721 = vld [vmem:[#allocation2 + $0x29] sm:$0xff]
        %v3722 = vld [vmem:[#allocation2 + $0x31] sm:$0xff]
        %v3723 = vld [vmem:[#allocation2 + $0x39] sm:$0xff]
        %v3724 = vld [vmem:[#allocation2 + $0x41] sm:$0xff]
        %v3725 = vmul.f32 %v3717, %v3685
        %v3726 = vmul.f32 %v3718, %v3686
        %v3727 = vmul.f32 %v3719, %v3687
        %v3728 = vmul.f32 %v3720, %v3688
        %v3729 = vmul.f32 %v3721, %v3689
        %v3730 = vmul.f32 %v3722, %v3690
        %v3731 = vmul.f32 %v3723, %v3691
        %v3732 = vmul.f32 %v3724, %v3692
        %v3733 = vld [vmem:[%s3] sm:$0xff]
        %v3734 = vld [vmem:[%s3 + $0x8] sm:$0xff]
        %v3735 = vld [vmem:[%s3 + $0x10] sm:$0xff]
        %v3736 = vld [vmem:[%s3 + $0x18] sm:$0xff]
        %v3738 = vsel %vm333, %v3541, 0
        %v3741 = vsel %vm333, %v3542, 0
        %v3744 = vsel %vm333, %v3543, 0
        %v3747 = vsel %vm333, %v3544, 0
        %v3750 = vsel %vm333, %v3545, 0
        %v3753 = vsel %vm333, %v3546, 0
        %v3756 = vsel %vm333, %v3547, 0
        %v3759 = vsel %vm333, %v3548, 0
        %3761 = vmatprep.subr.mxu0 0.0
        %3762 = vmatpush1.msra.mxu0 %v3735
        %3763 = vmatprep.subr.mxu0 0.0
        %3764 = vmatpush1.msra.mxu0 %v3736
        %3765 = vmatprep.subr.mxu0 0.0
        %3766 = vmatpush1.msra.mxu0 0.0
        %3767 = vmatprep.subr.mxu0 0.0
        %3768 = vmatpush1.msra.mxu0 0.0
        %3769 = vmatprep.subr.mxu0 0.0
        %3770 = vmatpush1.msra.mxu0 0.0
        %3771 = vmatprep.subr.mxu0 0.0
        %3772 = vmatpush1.msra.mxu0 0.0
        %3773 = vmatprep.subr.mxu0 0.0
        %3774 = vmatpush1.msra.mxu0 0.0
        %3775 = vmatprep.subr.mxu0 0.0
        %3776 = vmatpush1.msra.mxu0 0.0
        %3777 = vmatprep.subr.mxu0 0.0
        %3778 = vmatpush1.msra.mxu0 0.0
        %3779 = vmatprep.subr.mxu0 0.0
        %3780 = vmatpush1.msra.mxu0 0.0
        %3781 = vmatprep.subr.mxu0 0.0
        %3782 = vmatpush1.msra.mxu0 0.0
        %3783 = vmatprep.subr.mxu0 0.0
        %3784 = vmatpush1.msra.mxu0 0.0
        %3785 = vmatprep.subr.mxu0 0.0
        %3786 = vmatpush1.msra.mxu0 0.0
        %3787 = vmatprep.subr.mxu0 0.0
        %3788 = vmatpush1.msra.mxu0 0.0
        %3789 = vmatprep.subr.mxu0 0.0
        %3790 = vmatpush1.msra.mxu0 0.0
        %3791 = vmatprep.subr.mxu0 0.0
        %3792 = vmatpush1.msra.mxu0 0.0
        %3793 = vmatprep.subr.mxu0 0.0
        %3794 = vmatpush1.msra.mxu0 0.0
        %3795 = vmatprep.subr.mxu0 0.0
        %3796 = vmatpush1.msra.mxu0 0.0
        %3797 = vmatprep.subr.mxu0 0.0
        %3798 = vmatpush1.msra.mxu0 0.0
        %3799 = vmatprep.subr.mxu0 0.0
        %3800 = vmatpush1.msra.mxu0 0.0
        %3801 = vmatprep.subr.mxu0 0.0
        %3802 = vmatpush1.msra.mxu0 0.0
        %3803 = vmatprep.subr.mxu0 0.0
        %3804 = vmatpush1.msra.mxu0 0.0
        %3805 = vmatprep.subr.mxu0 0.0
        %3806 = vmatpush1.msra.mxu0 0.0
        %3807 = vmatprep.subr.mxu0 0.0
        %3808 = vmatpush1.msra.mxu0 0.0
        %3809 = vmatprep.subr.mxu0 0.0
        %3810 = vmatpush1.msra.mxu0 0.0
        %3811 = vmatprep.subr.mxu0 0.0
        %3812 = vmatpush1.msra.mxu0 0.0
        %3813 = vmatprep.subr.mxu0 0.0
        %3814 = vmatpush1.msra.mxu0 0.0
        %3815 = vmatprep.subr.mxu0 0.0
        %3816 = vmatpush1.msra.mxu0 0.0
        %3817 = vmatprep.subr.mxu0 0.0
        %3818 = vmatpush1.msra.mxu0 0.0
        %3819 = vmatprep.subr.mxu0 0.0
        %3820 = vmatpush1.msra.mxu0 0.0
        %3821 = vmatprep.subr.mxu0 0.0
        %3822 = vmatpush1.msra.mxu0 0.0
        %3823 = vmatprep.subr.mxu0 0.0
        %3824 = vmatpush1.msra.mxu0 0.0
        %3825 = vmatprep.mubr.f32.mxu0 0.0
        %3826 = vmatmul.mubr.f32.gmra.mrb[0].mxu0 %v3738
        %v3827 = vpop.f32.mrb[0].mxu0
        %v3828 = vadd.f32 0.0, %v3827
        %v3829 = vpop.f32.mrb[0].mxu0
        %3830 = vmatprep.mubr.f32.mxu0 0.0
        %3831 = vmatmul.mubr.f32.gmra.mrb[0].mxu0 %v3741
        %v3832 = vpop.f32.mrb[0].mxu0
        %v3833 = vadd.f32 0.0, %v3832
        %v3834 = vpop.f32.mrb[0].mxu0
        %3835 = vmatprep.mubr.f32.mxu0 0.0
        %3836 = vmatmul.mubr.f32.gmra.mrb[0].mxu0 %v3744
        %v3837 = vpop.f32.mrb[0].mxu0
        %v3838 = vadd.f32 0.0, %v3837
        %v3839 = vpop.f32.mrb[0].mxu0
        %3840 = vmatprep.mubr.f32.mxu0 0.0
        %3841 = vmatmul.mubr.f32.gmra.mrb[0].mxu0 %v3747
        %v3842 = vpop.f32.mrb[0].mxu0
        %v3843 = vadd.f32 0.0, %v3842
        %v3844 = vpop.f32.mrb[0].mxu0
        %3845 = vmatprep.mubr.f32.mxu0 0.0
        %3846 = vmatmul.mubr.f32.gmra.mrb[0].mxu0 %v3750
        %v3847 = vpop.f32.mrb[0].mxu0
        %v3848 = vadd.f32 0.0, %v3847
        %v3849 = vpop.f32.mrb[0].mxu0
        %3850 = vmatprep.mubr.f32.mxu0 0.0
        %3851 = vmatmul.mubr.f32.gmra.mrb[0].mxu0 %v3753
        %v3852 = vpop.f32.mrb[0].mxu0
        %v3853 = vadd.f32 0.0, %v3852
        %v3854 = vpop.f32.mrb[0].mxu0
        %3855 = vmatprep.mubr.f32.mxu0 0.0
        %3856 = vmatmul.mubr.f32.gmra.mrb[0].mxu0 %v3756
        %v3857 = vpop.f32.mrb[0].mxu0
        %v3858 = vadd.f32 0.0, %v3857
        %v3859 = vpop.f32.mrb[0].mxu0
        %3860 = vmatprep.mubr.f32.mxu0 0.0
        %3861 = vmatmul.mubr.f32.gmra.mrb[0].mxu0 %v3759
        %v3862 = vpop.f32.mrb[0].mxu0
        %v3863 = vadd.f32 0.0, %v3862
        %v3864 = vpop.f32.mrb[0].mxu0
        %3865 = vdwg.mxu0
        %v3867 = vsel %vm333, %v3709, 0
        %v3870 = vsel %vm333, %v3710, 0
        %v3873 = vsel %vm333, %v3711, 0
        %v3876 = vsel %vm333, %v3712, 0
        %v3879 = vsel %vm333, %v3713, 0
        %v3882 = vsel %vm333, %v3714, 0
        %v3885 = vsel %vm333, %v3715, 0
        %v3888 = vsel %vm333, %v3716, 0
        %3890 = vmatprep.subr.mxu0 0.0
        %3891 = vmatpush1.msra.mxu0 %v3733
        %3892 = vmatprep.subr.mxu0 0.0
        %3893 = vmatpush1.msra.mxu0 %v3734
        %3894 = vmatprep.subr.mxu0 0.0
        %3895 = vmatpush1.msra.mxu0 0.0
        %3896 = vmatprep.subr.mxu0 0.0
        %3897 = vmatpush1.msra.mxu0 0.0
        %3898 = vmatprep.subr.mxu0 0.0
        %3899 = vmatpush1.msra.mxu0 0.0
        %3900 = vmatprep.subr.mxu0 0.0
        %3901 = vmatpush1.msra.mxu0 0.0
        %3902 = vmatprep.subr.mxu0 0.0
        %3903 = vmatpush1.msra.mxu0 0.0
        %3904 = vmatprep.subr.mxu0 0.0
        %3905 = vmatpush1.msra.mxu0 0.0
        %3906 = vmatprep.subr.mxu0 0.0
        %3907 = vmatpush1.msra.mxu0 0.0
        %3908 = vmatprep.subr.mxu0 0.0
        %3909 = vmatpush1.msra.mxu0 0.0
        %3910 = vmatprep.subr.mxu0 0.0
        %3911 = vmatpush1.msra.mxu0 0.0
        %3912 = vmatprep.subr.mxu0 0.0
        %3913 = vmatpush1.msra.mxu0 0.0
        %3914 = vmatprep.subr.mxu0 0.0
        %3915 = vmatpush1.msra.mxu0 0.0
        %3916 = vmatprep.subr.mxu0 0.0
        %3917 = vmatpush1.msra.mxu0 0.0
        %3918 = vmatprep.subr.mxu0 0.0
        %3919 = vmatpush1.msra.mxu0 0.0
        %3920 = vmatprep.subr.mxu0 0.0
        %3921 = vmatpush1.msra.mxu0 0.0
        %3922 = vmatprep.subr.mxu0 0.0
        %3923 = vmatpush1.msra.mxu0 0.0
        %3924 = vmatprep.subr.mxu0 0.0
        %3925 = vmatpush1.msra.mxu0 0.0
        %3926 = vmatprep.subr.mxu0 0.0
        %3927 = vmatpush1.msra.mxu0 0.0
        %3928 = vmatprep.subr.mxu0 0.0
        %3929 = vmatpush1.msra.mxu0 0.0
        %3930 = vmatprep.subr.mxu0 0.0
        %3931 = vmatpush1.msra.mxu0 0.0
        %3932 = vmatprep.subr.mxu0 0.0
        %3933 = vmatpush1.msra.mxu0 0.0
        %3934 = vmatprep.subr.mxu0 0.0
        %3935 = vmatpush1.msra.mxu0 0.0
        %3936 = vmatprep.subr.mxu0 0.0
        %3937 = vmatpush1.msra.mxu0 0.0
        %3938 = vmatprep.subr.mxu0 0.0
        %3939 = vmatpush1.msra.mxu0 0.0
        %3940 = vmatprep.subr.mxu0 0.0
        %3941 = vmatpush1.msra.mxu0 0.0
        %3942 = vmatprep.subr.mxu0 0.0
        %3943 = vmatpush1.msra.mxu0 0.0
        %3944 = vmatprep.subr.mxu0 0.0
        %3945 = vmatpush1.msra.mxu0 0.0
        %3946 = vmatprep.subr.mxu0 0.0
        %3947 = vmatpush1.msra.mxu0 0.0
        %3948 = vmatprep.subr.mxu0 0.0
        %3949 = vmatpush1.msra.mxu0 0.0
        %3950 = vmatprep.subr.mxu0 0.0
        %3951 = vmatpush1.msra.mxu0 0.0
        %3952 = vmatprep.subr.mxu0 0.0
        %3953 = vmatpush1.msra.mxu0 0.0
        %3954 = vmatprep.mubr.f32.mxu0 0.0
        %3955 = vmatmul.mubr.f32.gmra.mrb[0].mxu0 %v3867
        %v3956 = vpop.f32.mrb[0].mxu0
        %v3957 = vadd.f32 %v3828, %v3956
        %v3958 = vpop.f32.mrb[0].mxu0
        %3959 = vmatprep.mubr.f32.mxu0 0.0
        %3960 = vmatmul.mubr.f32.gmra.mrb[0].mxu0 %v3870
        %v3961 = vpop.f32.mrb[0].mxu0
        %v3962 = vadd.f32 %v3833, %v3961
        %v3963 = vpop.f32.mrb[0].mxu0
        %3964 = vmatprep.mubr.f32.mxu0 0.0
        %3965 = vmatmul.mubr.f32.gmra.mrb[0].mxu0 %v3873
        %v3966 = vpop.f32.mrb[0].mxu0
        %v3967 = vadd.f32 %v3838, %v3966
        %v3968 = vpop.f32.mrb[0].mxu0
        %3969 = vmatprep.mubr.f32.mxu0 0.0
        %3970 = vmatmul.mubr.f32.gmra.mrb[0].mxu0 %v3876
        %v3971 = vpop.f32.mrb[0].mxu0
        %v3972 = vadd.f32 %v3843, %v3971
        %v3973 = vpop.f32.mrb[0].mxu0
        %3974 = vmatprep.mubr.f32.mxu0 0.0
        %3975 = vmatmul.mubr.f32.gmra.mrb[0].mxu0 %v3879
        %v3976 = vpop.f32.mrb[0].mxu0
        %v3977 = vadd.f32 %v3848, %v3976
        %v3978 = vpop.f32.mrb[0].mxu0
        %3979 = vmatprep.mubr.f32.mxu0 0.0
        %3980 = vmatmul.mubr.f32.gmra.mrb[0].mxu0 %v3882
        %v3981 = vpop.f32.mrb[0].mxu0
        %v3982 = vadd.f32 %v3853, %v3981
        %v3983 = vpop.f32.mrb[0].mxu0
        %3984 = vmatprep.mubr.f32.mxu0 0.0
        %3985 = vmatmul.mubr.f32.gmra.mrb[0].mxu0 %v3885
        %v3986 = vpop.f32.mrb[0].mxu0
        %v3987 = vadd.f32 %v3858, %v3986
        %v3988 = vpop.f32.mrb[0].mxu0
        %3989 = vmatprep.mubr.f32.mxu0 0.0
        %3990 = vmatmul.mubr.f32.gmra.mrb[0].mxu0 %v3888
        %v3991 = vpop.f32.mrb[0].mxu0
        %v3992 = vadd.f32 %v3863, %v3991
        %v3993 = vpop.f32.mrb[0].mxu0
        %3994 = vdwg.mxu0
        %v3995 = vld [vmem:[%s3 + $0x20] sm:$0xff]
        %v3996 = vld [vmem:[%s3 + $0x28] sm:$0xff]
        %v3998 = vsel %vm333, %v3725, 0
        %v4001 = vsel %vm333, %v3726, 0
        %v4004 = vsel %vm333, %v3727, 0
        %v4007 = vsel %vm333, %v3728, 0
        %v4010 = vsel %vm333, %v3729, 0
        %v4013 = vsel %vm333, %v3730, 0
        %v4016 = vsel %vm333, %v3731, 0
        %v4019 = vsel %vm333, %v3732, 0
        %4021 = vmatprep.subr.mxu0 0.0
        %4022 = vmatpush1.msra.mxu0 %v3995
        %4023 = vmatprep.subr.mxu0 0.0
        %4024 = vmatpush1.msra.mxu0 %v3996
        %4025 = vmatprep.subr.mxu0 0.0
        %4026 = vmatpush1.msra.mxu0 0.0
        %4027 = vmatprep.subr.mxu0 0.0
        %4028 = vmatpush1.msra.mxu0 0.0
        %4029 = vmatprep.subr.mxu0 0.0
        %4030 = vmatpush1.msra.mxu0 0.0
        %4031 = vmatprep.subr.mxu0 0.0
        %4032 = vmatpush1.msra.mxu0 0.0
        %4033 = vmatprep.subr.mxu0 0.0
        %4034 = vmatpush1.msra.mxu0 0.0
        %4035 = vmatprep.subr.mxu0 0.0
        %4036 = vmatpush1.msra.mxu0 0.0
        %4037 = vmatprep.subr.mxu0 0.0
        %4038 = vmatpush1.msra.mxu0 0.0
        %4039 = vmatprep.subr.mxu0 0.0
        %4040 = vmatpush1.msra.mxu0 0.0
        %4041 = vmatprep.subr.mxu0 0.0
        %4042 = vmatpush1.msra.mxu0 0.0
        %4043 = vmatprep.subr.mxu0 0.0
        %4044 = vmatpush1.msra.mxu0 0.0
        %4045 = vmatprep.subr.mxu0 0.0
        %4046 = vmatpush1.msra.mxu0 0.0
        %4047 = vmatprep.subr.mxu0 0.0
        %4048 = vmatpush1.msra.mxu0 0.0
        %4049 = vmatprep.subr.mxu0 0.0
        %4050 = vmatpush1.msra.mxu0 0.0
        %4051 = vmatprep.subr.mxu0 0.0
        %4052 = vmatpush1.msra.mxu0 0.0
        %4053 = vmatprep.subr.mxu0 0.0
        %4054 = vmatpush1.msra.mxu0 0.0
        %4055 = vmatprep.subr.mxu0 0.0
        %4056 = vmatpush1.msra.mxu0 0.0
        %4057 = vmatprep.subr.mxu0 0.0
        %4058 = vmatpush1.msra.mxu0 0.0
        %4059 = vmatprep.subr.mxu0 0.0
        %4060 = vmatpush1.msra.mxu0 0.0
        %4061 = vmatprep.subr.mxu0 0.0
        %4062 = vmatpush1.msra.mxu0 0.0
        %4063 = vmatprep.subr.mxu0 0.0
        %4064 = vmatpush1.msra.mxu0 0.0
        %4065 = vmatprep.subr.mxu0 0.0
        %4066 = vmatpush1.msra.mxu0 0.0
        %4067 = vmatprep.subr.mxu0 0.0
        %4068 = vmatpush1.msra.mxu0 0.0
        %4069 = vmatprep.subr.mxu0 0.0
        %4070 = vmatpush1.msra.mxu0 0.0
        %4071 = vmatprep.subr.mxu0 0.0
        %4072 = vmatpush1.msra.mxu0 0.0
        %4073 = vmatprep.subr.mxu0 0.0
        %4074 = vmatpush1.msra.mxu0 0.0
        %4075 = vmatprep.subr.mxu0 0.0
        %4076 = vmatpush1.msra.mxu0 0.0
        %4077 = vmatprep.subr.mxu0 0.0
        %4078 = vmatpush1.msra.mxu0 0.0
        %4079 = vmatprep.subr.mxu0 0.0
        %4080 = vmatpush1.msra.mxu0 0.0
        %4081 = vmatprep.subr.mxu0 0.0
        %4082 = vmatpush1.msra.mxu0 0.0
        %4083 = vmatprep.subr.mxu0 0.0
        %4084 = vmatpush1.msra.mxu0 0.0
        %4085 = vmatprep.mubr.f32.mxu0 0.0
        %4086 = vmatmul.mubr.f32.gmra.mrb[0].mxu0 %v3998
        %v4087 = vpop.f32.mrb[0].mxu0
        %v4088 = vadd.f32 0.0, %v4087
        %v4089 = vpop.f32.mrb[0].mxu0
        %4090 = vmatprep.mubr.f32.mxu0 0.0
        %4091 = vmatmul.mubr.f32.gmra.mrb[0].mxu0 %v4001
        %v4092 = vpop.f32.mrb[0].mxu0
        %v4093 = vadd.f32 0.0, %v4092
        %v4094 = vpop.f32.mrb[0].mxu0
        %4095 = vmatprep.mubr.f32.mxu0 0.0
        %4096 = vmatmul.mubr.f32.gmra.mrb[0].mxu0 %v4004
        %v4097 = vpop.f32.mrb[0].mxu0
        %v4098 = vadd.f32 0.0, %v4097
        %v4099 = vpop.f32.mrb[0].mxu0
        %4100 = vmatprep.mubr.f32.mxu0 0.0
        %4101 = vmatmul.mubr.f32.gmra.mrb[0].mxu0 %v4007
        %v4102 = vpop.f32.mrb[0].mxu0
        %v4103 = vadd.f32 0.0, %v4102
        %v4104 = vpop.f32.mrb[0].mxu0
        %4105 = vmatprep.mubr.f32.mxu0 0.0
        %4106 = vmatmul.mubr.f32.gmra.mrb[0].mxu0 %v4010
        %v4107 = vpop.f32.mrb[0].mxu0
        %v4108 = vadd.f32 0.0, %v4107
        %v4109 = vpop.f32.mrb[0].mxu0
        %4110 = vmatprep.mubr.f32.mxu0 0.0
        %4111 = vmatmul.mubr.f32.gmra.mrb[0].mxu0 %v4013
        %v4112 = vpop.f32.mrb[0].mxu0
        %v4113 = vadd.f32 0.0, %v4112
        %v4114 = vpop.f32.mrb[0].mxu0
        %4115 = vmatprep.mubr.f32.mxu0 0.0
        %4116 = vmatmul.mubr.f32.gmra.mrb[0].mxu0 %v4016
        %v4117 = vpop.f32.mrb[0].mxu0
        %v4118 = vadd.f32 0.0, %v4117
        %v4119 = vpop.f32.mrb[0].mxu0
        %4120 = vmatprep.mubr.f32.mxu0 0.0
        %4121 = vmatmul.mubr.f32.gmra.mrb[0].mxu0 %v4019
        %v4122 = vpop.f32.mrb[0].mxu0
        %v4123 = vadd.f32 0.0, %v4122
        %v4124 = vpop.f32.mrb[0].mxu0
        %4125 = vdwg.mxu0
        %v4126 = vadd.f32 %v3957, %v4088
        %v4127 = vadd.f32 %v3962, %v4093
        %v4128 = vadd.f32 %v3967, %v4098
        %v4129 = vadd.f32 %v3972, %v4103
        %v4130 = vadd.f32 %v3977, %v4108
        %v4131 = vadd.f32 %v3982, %v4113
        %v4132 = vadd.f32 %v3987, %v4118
        %v4133 = vadd.f32 %v3992, %v4123
        %v4134 = vmax.f32 %v4126, 0.0
        %v4135 = vmax.f32 %v4127, 0.0
        %v4136 = vmax.f32 %v4128, 0.0
        %v4137 = vmax.f32 %v4129, 0.0
        %v4138 = vmax.f32 %v4130, 0.0
        %v4139 = vmax.f32 %v4131, 0.0
        %v4140 = vmax.f32 %v4132, 0.0
        %v4141 = vmax.f32 %v4133, 0.0
        %4142 = vst.msk [vmem:[#allocation2 + $0x8] sm:$0xff] %vm333, %v4134
        %4143 = vst.msk [vmem:[#allocation2 + $0x10] sm:$0xff] %vm333, %v4135
        %4144 = vst.msk [vmem:[#allocation2 + $0x18] sm:$0xff] %vm333, %v4136
        %4145 = vst.msk [vmem:[#allocation2 + $0x20] sm:$0xff] %vm333, %v4137
        %4146 = vst.msk [vmem:[#allocation2 + $0x28] sm:$0xff] %vm333, %v4138
        %4147 = vst.msk [vmem:[#allocation2 + $0x30] sm:$0xff] %vm333, %v4139
        %4148 = vst.msk [vmem:[#allocation2 + $0x38] sm:$0xff] %vm333, %v4140
        %4149 = vst.msk [vmem:[#allocation2 + $0x40] sm:$0xff] %vm333, %v4141
        %v4150 = vld [vmem:[#allocation2 + $0x7] sm:$0xff]
        %v4151 = vld [vmem:[#allocation2 + $0xf] sm:$0xff]
        %v4152 = vld [vmem:[#allocation2 + $0x17] sm:$0xff]
        %v4153 = vld [vmem:[#allocation2 + $0x1f] sm:$0xff]
        %v4154 = vld [vmem:[#allocation2 + $0x27] sm:$0xff]
        %v4155 = vld [vmem:[#allocation2 + $0x2f] sm:$0xff]
        %v4156 = vld [vmem:[#allocation2 + $0x37] sm:$0xff]
        %v4157 = vld [vmem:[#allocation2 + $0x3f] sm:$0xff]
        %v4158 = vmul.f32 %v4150, %v3661
        %v4159 = vmul.f32 %v4151, %v3662
        %v4160 = vmul.f32 %v4152, %v3663
        %v4161 = vmul.f32 %v4153, %v3664
        %v4162 = vmul.f32 %v4154, %v3665
        %v4163 = vmul.f32 %v4155, %v3666
        %v4164 = vmul.f32 %v4156, %v3667
        %v4165 = vmul.f32 %v4157, %v3668
        %v4166 = vld [vmem:[#allocation2 + $0x9] sm:$0xff]
        %v4167 = vld [vmem:[#allocation2 + $0x11] sm:$0xff]
        %v4168 = vld [vmem:[#allocation2 + $0x19] sm:$0xff]
        %v4169 = vld [vmem:[#allocation2 + $0x21] sm:$0xff]
        %v4170 = vld [vmem:[#allocation2 + $0x29] sm:$0xff]
        %v4171 = vld [vmem:[#allocation2 + $0x31] sm:$0xff]
        %v4172 = vld [vmem:[#allocation2 + $0x39] sm:$0xff]
        %v4173 = vld [vmem:[#allocation2 + $0x41] sm:$0xff]
        %v4174 = vmul.f32 %v4166, %v3685
        %v4175 = vmul.f32 %v4167, %v3686
        %v4176 = vmul.f32 %v4168, %v3687
        %v4177 = vmul.f32 %v4169, %v3688
        %v4178 = vmul.f32 %v4170, %v3689
        %v4179 = vmul.f32 %v4171, %v3690
        %v4180 = vmul.f32 %v4172, %v3691
        %v4181 = vmul.f32 %v4173, %v3692
        %v4182 = vld [vmem:[%s4] sm:$0xff]
        %v4183 = vld [vmem:[%s4 + $0x8] sm:$0xff]
        %v4184 = vld [vmem:[%s4 + $0x10] sm:$0xff]
        %v4185 = vld [vmem:[%s4 + $0x18] sm:$0xff]
        %v4187 = vsel %vm333, %v4134, 0
        %v4190 = vsel %vm333, %v4135, 0
        %v4193 = vsel %vm333, %v4136, 0
        %v4196 = vsel %vm333, %v4137, 0
        %v4199 = vsel %vm333, %v4138, 0
        %v4202 = vsel %vm333, %v4139, 0
        %v4205 = vsel %vm333, %v4140, 0
        %v4208 = vsel %vm333, %v4141, 0
        %4210 = vmatprep.subr.mxu0 0.0
        %4211 = vmatpush1.msra.mxu0 %v4184
        %4212 = vmatprep.subr.mxu0 0.0
        %4213 = vmatpush1.msra.mxu0 %v4185
        %4214 = vmatprep.subr.mxu0 0.0
        %4215 = vmatpush1.msra.mxu0 0.0
        %4216 = vmatprep.subr.mxu0 0.0
        %4217 = vmatpush1.msra.mxu0 0.0
        %4218 = vmatprep.subr.mxu0 0.0
        %4219 = vmatpush1.msra.mxu0 0.0
        %4220 = vmatprep.subr.mxu0 0.0
        %4221 = vmatpush1.msra.mxu0 0.0
        %4222 = vmatprep.subr.mxu0 0.0
        %4223 = vmatpush1.msra.mxu0 0.0
        %4224 = vmatprep.subr.mxu0 0.0
        %4225 = vmatpush1.msra.mxu0 0.0
        %4226 = vmatprep.subr.mxu0 0.0
        %4227 = vmatpush1.msra.mxu0 0.0
        %4228 = vmatprep.subr.mxu0 0.0
        %4229 = vmatpush1.msra.mxu0 0.0
        %4230 = vmatprep.subr.mxu0 0.0
        %4231 = vmatpush1.msra.mxu0 0.0
        %4232 = vmatprep.subr.mxu0 0.0
        %4233 = vmatpush1.msra.mxu0 0.0
        %4234 = vmatprep.subr.mxu0 0.0
        %4235 = vmatpush1.msra.mxu0 0.0
        %4236 = vmatprep.subr.mxu0 0.0
        %4237 = vmatpush1.msra.mxu0 0.0
        %4238 = vmatprep.subr.mxu0 0.0
        %4239 = vmatpush1.msra.mxu0 0.0
        %4240 = vmatprep.subr.mxu0 0.0
        %4241 = vmatpush1.msra.mxu0 0.0
        %4242 = vmatprep.subr.mxu0 0.0
        %4243 = vmatpush1.msra.mxu0 0.0
        %4244 = vmatprep.subr.mxu0 0.0
        %4245 = vmatpush1.msra.mxu0 0.0
        %4246 = vmatprep.subr.mxu0 0.0
        %4247 = vmatpush1.msra.mxu0 0.0
        %4248 = vmatprep.subr.mxu0 0.0
        %4249 = vmatpush1.msra.mxu0 0.0
        %4250 = vmatprep.subr.mxu0 0.0
        %4251 = vmatpush1.msra.mxu0 0.0
        %4252 = vmatprep.subr.mxu0 0.0
        %4253 = vmatpush1.msra.mxu0 0.0
        %4254 = vmatprep.subr.mxu0 0.0
        %4255 = vmatpush1.msra.mxu0 0.0
        %4256 = vmatprep.subr.mxu0 0.0
        %4257 = vmatpush1.msra.mxu0 0.0
        %4258 = vmatprep.subr.mxu0 0.0
        %4259 = vmatpush1.msra.mxu0 0.0
        %4260 = vmatprep.subr.mxu0 0.0
        %4261 = vmatpush1.msra.mxu0 0.0
        %4262 = vmatprep.subr.mxu0 0.0
        %4263 = vmatpush1.msra.mxu0 0.0
        %4264 = vmatprep.subr.mxu0 0.0
        %4265 = vmatpush1.msra.mxu0 0.0
        %4266 = vmatprep.subr.mxu0 0.0
        %4267 = vmatpush1.msra.mxu0 0.0
        %4268 = vmatprep.subr.mxu0 0.0
        %4269 = vmatpush1.msra.mxu0 0.0
        %4270 = vmatprep.subr.mxu0 0.0
        %4271 = vmatpush1.msra.mxu0 0.0
        %4272 = vmatprep.subr.mxu0 0.0
        %4273 = vmatpush1.msra.mxu0 0.0
        %4274 = vmatprep.mubr.f32.mxu0 0.0
        %4275 = vmatmul.mubr.f32.gmra.mrb[0].mxu0 %v4187
        %v4276 = vpop.f32.mrb[0].mxu0
        %v4277 = vadd.f32 0.0, %v4276
        %v4278 = vpop.f32.mrb[0].mxu0
        %4279 = vmatprep.mubr.f32.mxu0 0.0
        %4280 = vmatmul.mubr.f32.gmra.mrb[0].mxu0 %v4190
        %v4281 = vpop.f32.mrb[0].mxu0
        %v4282 = vadd.f32 0.0, %v4281
        %v4283 = vpop.f32.mrb[0].mxu0
        %4284 = vmatprep.mubr.f32.mxu0 0.0
        %4285 = vmatmul.mubr.f32.gmra.mrb[0].mxu0 %v4193
        %v4286 = vpop.f32.mrb[0].mxu0
        %v4287 = vadd.f32 0.0, %v4286
        %v4288 = vpop.f32.mrb[0].mxu0
        %4289 = vmatprep.mubr.f32.mxu0 0.0
        %4290 = vmatmul.mubr.f32.gmra.mrb[0].mxu0 %v4196
        %v4291 = vpop.f32.mrb[0].mxu0
        %v4292 = vadd.f32 0.0, %v4291
        %v4293 = vpop.f32.mrb[0].mxu0
        %4294 = vmatprep.mubr.f32.mxu0 0.0
        %4295 = vmatmul.mubr.f32.gmra.mrb[0].mxu0 %v4199
        %v4296 = vpop.f32.mrb[0].mxu0
        %v4297 = vadd.f32 0.0, %v4296
        %v4298 = vpop.f32.mrb[0].mxu0
        %4299 = vmatprep.mubr.f32.mxu0 0.0
        %4300 = vmatmul.mubr.f32.gmra.mrb[0].mxu0 %v4202
        %v4301 = vpop.f32.mrb[0].mxu0
        %v4302 = vadd.f32 0.0, %v4301
        %v4303 = vpop.f32.mrb[0].mxu0
        %4304 = vmatprep.mubr.f32.mxu0 0.0
        %4305 = vmatmul.mubr.f32.gmra.mrb[0].mxu0 %v4205
        %v4306 = vpop.f32.mrb[0].mxu0
        %v4307 = vadd.f32 0.0, %v4306
        %v4308 = vpop.f32.mrb[0].mxu0
        %4309 = vmatprep.mubr.f32.mxu0 0.0
        %4310 = vmatmul.mubr.f32.gmra.mrb[0].mxu0 %v4208
        %v4311 = vpop.f32.mrb[0].mxu0
        %v4312 = vadd.f32 0.0, %v4311
        %v4313 = vpop.f32.mrb[0].mxu0
        %4314 = vdwg.mxu0
        %v4316 = vsel %vm333, %v4158, 0
        %v4319 = vsel %vm333, %v4159, 0
        %v4322 = vsel %vm333, %v4160, 0
        %v4325 = vsel %vm333, %v4161, 0
        %v4328 = vsel %vm333, %v4162, 0
        %v4331 = vsel %vm333, %v4163, 0
        %v4334 = vsel %vm333, %v4164, 0
        %v4337 = vsel %vm333, %v4165, 0
        %4339 = vmatprep.subr.mxu0 0.0
        %4340 = vmatpush1.msra.mxu0 %v4182
        %4341 = vmatprep.subr.mxu0 0.0
        %4342 = vmatpush1.msra.mxu0 %v4183
        %4343 = vmatprep.subr.mxu0 0.0
        %4344 = vmatpush1.msra.mxu0 0.0
        %4345 = vmatprep.subr.mxu0 0.0
        %4346 = vmatpush1.msra.mxu0 0.0
        %4347 = vmatprep.subr.mxu0 0.0
        %4348 = vmatpush1.msra.mxu0 0.0
        %4349 = vmatprep.subr.mxu0 0.0
        %4350 = vmatpush1.msra.mxu0 0.0
        %4351 = vmatprep.subr.mxu0 0.0
        %4352 = vmatpush1.msra.mxu0 0.0
        %4353 = vmatprep.subr.mxu0 0.0
        %4354 = vmatpush1.msra.mxu0 0.0
        %4355 = vmatprep.subr.mxu0 0.0
        %4356 = vmatpush1.msra.mxu0 0.0
        %4357 = vmatprep.subr.mxu0 0.0
        %4358 = vmatpush1.msra.mxu0 0.0
        %4359 = vmatprep.subr.mxu0 0.0
        %4360 = vmatpush1.msra.mxu0 0.0
        %4361 = vmatprep.subr.mxu0 0.0
        %4362 = vmatpush1.msra.mxu0 0.0
        %4363 = vmatprep.subr.mxu0 0.0
        %4364 = vmatpush1.msra.mxu0 0.0
        %4365 = vmatprep.subr.mxu0 0.0
        %4366 = vmatpush1.msra.mxu0 0.0
        %4367 = vmatprep.subr.mxu0 0.0
        %4368 = vmatpush1.msra.mxu0 0.0
        %4369 = vmatprep.subr.mxu0 0.0
        %4370 = vmatpush1.msra.mxu0 0.0
        %4371 = vmatprep.subr.mxu0 0.0
        %4372 = vmatpush1.msra.mxu0 0.0
        %4373 = vmatprep.subr.mxu0 0.0
        %4374 = vmatpush1.msra.mxu0 0.0
        %4375 = vmatprep.subr.mxu0 0.0
        %4376 = vmatpush1.msra.mxu0 0.0
        %4377 = vmatprep.subr.mxu0 0.0
        %4378 = vmatpush1.msra.mxu0 0.0
        %4379 = vmatprep.subr.mxu0 0.0
        %4380 = vmatpush1.msra.mxu0 0.0
        %4381 = vmatprep.subr.mxu0 0.0
        %4382 = vmatpush1.msra.mxu0 0.0
        %4383 = vmatprep.subr.mxu0 0.0
        %4384 = vmatpush1.msra.mxu0 0.0
        %4385 = vmatprep.subr.mxu0 0.0
        %4386 = vmatpush1.msra.mxu0 0.0
        %4387 = vmatprep.subr.mxu0 0.0
        %4388 = vmatpush1.msra.mxu0 0.0
        %4389 = vmatprep.subr.mxu0 0.0
        %4390 = vmatpush1.msra.mxu0 0.0
        %4391 = vmatprep.subr.mxu0 0.0
        %4392 = vmatpush1.msra.mxu0 0.0
        %4393 = vmatprep.subr.mxu0 0.0
        %4394 = vmatpush1.msra.mxu0 0.0
        %4395 = vmatprep.subr.mxu0 0.0
        %4396 = vmatpush1.msra.mxu0 0.0
        %4397 = vmatprep.subr.mxu0 0.0
        %4398 = vmatpush1.msra.mxu0 0.0
        %4399 = vmatprep.subr.mxu0 0.0
        %4400 = vmatpush1.msra.mxu0 0.0
        %4401 = vmatprep.subr.mxu0 0.0
        %4402 = vmatpush1.msra.mxu0 0.0
        %4403 = vmatprep.mubr.f32.mxu0 0.0
        %4404 = vmatmul.mubr.f32.gmra.mrb[0].mxu0 %v4316
        %v4405 = vpop.f32.mrb[0].mxu0
        %v4406 = vadd.f32 %v4277, %v4405
        %v4407 = vpop.f32.mrb[0].mxu0
        %4408 = vmatprep.mubr.f32.mxu0 0.0
        %4409 = vmatmul.mubr.f32.gmra.mrb[0].mxu0 %v4319
        %v4410 = vpop.f32.mrb[0].mxu0
        %v4411 = vadd.f32 %v4282, %v4410
        %v4412 = vpop.f32.mrb[0].mxu0
        %4413 = vmatprep.mubr.f32.mxu0 0.0
        %4414 = vmatmul.mubr.f32.gmra.mrb[0].mxu0 %v4322
        %v4415 = vpop.f32.mrb[0].mxu0
        %v4416 = vadd.f32 %v4287, %v4415
        %v4417 = vpop.f32.mrb[0].mxu0
        %4418 = vmatprep.mubr.f32.mxu0 0.0
        %4419 = vmatmul.mubr.f32.gmra.mrb[0].mxu0 %v4325
        %v4420 = vpop.f32.mrb[0].mxu0
        %v4421 = vadd.f32 %v4292, %v4420
        %v4422 = vpop.f32.mrb[0].mxu0
        %4423 = vmatprep.mubr.f32.mxu0 0.0
        %4424 = vmatmul.mubr.f32.gmra.mrb[0].mxu0 %v4328
        %v4425 = vpop.f32.mrb[0].mxu0
        %v4426 = vadd.f32 %v4297, %v4425
        %v4427 = vpop.f32.mrb[0].mxu0
        %4428 = vmatprep.mubr.f32.mxu0 0.0
        %4429 = vmatmul.mubr.f32.gmra.mrb[0].mxu0 %v4331
        %v4430 = vpop.f32.mrb[0].mxu0
        %v4431 = vadd.f32 %v4302, %v4430
        %v4432 = vpop.f32.mrb[0].mxu0
        %4433 = vmatprep.mubr.f32.mxu0 0.0
        %4434 = vmatmul.mubr.f32.gmra.mrb[0].mxu0 %v4334
        %v4435 = vpop.f32.mrb[0].mxu0
        %v4436 = vadd.f32 %v4307, %v4435
        %v4437 = vpop.f32.mrb[0].mxu0
        %4438 = vmatprep.mubr.f32.mxu0 0.0
        %4439 = vmatmul.mubr.f32.gmra.mrb[0].mxu0 %v4337
        %v4440 = vpop.f32.mrb[0].mxu0
        %v4441 = vadd.f32 %v4312, %v4440
        %v4442 = vpop.f32.mrb[0].mxu0
        %4443 = vdwg.mxu0
        %v4444 = vld [vmem:[%s4 + $0x20] sm:$0xff]
        %v4445 = vld [vmem:[%s4 + $0x28] sm:$0xff]
        %v4447 = vsel %vm333, %v4174, 0
        %v4450 = vsel %vm333, %v4175, 0
        %v4453 = vsel %vm333, %v4176, 0
        %v4456 = vsel %vm333, %v4177, 0
        %v4459 = vsel %vm333, %v4178, 0
        %v4462 = vsel %vm333, %v4179, 0
        %v4465 = vsel %vm333, %v4180, 0
        %v4468 = vsel %vm333, %v4181, 0
        %4470 = vmatprep.subr.mxu0 0.0
        %4471 = vmatpush1.msra.mxu0 %v4444
        %4472 = vmatprep.subr.mxu0 0.0
        %4473 = vmatpush1.msra.mxu0 %v4445
        %4474 = vmatprep.subr.mxu0 0.0
        %4475 = vmatpush1.msra.mxu0 0.0
        %4476 = vmatprep.subr.mxu0 0.0
        %4477 = vmatpush1.msra.mxu0 0.0
        %4478 = vmatprep.subr.mxu0 0.0
        %4479 = vmatpush1.msra.mxu0 0.0
        %4480 = vmatprep.subr.mxu0 0.0
        %4481 = vmatpush1.msra.mxu0 0.0
        %4482 = vmatprep.subr.mxu0 0.0
        %4483 = vmatpush1.msra.mxu0 0.0
        %4484 = vmatprep.subr.mxu0 0.0
        %4485 = vmatpush1.msra.mxu0 0.0
        %4486 = vmatprep.subr.mxu0 0.0
        %4487 = vmatpush1.msra.mxu0 0.0
        %4488 = vmatprep.subr.mxu0 0.0
        %4489 = vmatpush1.msra.mxu0 0.0
        %4490 = vmatprep.subr.mxu0 0.0
        %4491 = vmatpush1.msra.mxu0 0.0
        %4492 = vmatprep.subr.mxu0 0.0
        %4493 = vmatpush1.msra.mxu0 0.0
        %4494 = vmatprep.subr.mxu0 0.0
        %4495 = vmatpush1.msra.mxu0 0.0
        %4496 = vmatprep.subr.mxu0 0.0
        %4497 = vmatpush1.msra.mxu0 0.0
        %4498 = vmatprep.subr.mxu0 0.0
        %4499 = vmatpush1.msra.mxu0 0.0
        %4500 = vmatprep.subr.mxu0 0.0
        %4501 = vmatpush1.msra.mxu0 0.0
        %4502 = vmatprep.subr.mxu0 0.0
        %4503 = vmatpush1.msra.mxu0 0.0
        %4504 = vmatprep.subr.mxu0 0.0
        %4505 = vmatpush1.msra.mxu0 0.0
        %4506 = vmatprep.subr.mxu0 0.0
        %4507 = vmatpush1.msra.mxu0 0.0
        %4508 = vmatprep.subr.mxu0 0.0
        %4509 = vmatpush1.msra.mxu0 0.0
        %4510 = vmatprep.subr.mxu0 0.0
        %4511 = vmatpush1.msra.mxu0 0.0
        %4512 = vmatprep.subr.mxu0 0.0
        %4513 = vmatpush1.msra.mxu0 0.0
        %4514 = vmatprep.subr.mxu0 0.0
        %4515 = vmatpush1.msra.mxu0 0.0
        %4516 = vmatprep.subr.mxu0 0.0
        %4517 = vmatpush1.msra.mxu0 0.0
        %4518 = vmatprep.subr.mxu0 0.0
        %4519 = vmatpush1.msra.mxu0 0.0
        %4520 = vmatprep.subr.mxu0 0.0
        %4521 = vmatpush1.msra.mxu0 0.0
        %4522 = vmatprep.subr.mxu0 0.0
        %4523 = vmatpush1.msra.mxu0 0.0
        %4524 = vmatprep.subr.mxu0 0.0
        %4525 = vmatpush1.msra.mxu0 0.0
        %4526 = vmatprep.subr.mxu0 0.0
        %4527 = vmatpush1.msra.mxu0 0.0
        %4528 = vmatprep.subr.mxu0 0.0
        %4529 = vmatpush1.msra.mxu0 0.0
        %4530 = vmatprep.subr.mxu0 0.0
        %4531 = vmatpush1.msra.mxu0 0.0
        %4532 = vmatprep.subr.mxu0 0.0
        %4533 = vmatpush1.msra.mxu0 0.0
        %4534 = vmatprep.mubr.f32.mxu0 0.0
        %4535 = vmatmul.mubr.f32.gmra.mrb[0].mxu0 %v4447
        %v4536 = vpop.f32.mrb[0].mxu0
        %v4537 = vadd.f32 0.0, %v4536
        %v4538 = vpop.f32.mrb[0].mxu0
        %4539 = vmatprep.mubr.f32.mxu0 0.0
        %4540 = vmatmul.mubr.f32.gmra.mrb[0].mxu0 %v4450
        %v4541 = vpop.f32.mrb[0].mxu0
        %v4542 = vadd.f32 0.0, %v4541
        %v4543 = vpop.f32.mrb[0].mxu0
        %4544 = vmatprep.mubr.f32.mxu0 0.0
        %4545 = vmatmul.mubr.f32.gmra.mrb[0].mxu0 %v4453
        %v4546 = vpop.f32.mrb[0].mxu0
        %v4547 = vadd.f32 0.0, %v4546
        %v4548 = vpop.f32.mrb[0].mxu0
        %4549 = vmatprep.mubr.f32.mxu0 0.0
        %4550 = vmatmul.mubr.f32.gmra.mrb[0].mxu0 %v4456
        %v4551 = vpop.f32.mrb[0].mxu0
        %v4552 = vadd.f32 0.0, %v4551
        %v4553 = vpop.f32.mrb[0].mxu0
        %4554 = vmatprep.mubr.f32.mxu0 0.0
        %4555 = vmatmul.mubr.f32.gmra.mrb[0].mxu0 %v4459
        %v4556 = vpop.f32.mrb[0].mxu0
        %v4557 = vadd.f32 0.0, %v4556
        %v4558 = vpop.f32.mrb[0].mxu0
        %4559 = vmatprep.mubr.f32.mxu0 0.0
        %4560 = vmatmul.mubr.f32.gmra.mrb[0].mxu0 %v4462
        %v4561 = vpop.f32.mrb[0].mxu0
        %v4562 = vadd.f32 0.0, %v4561
        %v4563 = vpop.f32.mrb[0].mxu0
        %4564 = vmatprep.mubr.f32.mxu0 0.0
        %4565 = vmatmul.mubr.f32.gmra.mrb[0].mxu0 %v4465
        %v4566 = vpop.f32.mrb[0].mxu0
        %v4567 = vadd.f32 0.0, %v4566
        %v4568 = vpop.f32.mrb[0].mxu0
        %4569 = vmatprep.mubr.f32.mxu0 0.0
        %4570 = vmatmul.mubr.f32.gmra.mrb[0].mxu0 %v4468
        %v4571 = vpop.f32.mrb[0].mxu0
        %v4572 = vadd.f32 0.0, %v4571
        %v4573 = vpop.f32.mrb[0].mxu0
        %4574 = vdwg.mxu0
        %v4575 = vadd.f32 %v4406, %v4537
        %v4576 = vadd.f32 %v4411, %v4542
        %v4577 = vadd.f32 %v4416, %v4547
        %v4578 = vadd.f32 %v4421, %v4552
        %v4579 = vadd.f32 %v4426, %v4557
        %v4580 = vadd.f32 %v4431, %v4562
        %v4581 = vadd.f32 %v4436, %v4567
        %v4582 = vadd.f32 %v4441, %v4572
        %v4583 = vadd.f32 %v4575, %v3541
        %v4584 = vadd.f32 %v4576, %v3542
        %v4585 = vadd.f32 %v4577, %v3543
        %v4586 = vadd.f32 %v4578, %v3544
        %v4587 = vadd.f32 %v4579, %v3545
        %v4588 = vadd.f32 %v4580, %v3546
        %v4589 = vadd.f32 %v4581, %v3547
        %v4590 = vadd.f32 %v4582, %v3548
        %v4591 = vmax.f32 %v4583, 0.0
        %v4592 = vmax.f32 %v4584, 0.0
        %v4593 = vmax.f32 %v4585, 0.0
        %v4594 = vmax.f32 %v4586, 0.0
        %v4595 = vmax.f32 %v4587, 0.0
        %v4596 = vmax.f32 %v4588, 0.0
        %v4597 = vmax.f32 %v4589, 0.0
        %v4598 = vmax.f32 %v4590, 0.0
        %4599 = vst.msk [vmem:[#allocation2 + $0x8] sm:$0xff] %vm333, %v4591
        %4600 = vst.msk [vmem:[#allocation2 + $0x10] sm:$0xff] %vm333, %v4592
        %4601 = vst.msk [vmem:[#allocation2 + $0x18] sm:$0xff] %vm333, %v4593
        %4602 = vst.msk [vmem:[#allocation2 + $0x20] sm:$0xff] %vm333, %v4594
        %4603 = vst.msk [vmem:[#allocation2 + $0x28] sm:$0xff] %vm333, %v4595
        %4604 = vst.msk [vmem:[#allocation2 + $0x30] sm:$0xff] %vm333, %v4596
        %4605 = vst.msk [vmem:[#allocation2 + $0x38] sm:$0xff] %vm333, %v4597
        %4606 = vst.msk [vmem:[#allocation2 + $0x40] sm:$0xff] %vm333, %v4598
        %v4607 = vld [vmem:[%s3509] ss:$2 sm:$0xff]
        %v4608 = vld [vmem:[%s3511] ss:$2 sm:$0xff]
        %v4609 = vld [vmem:[%s3513] ss:$2 sm:$0xff]
        %v4610 = vld [vmem:[%s3515] ss:$2 sm:$0xff]
        %v4611 = vld [vmem:[%s3525] ss:$2 sm:$0xff]
        %v4612 = vld [vmem:[%s3527] ss:$2 sm:$0xff]
        %v4613 = vld [vmem:[%s3529] ss:$2 sm:$0xff]
        %v4614 = vld [vmem:[%s3531] ss:$2 sm:$0xff]
        %v4615 = vmax.f32 %v4607, %v4611
        %v4616 = vmax.f32 %v4608, %v4612
        %v4617 = vmax.f32 %v4609, %v4613
        %v4618 = vmax.f32 %v4610, %v4614
        %4619 = vst.msk [vmem:[#allocation2 + $0x8] sm:$0xff] %vm333, %v4615
        %4620 = vst.msk [vmem:[#allocation2 + $0x10] sm:$0xff] %vm333, %v4616
        %4621 = vst.msk [vmem:[#allocation2 + $0x18] sm:$0xff] %vm333, %v4617
        %4622 = vst.msk [vmem:[#allocation2 + $0x20] sm:$0xff] %vm333, %v4618
        %v4623 = vld [vmem:[%s3509] ss:$4 sm:$0xff]
        %v4624 = vld [vmem:[%s3525] ss:$4 sm:$0xff]
        %s4625 = scalar_lea.vmem [#allocation2], 10
        %v4626 = vld [vmem:[%s4625] ss:$4 sm:$0xff]
        %s4627 = scalar_lea.vmem [#allocation2], 11
        %v4628 = vld [vmem:[%s4627] ss:$4 sm:$0xff]
        %4630 = vrot.lane.b32.xlu0 %v4624, 16
        %v4631 = vpop.permute.xlu0 %4630
        %4634 = vrot.lane.b32.xlu0 %v4626, 32
        %v4635 = vpop.permute.xlu0 %4634
        %4638 = vrot.lane.b32.xlu0 %v4628, 48
        %v4639 = vpop.permute.xlu0 %4638
        %v4641 = vsel %vm333, %v4623, %v4631
        %vm4642 = vcmask 261120
        %v4643 = vsel %vm4642, %v4641, %v4635
        %vm4644 = vcmask 392192
        %v4645 = vsel %vm4644, %v4643, %v4639
        %v4646 = vld [vmem:[%s5] sm:$0xff]
        %v4647 = vld [vmem:[%s5 + $0x8] sm:$0xff]
        %v4648 = vld [vmem:[%s5 + $0x10] sm:$0xff]
        %v4649 = vld [vmem:[%s5 + $0x18] sm:$0xff]
        %v4650 = vld [vmem:[%s5 + $0x20] sm:$0xff]
        %v4651 = vld [vmem:[%s5 + $0x28] sm:$0xff]
        %v4652 = vld [vmem:[%s5 + $0x30] sm:$0xff]
        %v4653 = vld [vmem:[%s5 + $0x38] sm:$0xff]
        %v4654 = vld [vmem:[%s6] sm:$0x1]
        %v4656 = vlaneseq
        %v4657 = vshrl.u32 %v4656, 7
        %v4658 = vsub.s32 0, %v4657
        %v4659 = vrot.slane %v4654, %v4658
        %vm4661 = vcmask 523264
        %v4663 = vsel %vm4661, %v4645, 0
        %4665 = vmatprep.subr.mxu0 0.0
        %4666 = vmatpush1.msra.mxu0 %v4646
        %4667 = vmatprep.subr.mxu0 0.0
        %4668 = vmatpush1.msra.mxu0 %v4647
        %4669 = vmatprep.subr.mxu0 0.0
        %4670 = vmatpush1.msra.mxu0 %v4648
        %4671 = vmatprep.subr.mxu0 0.0
        %4672 = vmatpush1.msra.mxu0 %v4649
        %4673 = vmatprep.subr.mxu0 0.0
        %4674 = vmatpush1.msra.mxu0 %v4650
        %4675 = vmatprep.subr.mxu0 0.0
        %4676 = vmatpush1.msra.mxu0 %v4651
        %4677 = vmatprep.subr.mxu0 0.0
        %4678 = vmatpush1.msra.mxu0 %v4652
        %4679 = vmatprep.subr.mxu0 0.0
        %4680 = vmatpush1.msra.mxu0 %v4653
        %4681 = vmatprep.subr.mxu0 0.0
        %4682 = vmatpush1.msra.mxu0 0.0
        %4683 = vmatprep.subr.mxu0 0.0
        %4684 = vmatpush1.msra.mxu0 0.0
        %4685 = vmatprep.subr.mxu0 0.0
        %4686 = vmatpush1.msra.mxu0 0.0
        %4687 = vmatprep.subr.mxu0 0.0
        %4688 = vmatpush1.msra.mxu0 0.0
        %4689 = vmatprep.subr.mxu0 0.0
        %4690 = vmatpush1.msra.mxu0 0.0
        %4691 = vmatprep.subr.mxu0 0.0
        %4692 = vmatpush1.msra.mxu0 0.0
        %4693 = vmatprep.subr.mxu0 0.0
        %4694 = vmatpush1.msra.mxu0 0.0
        %4695 = vmatprep.subr.mxu0 0.0
        %4696 = vmatpush1.msra.mxu0 0.0
        %4697 = vmatprep.subr.mxu0 0.0
        %4698 = vmatpush1.msra.mxu0 0.0
        %4699 = vmatprep.subr.mxu0 0.0
        %4700 = vmatpush1.msra.mxu0 0.0
        %4701 = vmatprep.subr.mxu0 0.0
        %4702 = vmatpush1.msra.mxu0 0.0
        %4703 = vmatprep.subr.mxu0 0.0
        %4704 = vmatpush1.msra.mxu0 0.0
        %4705 = vmatprep.subr.mxu0 0.0
        %4706 = vmatpush1.msra.mxu0 0.0
        %4707 = vmatprep.subr.mxu0 0.0
        %4708 = vmatpush1.msra.mxu0 0.0
        %4709 = vmatprep.subr.mxu0 0.0
        %4710 = vmatpush1.msra.mxu0 0.0
        %4711 = vmatprep.subr.mxu0 0.0
        %4712 = vmatpush1.msra.mxu0 0.0
        %4713 = vmatprep.subr.mxu0 0.0
        %4714 = vmatpush1.msra.mxu0 0.0
        %4715 = vmatprep.subr.mxu0 0.0
        %4716 = vmatpush1.msra.mxu0 0.0
        %4717 = vmatprep.subr.mxu0 0.0
        %4718 = vmatpush1.msra.mxu0 0.0
        %4719 = vmatprep.subr.mxu0 0.0
        %4720 = vmatpush1.msra.mxu0 0.0
        %4721 = vmatprep.subr.mxu0 0.0
        %4722 = vmatpush1.msra.mxu0 0.0
        %4723 = vmatprep.subr.mxu0 0.0
        %4724 = vmatpush1.msra.mxu0 0.0
        %4725 = vmatprep.subr.mxu0 0.0
        %4726 = vmatpush1.msra.mxu0 0.0
        %4727 = vmatprep.subr.mxu0 0.0
        %4728 = vmatpush1.msra.mxu0 0.0
        %4729 = vmatprep.mubr.f32.mxu0 0.0
        %4730 = vmatmul.mubr.f32.gmra.mrb[0].mxu0 %v4663
        %v4731 = vpop.f32.mrb[0].mxu0
        %v4732 = vadd.f32 %v4659, %v4731
        %v4733 = vpop.f32.mrb[0].mxu0
        %4734 = vdwg.mxu0
        %v4735 = vmax.f32 %v4732, 0.0
        %v4736 = vld [vmem:[%s7] sm:$0xff]
        %v4737 = vld [vmem:[%s7 + $0x8] sm:$0xff]
        %v4738 = vld [vmem:[%s7 + $0x10] sm:$0xff]
        %v4739 = vld [vmem:[%s7 + $0x18] sm:$0xff]
        %v4740 = vld [vmem:[%s7 + $0x20] sm:$0xff]
        %v4741 = vld [vmem:[%s7 + $0x28] sm:$0xff]
        %v4742 = vld [vmem:[%s7 + $0x30] sm:$0xff]
        %v4743 = vld [vmem:[%s7 + $0x38] sm:$0xff]
        %v4744 = vld [vmem:[%s8] sm:$0x1]
        %v4746 = vlaneseq
        %v4747 = vshrl.u32 %v4746, 7
        %v4748 = vsub.s32 0, %v4747
        %v4749 = vrot.slane %v4744, %v4748
        %v4752 = vsel %vm4661, %v4735, 0
        %4754 = vmatprep.subr.mxu0 0.0
        %4755 = vmatpush1.msra.mxu0 %v4736
        %4756 = vmatprep.subr.mxu0 0.0
        %4757 = vmatpush1.msra.mxu0 %v4737
        %4758 = vmatprep.subr.mxu0 0.0
        %4759 = vmatpush1.msra.mxu0 %v4738
        %4760 = vmatprep.subr.mxu0 0.0
        %4761 = vmatpush1.msra.mxu0 %v4739
        %4762 = vmatprep.subr.mxu0 0.0
        %4763 = vmatpush1.msra.mxu0 %v4740
        %4764 = vmatprep.subr.mxu0 0.0
        %4765 = vmatpush1.msra.mxu0 %v4741
        %4766 = vmatprep.subr.mxu0 0.0
        %4767 = vmatpush1.msra.mxu0 %v4742
        %4768 = vmatprep.subr.mxu0 0.0
        %4769 = vmatpush1.msra.mxu0 %v4743
        %4770 = vmatprep.subr.mxu0 0.0
        %4771 = vmatpush1.msra.mxu0 0.0
        %4772 = vmatprep.subr.mxu0 0.0
        %4773 = vmatpush1.msra.mxu0 0.0
        %4774 = vmatprep.subr.mxu0 0.0
        %4775 = vmatpush1.msra.mxu0 0.0
        %4776 = vmatprep.subr.mxu0 0.0
        %4777 = vmatpush1.msra.mxu0 0.0
        %4778 = vmatprep.subr.mxu0 0.0
        %4779 = vmatpush1.msra.mxu0 0.0
        %4780 = vmatprep.subr.mxu0 0.0
        %4781 = vmatpush1.msra.mxu0 0.0
        %4782 = vmatprep.subr.mxu0 0.0
        %4783 = vmatpush1.msra.mxu0 0.0
        %4784 = vmatprep.subr.mxu0 0.0
        %4785 = vmatpush1.msra.mxu0 0.0
        %4786 = vmatprep.subr.mxu0 0.0
        %4787 = vmatpush1.msra.mxu0 0.0
        %4788 = vmatprep.subr.mxu0 0.0
        %4789 = vmatpush1.msra.mxu0 0.0
        %4790 = vmatprep.subr.mxu0 0.0
        %4791 = vmatpush1.msra.mxu0 0.0
        %4792 = vmatprep.subr.mxu0 0.0
        %4793 = vmatpush1.msra.mxu0 0.0
        %4794 = vmatprep.subr.mxu0 0.0
        %4795 = vmatpush1.msra.mxu0 0.0
        %4796 = vmatprep.subr.mxu0 0.0
        %4797 = vmatpush1.msra.mxu0 0.0
        %4798 = vmatprep.subr.mxu0 0.0
        %4799 = vmatpush1.msra.mxu0 0.0
        %4800 = vmatprep.subr.mxu0 0.0
        %4801 = vmatpush1.msra.mxu0 0.0
        %4802 = vmatprep.subr.mxu0 0.0
        %4803 = vmatpush1.msra.mxu0 0.0
        %4804 = vmatprep.subr.mxu0 0.0
        %4805 = vmatpush1.msra.mxu0 0.0
        %4806 = vmatprep.subr.mxu0 0.0
        %4807 = vmatpush1.msra.mxu0 0.0
        %4808 = vmatprep.subr.mxu0 0.0
        %4809 = vmatpush1.msra.mxu0 0.0
        %4810 = vmatprep.subr.mxu0 0.0
        %4811 = vmatpush1.msra.mxu0 0.0
        %4812 = vmatprep.subr.mxu0 0.0
        %4813 = vmatpush1.msra.mxu0 0.0
        %4814 = vmatprep.subr.mxu0 0.0
        %4815 = vmatpush1.msra.mxu0 0.0
        %4816 = vmatprep.subr.mxu0 0.0
        %4817 = vmatpush1.msra.mxu0 0.0
        %4818 = vmatprep.mubr.f32.mxu0 0.0
        %4819 = vmatmul.mubr.f32.gmra.mrb[0].mxu0 %v4752
        %v4820 = vpop.f32.mrb[0].mxu0
        %v4821 = vadd.f32 %v4749, %v4820
        %v4822 = vpop.f32.mrb[0].mxu0
        %4823 = vdwg.mxu0
        %v4824 = vadd.f32 %v4821, %v4645
        %4825 = vst.msk [vmem:[%s326] sm:$0xff] %vm4661, %v4824
        %s4826 = sand.u32 %s225, 1
        %s4827 = scalar_lea.sflag [#allocation4], %s4826
        %s4828 = sand.u32 %s225, 1
        %s4829 = smul.addr %s4828, 8
        %s4830 = scalar_lea.vmem [#allocation3], %s4829
        // Predicated region
        $region57: #{tpu_custom_call.1} parent=55 // pred_check
          %p4831 = pneg %p235
        $region58: #{tpu_custom_call.1} parent=55 // pred_check_branch
          %4833 = sbr.rel (%p4831) target = $region60
        $region59: #{tpu_custom_call.1} parent=55 // pred_region
          %s4835 = ssub.s32 128, 128
          %4836 = vsyncadd %s4827, %s4835
          %s4837 = smul.addr %s23, 128
          %s4838 = scalar_lea.hbm %s9, %s4837
          %s4840 = sshll.u32 %s4830, 4
          %s4841 = int_to_ptr.vmem [resolvable:$true] %s4840
          %4843 = dma.vmem_to_hbm [thread:$0]  %s4841, 128, %s4838, %s4827
        $region60: #{tpu_custom_call.1} parent=55 // pred_fallthru
          _
      $region56: #{tpu_custom_call.1} parent=5 // pred_fallthru
        _
      %p4844 = scmp.le.s32.totalorder 2, %s18
      // Predicated region
      $region61: #{tpu_custom_call.1} parent=5 // pred_check
        %p4845 = pneg %p4844
      $region62: #{tpu_custom_call.1} parent=5 // pred_check_branch
        %4847 = sbr.rel (%p4845) target = $region64
      $region63: #{tpu_custom_call.1} parent=5 // pred_region
        %s4848 = ssub.s32 %s18, 2
        // Predicated region
        $region65: #{tpu_custom_call.1} parent=63 // pred_check
          %p4849 = pneg %p241
        $region66: #{tpu_custom_call.1} parent=63 // pred_check_branch
          %4851 = sbr.rel (%p4849) target = $region68
        $region67: #{tpu_custom_call.1} parent=63 // pred_region
          %s4852 = sand.u32 %s226, 1
          %s4853 = scalar_lea.sflag [#allocation4], %s4852
          %s4854 = sand.u32 %s226, 1
          %s4855 = smul.addr %s4854, 8
          %s4856 = scalar_lea.vmem [#allocation3], %s4855
          %4857 = dma.done %s4853, 128
        $region68: #{tpu_custom_call.1} parent=63 // pred_fallthru
          _
      $region64: #{tpu_custom_call.1} parent=5 // pred_fallthru
        _
    $region6: #{tpu_custom_call.1} parent=1 // loop_footer
      %s22 = sadd.s32 1, %s18
    $region7: #{tpu_custom_call.1} parent=1 // loop_footer_branch
      %17 = sbr.rel target = $region3
    $region8: #{tpu_custom_call.1} parent=1 // loop_exit
      _
    %4858 = vsyncpa [#allocation4], 1
    %s4859 = scalar_lea.sflag [#allocation4], 1
    %4860 = vsyncpa %s4859, 1

</llo_original>
